<compile_context>
chip_gen: v7x
topology: tpu7x:2x2x1
jax: 0.10.0
libtpu: 0.0.40
codegen_flags: <defaults>
</compile_context>

<pallas_src>
import jax
import jax.numpy as jnp
from jax import lax
from jax.experimental import pallas as pl
from jax.experimental.pallas import tpu as pltpu

POOL_K = 5   # AvgPool2d kernel
POOL_S = 2   # AvgPool2d stride
BN_EPS = 1e-5
LANE = 128


# ----------------------------------------------------------------------------- kernels
def _aux_head_fused_kernel(x_ref, wbig_ref, shift_ref, w2m_ref, wc_ref, bc_ref, o_ref):
    """Small-C path. x_ref (TB, C*HW) flattened -> o_ref (TB, nc_pad): 3 MXU matmuls."""
    cdt = x_ref.dtype
    x = jnp.maximum(x_ref[...], 0)                                   # ReLU on raw input
    # ReLU->avgpool->conv1->BN-scale as ONE lane-dense matmul (Wbig host-folded).
    h1 = jnp.dot(x, wbig_ref[...], preferred_element_type=jnp.float32)   # (TB, S*128)
    h1 = jnp.maximum(h1 + shift_ref[...], 0.0).astype(cdt)               # BN shift + ReLU
    # Conv2d(128, 768, 2): kernel extent == pooled extent -> one (TB,S*128)@(S*128,768).
    h2 = jnp.dot(h1, w2m_ref[...], preferred_element_type=jnp.float32)
    h2 = jnp.maximum(h2, 0.0).astype(cdt)
    # Linear(768, nc_pad): lane-dense (padded to multiple of 128) output store.
    o_ref[...] = (jnp.dot(h2, wc_ref[...], preferred_element_type=jnp.float32)
                  + bc_ref[...])


def _aux_head_general_kernel(x_ref, pool_ref, w1_ref, shift_ref, w2m_ref, wc_ref,
                             bc_ref, o_ref):
    """Large-C path. x_ref (TB, HW, C) channels-last -> o_ref (TB, nc_pad)."""
    tb, hw, c = x_ref.shape
    s_out = pool_ref.shape[0]
    k128 = w2m_ref.shape[1]
    cdt = x_ref.dtype

    x = jnp.maximum(x_ref[...], 0)                                   # ReLU
    # Sum-pool as ONE unbatched contraction: (S,HW) x (TB,HW,C) -> (S,TB,C), f32 acc.
    pooled = lax.dot_general(pool_ref[...], x, (((1,), (1,)), ((), ())),
                             preferred_element_type=jnp.float32)
    p2d = pooled.reshape(s_out * tb, c).astype(cdt)                  # free leading merge

    # Conv1x1 (C->128); 1/25 and BN-scale folded into w1 on host; f32 accumulate.
    h1 = jnp.dot(p2d, w1_ref[...], preferred_element_type=jnp.float32)   # (S*TB, 128)
    h1 = jnp.maximum(h1 + shift_ref[...], 0.0).astype(cdt)
    h1 = h1.reshape(s_out, tb, k128)                                 # free leading split

    # Conv2d(128,768,2): S accumulated (TB,128)@(128,768) matmuls, no lane concat.
    acc = jnp.zeros((tb, w2m_ref.shape[2]), jnp.float32)
    for s in range(s_out):                                           # static unroll, S=4
        acc = acc + jnp.dot(h1[s], w2m_ref[s], preferred_element_type=jnp.float32)
    h2 = jnp.maximum(acc, 0.0).astype(cdt)

    o_ref[...] = (jnp.dot(h2, wc_ref[...], preferred_element_type=jnp.float32)
                  + bc_ref[...])


# ------------------------------------------------------------------------ host helpers
def _pool_matrix(H, W, out_h, out_w):
    """(S, H*W) 0/1 matrix selecting each 5x5/stride-2 window (sum pooling)."""
    rows = []
    for oh in range(out_h):
        for ow in range(out_w):
            win = jnp.zeros((H, W), jnp.float32)
            win = win.at[oh * POOL_S:oh * POOL_S + POOL_K,
                         ow * POOL_S:ow * POOL_S + POOL_K].set(1.0)
            rows.append(win.reshape(1, H * W))
    return jnp.concatenate(rows, axis=0)


def _tpu_vmem_bytes():
    """Best-effort per-TensorCore VMEM capacity; conservative v7x fallback."""
    try:
        v = int(pltpu.get_tpu_info().vmem_capacity_bytes)
        if v > 0:
            return v
    except Exception:
        pass
    return 64 << 20


def _tpu_core_count():
    """Best-effort TensorCore count (v7x=2); falls back to 1 (no grid split)."""
    try:
        info = pltpu.get_tpu_info()
        for attr in ("num_cores", "core_count", "num_tensorcores"):
            v = getattr(info, attr, None)
            if v:
                return int(v)
    except Exception:
        pass
    return 1


def _choose_batch_tile(N, row_bytes, *, cap, x_budget_bytes, prefer_split):
    """Batch tile: fills the MXU M dimension, stays inside a conservative VMEM budget
    (real x-side footprint ~3x the tile: double buffer + in-kernel ReLU copy), splits
    for >=2 grid steps only on multi-TensorCore parts, and is 8-aligned (unmasked vst)."""
    tb_mem = max(1, x_budget_bytes // max(1, 3 * row_bytes))
    tb = min(cap, tb_mem, max(N, 1))
    if prefer_split and N > 8:
        tb = min(tb, -(-N // 2))          # keep >= 2 grid steps for 2-TC parts
    tb = max(8, ((tb + 7) // 8) * 8)      # round UP to sublane multiple; N is padded
    return int(tb)


# ----------------------------------------------------------------------------- wrapper
def aux_head_imagenet(x, params, *, data_format="NCHW",
                      compute_dtype=jnp.bfloat16, batch_tile=None, force_path=None):
    """AuxiliaryHeadImageNet forward. x: (N, C, H, W) NCHW or (N, H, W, C) NHWC."""
    if data_format == "NCHW":
        N, C, H, W = x.shape
    elif data_format == "NHWC":
        N, H, W, C = x.shape
    else:
        raise ValueError(f"unknown data_format {data_format}")

    out_h = (H - POOL_K) // POOL_S + 1
    out_w = (W - POOL_K) // POOL_S + 1
    assert out_h == 2 and out_w == 2, "Linear(768) requires 7x7 or 8x8 input"
    HW = H * W
    S = out_h * out_w
    itemsize = jnp.dtype(compute_dtype).itemsize

    # Classifier params, padded to a lane-dense multiple of 128 classes.
    num_classes = params["wc"].shape[1]
    nc_pad = -(-num_classes // LANE) * LANE
    wc = params["wc"].astype(compute_dtype)
    bc = params["bc"].astype(jnp.float32)
    if nc_pad != num_classes:
        wc = jnp.pad(wc, ((0, 0), (0, nc_pad - num_classes)))
        bc = jnp.pad(bc, ((0, 0), (0, nc_pad - num_classes)))

    # Fold 1/(5*5) and the BN scale into the conv1 weight (eval-mode BN folding).
    # TODO(synk): PyTorch default train-mode BN uses batch statistics; this is the
    # standard inference (running-stats) folding.
    inv_area = 1.0 / float(POOL_K * POOL_K)
    bn_scale = params["bn_scale"].astype(jnp.float32)                 # (1, 128)
    bn_shift = params["bn_shift"].astype(jnp.float32)                 # (1, 128)
    w1_eff = params["w1"].astype(jnp.float32) * inv_area * bn_scale   # (C, 128)
    pool_m = _pool_matrix(H, W, out_h, out_w)                         # (S, HW) 0/1 f32
    w2m = params["w2m"].astype(compute_dtype)                         # (S*128, 768)

    # Path selection: fold pool+conv1 into one weight when it stays small (small C).
    wbig_bytes = (C * HW) * (S * 128) * itemsize
    fused = (wbig_bytes <= (4 << 20)) if force_path is None else (force_path == "fused")

    # Hardware-aware tiling / VMEM budgeting.
    vmem_cap = _tpu_vmem_bytes()
    cap = 256 if vmem_cap >= (100 << 20) else 128        # fill v6e's 256-row MXU
    x_budget = (16 << 20) if vmem_cap >= (100 << 20) else (6 << 20)
    row_bytes = HW * C * itemsize
    tb = batch_tile or _choose_batch_tile(N, row_bytes, cap=cap,
                                          x_budget_bytes=x_budget,
                                          prefer_split=_tpu_core_count() >= 2)
    n_pad = -(-N // tb) * tb

    if fused:
        # Lane-dense flattened input rows; no layout transpose needed for either format.
        if data_format == "NCHW":
            x2 = x.reshape(N, C * HW).astype(compute_dtype)
            wbig = jnp.einsum('sp,ck->cpsk', pool_m, w1_eff)          # row = c*HW + p
        else:
            x2 = x.reshape(N, HW * C).astype(compute_dtype)
            wbig = jnp.einsum('sp,ck->pcsk', pool_m, w1_eff)          # row = p*C + c
        wbig = wbig.reshape(C * HW, S * 128).astype(compute_dtype)
        shift_big = jnp.tile(bn_shift, (1, S))                        # col = s*128 + k
        if n_pad != N:
            x2 = jnp.pad(x2, ((0, n_pad - N), (0, 0)))
        kernel = _aux_head_fused_kernel
        x_arg = x2
        x_spec = pl.BlockSpec((tb, x2.shape[1]), lambda n: (n, 0))
        const_args = (wbig, shift_big, w2m, wc, bc)
    else:
        # Channels-last layout for the general (large-C) path.
        # TODO(synk): fuse this NCHW->channels-last conversion into the producer of x
        # instead of a standalone HBM round trip here.
        if data_format == "NCHW":
            x3 = jnp.transpose(x, (0, 2, 3, 1)).reshape(N, HW, C).astype(compute_dtype)
        else:
            x3 = x.reshape(N, HW, C).astype(compute_dtype)
        if n_pad != N:
            x3 = jnp.pad(x3, ((0, n_pad - N), (0, 0), (0, 0)))
        kernel = _aux_head_general_kernel
        x_arg = x3
        x_spec = pl.BlockSpec((tb, HW, C), lambda n: (n, 0, 0))
        const_args = (pool_m.astype(compute_dtype),
                      w1_eff.astype(compute_dtype),
                      bn_shift,
                      w2m.reshape(S, 128, -1),
                      wc, bc)

    # VMEM limit from actual usage: 3x x-tile (double buffer + ReLU copy) + weights
    # (counted double-buffered to be safe) + 2x out tile + f32 intermediates.
    x_tile_bytes = tb * row_bytes
    const_bytes = sum(int(a.size) * a.dtype.itemsize for a in const_args)
    out_tile_bytes = tb * nc_pad * 4
    per_step = 3 * x_tile_bytes + 2 * const_bytes + 2 * out_tile_bytes + tb * (32 << 10)
    vmem_limit = int(min(max(16 << 20, 2 * per_step), max(16 << 20, vmem_cap // 2)))

    def _call(single_buffer_weights):
        def cspec(a):
            if single_buffer_weights:
                return pl.BlockSpec(a.shape, lambda n: (0,) * a.ndim,
                                    pipeline_mode=pl.Buffered(1))
            return pl.BlockSpec(a.shape, lambda n: (0,) * a.ndim)

        return pl.pallas_call(
            kernel,
            out_shape=jax.ShapeDtypeStruct((n_pad, nc_pad), jnp.float32),
            grid_spec=pltpu.PrefetchScalarGridSpec(
                num_scalar_prefetch=0,
                grid=(n_pad // tb,),
                in_specs=[x_spec] + [cspec(a) for a in const_args],
                out_specs=pl.BlockSpec((tb, nc_pad), lambda n: (n, 0)),
            ),
            compiler_params=pltpu.CompilerParams(
                dimension_semantics=("parallel",),
                vmem_limit_bytes=vmem_limit),
        )(x_arg, *const_args)

    try:
        # Grid-invariant operands single-buffered: frees VMEM headroom on v7x (64 MiB).
        out = _call(True)
    except Exception:
        # Defensive: retry with default (double) buffering if this Pallas build rejects
        # pipeline_mode=pl.Buffered(1) on pallas_call inputs.
        out = _call(False)

    return out[:N, :num_classes]


# ----------------------------------------------------------------- params & reference
def make_params(key, C, num_classes):
    """Deterministic synthetic parameters with PyTorch-layout originals."""
    ks = jax.random.split(key, 8)
    conv1_w = jax.random.normal(ks[0], (128, C, 1, 1), jnp.float32) * 0.1
    bn_gamma = jax.random.uniform(ks[1], (128,), jnp.float32, 0.5, 1.5)
    bn_beta = jax.random.normal(ks[2], (128,), jnp.float32) * 0.1
    bn_mean = jax.random.normal(ks[3], (128,), jnp.float32) * 0.1
    bn_var = jax.random.uniform(ks[4], (128,), jnp.float32, 0.5, 1.5)
    conv2_w = jax.random.normal(ks[5], (768, 128, 2, 2), jnp.float32) * 0.05
    fc_w = jax.random.normal(ks[6], (num_classes, 768), jnp.float32) * 0.05
    fc_b = jax.random.normal(ks[7], (num_classes,), jnp.float32) * 0.1

    scale = bn_gamma / jnp.sqrt(bn_var + BN_EPS)
    shift = bn_beta - bn_mean * scale
    # conv2 weight (O=768, C=128, kh=2, kw=2) -> matrix row = (kh*2 + kw)*128 + c,
    # matching the kernels' (spatial-major, then channel) column / row order.
    w2m = jnp.transpose(conv2_w, (2, 3, 1, 0)).reshape(2 * 2 * 128, 768)

    kernel_params = dict(
        w1=conv1_w.reshape(128, C).T,          # (C, 128)
        bn_scale=scale.reshape(1, 128),
        bn_shift=shift.reshape(1, 128),
        w2m=w2m,                               # (512, 768)
        wc=fc_w.T,                             # (768, num_classes)
        bc=fc_b.reshape(1, num_classes),
    )
    torch_like = dict(conv1_w=conv1_w, bn_gamma=bn_gamma, bn_beta=bn_beta,
                      bn_mean=bn_mean, bn_var=bn_var, conv2_w=conv2_w,
                      fc_w=fc_w, fc_b=fc_b)
    return kernel_params, torch_like


def reference_forward(x_nchw, tp):
    """Plain-JAX reference mirroring the PyTorch forward (eval-mode BN)."""
    x = jnp.maximum(x_nchw, 0.0)
    N, C, H, W = x.shape
    oh = (H - POOL_K) // POOL_S + 1
    ow = (W - POOL_K) // POOL_S + 1
    pooled = jnp.stack([
        jnp.stack([jnp.mean(x[:, :, i * POOL_S:i * POOL_S + POOL_K,
                               j * POOL_S:j * POOL_S + POOL_K], axis=(2, 3))
                   for j in range(ow)], axis=-1)
        for i in range(oh)], axis=-2)                         # (N, C, oh, ow)
    h1 = jnp.einsum('nchw,oc->nohw', pooled, tp["conv1_w"].reshape(128, C))
    mean = tp["bn_mean"][None, :, None, None]
    var = tp["bn_var"][None, :, None, None]
    h1 = (h1 - mean) / jnp.sqrt(var + BN_EPS) * tp["bn_gamma"][None, :, None, None] \
        + tp["bn_beta"][None, :, None, None]
    h1 = jnp.maximum(h1, 0.0)
    h2 = jnp.maximum(jnp.einsum('nchw,ochw->no', h1, tp["conv2_w"]), 0.0)  # (N, 768)
    return h2 @ tp["fc_w"].T + tp["fc_b"][None, :]


if __name__ == "__main__":
    key = jax.random.PRNGKey(0)
    kx, kp = jax.random.split(key)

    N, C, H, W = 8, 4, 8, 8       # 8x8 spatial makes the module's Linear(768) valid
    num_classes = 10
    x = jax.random.normal(kx, (N, C, H, W), jnp.float32)

    params, torch_like = make_params(kp, C, num_classes)
    ref = reference_forward(x, torch_like)

    # float32 compute, fused (small-C) path: tight check against the reference.
    out_f32 = jax.block_until_ready(
        aux_head_imagenet(x, params, compute_dtype=jnp.float32))
    assert out_f32.shape == (N, num_classes)
    assert jnp.allclose(out_f32, ref, rtol=5e-3, atol=5e-3), (
        f"f32 fused mismatch: max abs err = {jnp.max(jnp.abs(out_f32 - ref))}")

    # bfloat16 (default) fused path: MXU matmuls in bf16 with f32 accumulation.
    out_bf16 = jax.block_until_ready(aux_head_imagenet(x, params))
    assert out_bf16.shape == (N, num_classes)
    assert jnp.allclose(out_bf16, ref, rtol=5e-2, atol=5e-2), (
        f"bf16 fused mismatch: max abs err = {jnp.max(jnp.abs(out_bf16 - ref))}")

    # General (large-C) path forced in f32 so both code paths are exercised.
    out_gen = jax.block_until_ready(
        aux_head_imagenet(x, params, compute_dtype=jnp.float32, force_path="general"))
    assert out_gen.shape == (N, num_classes)
    assert jnp.allclose(out_gen, ref, rtol=5e-3, atol=5e-3), (
        f"f32 general mismatch: max abs err = {jnp.max(jnp.abs(out_gen - ref))}")

    print("KERNEL_OK")
</pallas_src>

<mosaic_0001>
module attributes {stable_mosaic.version = 11 : i64} {
  func.func @_aux_head_fused_kernel(%arg0: i32, %arg1: memref<8x256xf32, #tpu.memory_space<vmem>>, %arg2: memref<256x512xf32, #tpu.memory_space<vmem>>, %arg3: memref<1x512xf32, #tpu.memory_space<vmem>>, %arg4: memref<512x768xf32, #tpu.memory_space<vmem>>, %arg5: memref<768x128xf32, #tpu.memory_space<vmem>>, %arg6: memref<1x128xf32, #tpu.memory_space<vmem>>, %arg7: memref<8x128xf32, #tpu.memory_space<vmem>>) attributes {dimension_semantics = [#tpu.dimension_semantics<parallel>], iteration_bounds = array<i64: 1>, scalar_prefetch = 0 : i64, scratch_operands = 0 : i64, tpu.core_type = #tpu.core_type<tc>, window_params = [{transform_indices = @transform_0, window_bounds = array<i64: 8, 256>}, {pipeline_mode = #tpu.pipeline_mode<synchronous>, transform_indices = @transform_1, window_bounds = array<i64: 256, 512>}, {pipeline_mode = #tpu.pipeline_mode<synchronous>, transform_indices = @transform_2, window_bounds = array<i64: 1, 512>}, {pipeline_mode = #tpu.pipeline_mode<synchronous>, transform_indices = @transform_3, window_bounds = array<i64: 512, 768>}, {pipeline_mode = #tpu.pipeline_mode<synchronous>, transform_indices = @transform_4, window_bounds = array<i64: 768, 128>}, {pipeline_mode = #tpu.pipeline_mode<synchronous>, transform_indices = @transform_5, window_bounds = array<i64: 1, 128>}, {transform_indices = @transform_6, window_bounds = array<i64: 8, 128>}]} {
    %c0 = arith.constant 0 : index
    %c0_0 = arith.constant 0 : index
    %0 = vector.load %arg1[%c0, %c0_0] : memref<8x256xf32, #tpu.memory_space<vmem>>, vector<8x256xf32>
    %cst = arith.constant 0.000000e+00 : f32
    %1 = vector.broadcast %cst : f32 to vector<8x256xf32>
    %2 = arith.maximumf %0, %1 : vector<8x256xf32>
    %c0_1 = arith.constant 0 : index
    %c0_2 = arith.constant 0 : index
    %3 = vector.load %arg2[%c0_1, %c0_2] : memref<256x512xf32, #tpu.memory_space<vmem>>, vector<256x512xf32>
    %cst_3 = arith.constant dense<0.000000e+00> : vector<8x512xf32>
    %4 = tpu.matmul %2, %3, %cst_3 {dimension_numbers = #tpu.dot_dimension_numbers<[1], [0], [0], [1], [0, 0, 1, 1], [], []>} : vector<8x256xf32>, vector<256x512xf32>, vector<8x512xf32> -> vector<8x512xf32>
    %c0_4 = arith.constant 0 : index
    %c0_5 = arith.constant 0 : index
    %5 = vector.load %arg3[%c0_4, %c0_5] : memref<1x512xf32, #tpu.memory_space<vmem>>, vector<1x512xf32>
    %6 = vector.broadcast %5 : vector<1x512xf32> to vector<8x512xf32>
    %7 = arith.addf %4, %6 : vector<8x512xf32>
    %cst_6 = arith.constant 0.000000e+00 : f32
    %8 = vector.broadcast %cst_6 : f32 to vector<8x512xf32>
    %9 = arith.maximumf %7, %8 : vector<8x512xf32>
    %c0_7 = arith.constant 0 : index
    %c0_8 = arith.constant 0 : index
    %10 = vector.load %arg4[%c0_7, %c0_8] : memref<512x768xf32, #tpu.memory_space<vmem>>, vector<512x768xf32>
    %cst_9 = arith.constant dense<0.000000e+00> : vector<8x768xf32>
    %11 = tpu.matmul %9, %10, %cst_9 {dimension_numbers = #tpu.dot_dimension_numbers<[1], [0], [0], [1], [0, 0, 1, 1], [], []>} : vector<8x512xf32>, vector<512x768xf32>, vector<8x768xf32> -> vector<8x768xf32>
    %cst_10 = arith.constant 0.000000e+00 : f32
    %12 = vector.broadcast %cst_10 : f32 to vector<8x768xf32>
    %13 = arith.maximumf %11, %12 : vector<8x768xf32>
    %c0_11 = arith.constant 0 : index
    %c0_12 = arith.constant 0 : index
    %14 = vector.load %arg5[%c0_11, %c0_12] : memref<768x128xf32, #tpu.memory_space<vmem>>, vector<768x128xf32>
    %cst_13 = arith.constant dense<0.000000e+00> : vector<8x128xf32>
    %15 = tpu.matmul %13, %14, %cst_13 {dimension_numbers = #tpu.dot_dimension_numbers<[1], [0], [0], [1], [0, 0, 1, 1], [], []>} : vector<8x768xf32>, vector<768x128xf32>, vector<8x128xf32> -> vector<8x128xf32>
    %c0_14 = arith.constant 0 : index
    %c0_15 = arith.constant 0 : index
    %16 = vector.load %arg6[%c0_14, %c0_15] : memref<1x128xf32, #tpu.memory_space<vmem>>, vector<1x128xf32>
    %17 = vector.broadcast %16 : vector<1x128xf32> to vector<8x128xf32>
    %18 = arith.addf %15, %17 : vector<8x128xf32>
    %c0_16 = arith.constant 0 : index
    %c0_17 = arith.constant 0 : index
    %19 = vector.load %arg7[%c0_16, %c0_17] : memref<8x128xf32, #tpu.memory_space<vmem>>, vector<8x128xf32>
    tpu.vector_store %arg7[%c0_16, %c0_17], %18 {strides = array<i32>} : memref<8x128xf32, #tpu.memory_space<vmem>>, vector<8x128xf32>,
    return
  }
  func.func @transform_0(%arg0: i32) -> (i32, i32) {
    %c0_i32 = arith.constant 0 : i32
    %c0_i32_0 = arith.constant 0 : i32
    return %arg0, %c0_i32 : i32, i32
  }
  func.func @transform_1(%arg0: i32) -> (i32, i32) {
    %c0_i32 = arith.constant 0 : i32
    %c0_i32_0 = arith.constant 0 : i32
    %c0_i32_1 = arith.constant 0 : i32
    return %c0_i32, %c0_i32_0 : i32, i32
  }
  func.func @transform_2(%arg0: i32) -> (i32, i32) {
    %c0_i32 = arith.constant 0 : i32
    %c0_i32_0 = arith.constant 0 : i32
    %c0_i32_1 = arith.constant 0 : i32
    return %c0_i32, %c0_i32_0 : i32, i32
  }
  func.func @transform_3(%arg0: i32) -> (i32, i32) {
    %c0_i32 = arith.constant 0 : i32
    %c0_i32_0 = arith.constant 0 : i32
    %c0_i32_1 = arith.constant 0 : i32
    return %c0_i32, %c0_i32_0 : i32, i32
  }
  func.func @transform_4(%arg0: i32) -> (i32, i32) {
    %c0_i32 = arith.constant 0 : i32
    %c0_i32_0 = arith.constant 0 : i32
    %c0_i32_1 = arith.constant 0 : i32
    return %c0_i32, %c0_i32_0 : i32, i32
  }
  func.func @transform_5(%arg0: i32) -> (i32, i32) {
    %c0_i32 = arith.constant 0 : i32
    %c0_i32_0 = arith.constant 0 : i32
    %c0_i32_1 = arith.constant 0 : i32
    return %c0_i32, %c0_i32_0 : i32, i32
  }
  func.func @transform_6(%arg0: i32) -> (i32, i32) {
    %c0_i32 = arith.constant 0 : i32
    %c0_i32_0 = arith.constant 0 : i32
    return %arg0, %c0_i32 : i32, i32
  }
}

module attributes {stable_mosaic.version = 11 : i64} {
  func.func @_aux_head_fused_kernel(%arg0: i32, %arg1: memref<8x256xf32, #tpu.memory_space<vmem>>, %arg2: memref<256x512xf32, #tpu.memory_space<vmem>>, %arg3: memref<1x512xf32, #tpu.memory_space<vmem>>, %arg4: memref<512x768xf32, #tpu.memory_space<vmem>>, %arg5: memref<768x128xf32, #tpu.memory_space<vmem>>, %arg6: memref<1x128xf32, #tpu.memory_space<vmem>>, %arg7: memref<8x128xf32, #tpu.memory_space<vmem>>) attributes {dimension_semantics = [#tpu.dimension_semantics<parallel>], iteration_bounds = array<i64: 1>, scalar_prefetch = 0 : i64, scratch_operands = 0 : i64, tpu.core_type = #tpu.core_type<tc>, window_params = [{transform_indices = @transform_0, window_bounds = array<i64: 8, 256>}, {pipeline_mode = #tpu.pipeline_mode<synchronous>, transform_indices = @transform_1, window_bounds = array<i64: 256, 512>}, {pipeline_mode = #tpu.pipeline_mode<synchronous>, transform_indices = @transform_2, window_bounds = array<i64: 1, 512>}, {pipeline_mode = #tpu.pipeline_mode<synchronous>, transform_indices = @transform_3, window_bounds = array<i64: 512, 768>}, {pipeline_mode = #tpu.pipeline_mode<synchronous>, transform_indices = @transform_4, window_bounds = array<i64: 768, 128>}, {pipeline_mode = #tpu.pipeline_mode<synchronous>, transform_indices = @transform_5, window_bounds = array<i64: 1, 128>}, {transform_indices = @transform_6, window_bounds = array<i64: 8, 128>}]} {
    %c0 = arith.constant 0 : index
    %c0_0 = arith.constant 0 : index
    %0 = vector.load %arg1[%c0, %c0_0] : memref<8x256xf32, #tpu.memory_space<vmem>>, vector<8x256xf32>
    %cst = arith.constant 0.000000e+00 : f32
    %1 = vector.broadcast %cst : f32 to vector<8x256xf32>
    %2 = arith.maximumf %0, %1 : vector<8x256xf32>
    %c0_1 = arith.constant 0 : index
    %c0_2 = arith.constant 0 : index
    %3 = vector.load %arg2[%c0_1, %c0_2] : memref<256x512xf32, #tpu.memory_space<vmem>>, vector<256x512xf32>
    %cst_3 = arith.constant dense<0.000000e+00> : vector<8x512xf32>
    %4 = tpu.matmul %2, %3, %cst_3 {dimension_numbers = #tpu.dot_dimension_numbers<[1], [0], [0], [1], [0, 0, 1, 1], [], []>} : vector<8x256xf32>, vector<256x512xf32>, vector<8x512xf32> -> vector<8x512xf32>
    %c0_4 = arith.constant 0 : index
    %c0_5 = arith.constant 0 : index
    %5 = vector.load %arg3[%c0_4, %c0_5] : memref<1x512xf32, #tpu.memory_space<vmem>>, vector<1x512xf32>
    %6 = vector.broadcast %5 : vector<1x512xf32> to vector<8x512xf32>
    %7 = arith.addf %4, %6 : vector<8x512xf32>
    %cst_6 = arith.constant 0.000000e+00 : f32
    %8 = vector.broadcast %cst_6 : f32 to vector<8x512xf32>
    %9 = arith.maximumf %7, %8 : vector<8x512xf32>
    %c0_7 = arith.constant 0 : index
    %c0_8 = arith.constant 0 : index
    %10 = vector.load %arg4[%c0_7, %c0_8] : memref<512x768xf32, #tpu.memory_space<vmem>>, vector<512x768xf32>
    %cst_9 = arith.constant dense<0.000000e+00> : vector<8x768xf32>
    %11 = tpu.matmul %9, %10, %cst_9 {dimension_numbers = #tpu.dot_dimension_numbers<[1], [0], [0], [1], [0, 0, 1, 1], [], []>} : vector<8x512xf32>, vector<512x768xf32>, vector<8x768xf32> -> vector<8x768xf32>
    %cst_10 = arith.constant 0.000000e+00 : f32
    %12 = vector.broadcast %cst_10 : f32 to vector<8x768xf32>
    %13 = arith.maximumf %11, %12 : vector<8x768xf32>
    %c0_11 = arith.constant 0 : index
    %c0_12 = arith.constant 0 : index
    %14 = vector.load %arg5[%c0_11, %c0_12] : memref<768x128xf32, #tpu.memory_space<vmem>>, vector<768x128xf32>
    %cst_13 = arith.constant dense<0.000000e+00> : vector<8x128xf32>
    %15 = tpu.matmul %13, %14, %cst_13 {dimension_numbers = #tpu.dot_dimension_numbers<[1], [0], [0], [1], [0, 0, 1, 1], [], []>} : vector<8x768xf32>, vector<768x128xf32>, vector<8x128xf32> -> vector<8x128xf32>
    %c0_14 = arith.constant 0 : index
    %c0_15 = arith.constant 0 : index
    %16 = vector.load %arg6[%c0_14, %c0_15] : memref<1x128xf32, #tpu.memory_space<vmem>>, vector<1x128xf32>
    %17 = vector.broadcast %16 : vector<1x128xf32> to vector<8x128xf32>
    %18 = arith.addf %15, %17 : vector<8x128xf32>
    %c0_16 = arith.constant 0 : index
    %c0_17 = arith.constant 0 : index
    %19 = vector.load %arg7[%c0_16, %c0_17] : memref<8x128xf32, #tpu.memory_space<vmem>>, vector<8x128xf32>
    tpu.vector_store %arg7[%c0_16, %c0_17], %18 {strides = array<i32>} : memref<8x128xf32, #tpu.memory_space<vmem>>, vector<8x128xf32>,
    return
  }
  func.func @transform_0(%arg0: i32) -> (i32, i32) {
    %c0_i32 = arith.constant 0 : i32
    %c0_i32_0 = arith.constant 0 : i32
    return %arg0, %c0_i32 : i32, i32
  }
  func.func @transform_1(%arg0: i32) -> (i32, i32) {
    %c0_i32 = arith.constant 0 : i32
    %c0_i32_0 = arith.constant 0 : i32
    %c0_i32_1 = arith.constant 0 : i32
    return %c0_i32, %c0_i32_0 : i32, i32
  }
  func.func @transform_2(%arg0: i32) -> (i32, i32) {
    %c0_i32 = arith.constant 0 : i32
    %c0_i32_0 = arith.constant 0 : i32
    %c0_i32_1 = arith.constant 0 : i32
    return %c0_i32, %c0_i32_0 : i32, i32
  }
  func.func @transform_3(%arg0: i32) -> (i32, i32) {
    %c0_i32 = arith.constant 0 : i32
    %c0_i32_0 = arith.constant 0 : i32
    %c0_i32_1 = arith.constant 0 : i32
    return %c0_i32, %c0_i32_0 : i32, i32
  }
  func.func @transform_4(%arg0: i32) -> (i32, i32) {
    %c0_i32 = arith.constant 0 : i32
    %c0_i32_0 = arith.constant 0 : i32
    %c0_i32_1 = arith.constant 0 : i32
    return %c0_i32, %c0_i32_0 : i32, i32
  }
  func.func @transform_5(%arg0: i32) -> (i32, i32) {
    %c0_i32 = arith.constant 0 : i32
    %c0_i32_0 = arith.constant 0 : i32
    %c0_i32_1 = arith.constant 0 : i32
    return %c0_i32, %c0_i32_0 : i32, i32
  }
  func.func @transform_6(%arg0: i32) -> (i32, i32) {
    %c0_i32 = arith.constant 0 : i32
    %c0_i32_0 = arith.constant 0 : i32
    return %arg0, %c0_i32 : i32, i32
  }
}

</mosaic_0001>

<llo_original>
// kernel: tpu_custom_call.1
$region0: #{tpu_custom_call.1}
  #allocation0 [shape = 'u32[]', space=smem, size = 0x4, offset = 0x4, fixed_abs, tag = 'smem constant byte address 0x4 - core index']
  #allocation1 [shape = 'u32[144,128]{1,0:T(1,128)}', space=vmem, size = 0x12000, scoped, tag = 'internal scratch']
  %s0 = inlined_call_operand.hbm [shape: f32[8,256], index: 0, kind: input, shape index: {}]
  %s1 = inlined_call_operand.hbm [shape: f32[256,512], index: 1, kind: input, shape index: {}]
  %s2 = inlined_call_operand.hbm [shape: f32[1,512], index: 2, kind: input, shape index: {}]
  %s3 = inlined_call_operand.hbm [shape: f32[512,768], index: 3, kind: input, shape index: {}]
  %s4 = inlined_call_operand.hbm [shape: f32[768,128], index: 4, kind: input, shape index: {}]
  %s5 = inlined_call_operand.hbm [shape: f32[1,128], index: 5, kind: input, shape index: {}]
  %s6 = inlined_call_operand.hbm [shape: f32[8,128], index: 6, kind: output, shape index: {}]
  %s7 = sld [smem:[#allocation0]]
  $region58: #{tpu_custom_call.1} parent=0
    _
  %s9 = ssub.s32 1, %s7
  %s10 = scalar_select 0, %s9, %s7
  $region1: #{tpu_custom_call.1} parent=0
    #allocation2 [shape = 'u8[8192]{0}', space=vmem, size = 0x2000, scoped, tag = 'input window, operand 0, single buffered']
    #allocation3 [shape = 's32[1]{0}', space=sflag, size = 0x4, scoped, tag = 'scoped memory for tpu_custom_call.1']
    #allocation4 [shape = 's32[1]{0}', space=sflag, size = 0x4, scoped, tag = 'scoped memory for tpu_custom_call.1']
    #allocation5 [shape = 'u8[524288]{0}', space=vmem, size = 0x80000, scoped, tag = 'input window, operand 1, single buffered']
    #allocation6 [shape = 's32[1]{0}', space=sflag, size = 0x4, scoped, tag = 'scoped memory for tpu_custom_call.1']
    #allocation7 [shape = 'u8[2048]{0}', space=vmem, size = 0x800, scoped, tag = 'input window, operand 2, single buffered']
    #allocation8 [shape = 'u8[1572864]{0}', space=vmem, size = 0x180000, scoped, tag = 'input window, operand 3, single buffered']
    #allocation9 [shape = 's32[1]{0}', space=sflag, size = 0x4, scoped, tag = 'scoped memory for tpu_custom_call.1']
    #allocation10 [shape = 'u8[393216]{0}', space=vmem, size = 0x60000, scoped, tag = 'input window, operand 4, single buffered']
    #allocation11 [shape = 'u8[512]{0}', space=vmem, size = 0x400, scoped, tag = 'input window, operand 5, single buffered']
    #allocation12 [shape = 's32[1]{0}', space=sflag, size = 0x4, scoped, tag = 'scoped memory for tpu_custom_call.1']
    #allocation13 [shape = 'u8[4096]{0}', space=vmem, size = 0x1000, scoped, tag = 'output window, operand 0, single buffered']
    %11 = vsyncpa [#allocation3], 0
    %12 = vsyncpa [#allocation6], 0
    %13 = vsyncpa [#allocation9], 0
    %14 = vsyncpa [#allocation12], 0
    %15 = vsyncpa [#allocation4], 0
    // Predicated region
    $region2: #{tpu_custom_call.1} parent=1 // pred_check
      _
    $region3: #{tpu_custom_call.1} parent=1 // pred_check_branch
      %17 = sbr.rel (0) target = $region5
    $region4: #{tpu_custom_call.1} parent=1 // pred_region
      %s19 = ssub.s32 256, 256
      %20 = vsyncadd [#allocation3], %s19
      %s22 = sshll.u32 [#allocation2], 4
      %s23 = int_to_ptr.vmem [resolvable:$true] %s22
      %25 = dma.hbm_to_vmem [thread:$0]  %s0, 256, %s23, [#allocation3]
    $region5: #{tpu_custom_call.1} parent=1 // pred_fallthru
      _
    // Predicated region
    $region6: #{tpu_custom_call.1} parent=1 // pred_check
      _
    $region7: #{tpu_custom_call.1} parent=1 // pred_check_branch
      %27 = sbr.rel (0) target = $region9
    $region8: #{tpu_custom_call.1} parent=1 // pred_region
      %s29 = ssub.s32 16384, 16384
      %30 = vsyncadd [#allocation6], %s29
      %s31 = sshll.u32 [#allocation5], 4
      %s32 = int_to_ptr.vmem [resolvable:$true] %s31
      %37 = dma.hbm_to_vmem [thread:$0]  %s1, 16384, %s32, [#allocation6], 512, 512, 32
    $region9: #{tpu_custom_call.1} parent=1 // pred_fallthru
      _
    // Predicated region
    $region10: #{tpu_custom_call.1} parent=1 // pred_check
      _
    $region11: #{tpu_custom_call.1} parent=1 // pred_check_branch
      %39 = sbr.rel (0) target = $region13
    $region12: #{tpu_custom_call.1} parent=1 // pred_region
      %s41 = ssub.s32 64, 64
      %42 = vsyncadd [#allocation6], %s41
      %s44 = sshll.u32 [#allocation7], 4
      %s45 = int_to_ptr.vmem [resolvable:$true] %s44
      %47 = dma.hbm_to_vmem [thread:$0]  %s2, 64, %s45, [#allocation6]
    $region13: #{tpu_custom_call.1} parent=1 // pred_fallthru
      _
    // Predicated region
    $region14: #{tpu_custom_call.1} parent=1 // pred_check
      _
    $region15: #{tpu_custom_call.1} parent=1 // pred_check_branch
      %49 = sbr.rel (0) target = $region17
    $region16: #{tpu_custom_call.1} parent=1 // pred_region
      %s51 = ssub.s32 49152, 49152
      %52 = vsyncadd [#allocation9], %s51
      %s53 = sshll.u32 [#allocation8], 4
      %s54 = int_to_ptr.vmem [resolvable:$true] %s53
      %59 = dma.hbm_to_vmem [thread:$0]  %s3, 49152, %s54, [#allocation9], 768, 768, 48
    $region17: #{tpu_custom_call.1} parent=1 // pred_fallthru
      _
    // Predicated region
    $region18: #{tpu_custom_call.1} parent=1 // pred_check
      _
    $region19: #{tpu_custom_call.1} parent=1 // pred_check_branch
      %61 = sbr.rel (0) target = $region21
    $region20: #{tpu_custom_call.1} parent=1 // pred_region
      %s63 = ssub.s32 12288, 12288
      %64 = vsyncadd [#allocation9], %s63
      %s65 = sshll.u32 [#allocation10], 4
      %s66 = int_to_ptr.vmem [resolvable:$true] %s65
      %71 = dma.hbm_to_vmem [thread:$0]  %s4, 12288, %s66, [#allocation9], 128, 128, 8
    $region21: #{tpu_custom_call.1} parent=1 // pred_fallthru
      _
    // Predicated region
    $region22: #{tpu_custom_call.1} parent=1 // pred_check
      _
    $region23: #{tpu_custom_call.1} parent=1 // pred_check_branch
      %73 = sbr.rel (0) target = $region25
    $region24: #{tpu_custom_call.1} parent=1 // pred_region
      %s75 = ssub.s32 16, 16
      %76 = vsyncadd [#allocation12], %s75
      %s78 = sshll.u32 [#allocation11], 4
      %s79 = int_to_ptr.vmem [resolvable:$true] %s78
      %81 = dma.hbm_to_vmem [thread:$0]  %s5, 16, %s79, [#allocation12]
    $region25: #{tpu_custom_call.1} parent=1 // pred_fallthru
      _
    // Predicated region
    $region26: #{tpu_custom_call.1} parent=1 // pred_check
      _
    $region27: #{tpu_custom_call.1} parent=1 // pred_check_branch
      %83 = sbr.rel (0) target = $region29
    $region28: #{tpu_custom_call.1} parent=1 // pred_region
      %84 = dma.done [#allocation3], 256
    $region29: #{tpu_custom_call.1} parent=1 // pred_fallthru
      _
    // Predicated region
    $region30: #{tpu_custom_call.1} parent=1 // pred_check
      _
    $region31: #{tpu_custom_call.1} parent=1 // pred_check_branch
      %86 = sbr.rel (0) target = $region33
    $region32: #{tpu_custom_call.1} parent=1 // pred_region
      %87 = dma.done [#allocation6], 16384
    $region33: #{tpu_custom_call.1} parent=1 // pred_fallthru
      _
    // Predicated region
    $region34: #{tpu_custom_call.1} parent=1 // pred_check
      _
    $region35: #{tpu_custom_call.1} parent=1 // pred_check_branch
      %89 = sbr.rel (0) target = $region37
    $region36: #{tpu_custom_call.1} parent=1 // pred_region
      %90 = dma.done [#allocation6], 64
    $region37: #{tpu_custom_call.1} parent=1 // pred_fallthru
      _
    // Predicated region
    $region38: #{tpu_custom_call.1} parent=1 // pred_check
      _
    $region39: #{tpu_custom_call.1} parent=1 // pred_check_branch
      %92 = sbr.rel (0) target = $region41
    $region40: #{tpu_custom_call.1} parent=1 // pred_region
      %93 = dma.done [#allocation9], 49152
    $region41: #{tpu_custom_call.1} parent=1 // pred_fallthru
      _
    // Predicated region
    $region42: #{tpu_custom_call.1} parent=1 // pred_check
      _
    $region43: #{tpu_custom_call.1} parent=1 // pred_check_branch
      %95 = sbr.rel (0) target = $region45
    $region44: #{tpu_custom_call.1} parent=1 // pred_region
      %96 = dma.done [#allocation9], 12288
    $region45: #{tpu_custom_call.1} parent=1 // pred_fallthru
      _
    // Predicated region
    $region46: #{tpu_custom_call.1} parent=1 // pred_check
      _
    $region47: #{tpu_custom_call.1} parent=1 // pred_check_branch
      %98 = sbr.rel (0) target = $region49
    $region48: #{tpu_custom_call.1} parent=1 // pred_region
      %99 = dma.done [#allocation12], 16
    $region49: #{tpu_custom_call.1} parent=1 // pred_fallthru
      _
    %v100 = vld [vmem:[#allocation2] sm:$0xff]
    %v101 = vld [vmem:[#allocation2 + $0x8] sm:$0xff]
    %v102 = vmax.f32 %v100, 0.0
    %v103 = vmax.f32 %v101, 0.0
    %v104 = vld [vmem:[#allocation5] sm:$0xff]
    %v105 = vld [vmem:[#allocation5 + $0x8] sm:$0xff]
    %v106 = vld [vmem:[#allocation5 + $0x10] sm:$0xff]
    %v107 = vld [vmem:[#allocation5 + $0x18] sm:$0xff]
    %v108 = vld [vmem:[#allocation5 + $0x20] sm:$0xff]
    %v109 = vld [vmem:[#allocation5 + $0x28] sm:$0xff]
    %v110 = vld [vmem:[#allocation5 + $0x30] sm:$0xff]
    %v111 = vld [vmem:[#allocation5 + $0x38] sm:$0xff]
    %v112 = vld [vmem:[#allocation5 + $0x40] sm:$0xff]
    %v113 = vld [vmem:[#allocation5 + $0x48] sm:$0xff]
    %v114 = vld [vmem:[#allocation5 + $0x50] sm:$0xff]
    %v115 = vld [vmem:[#allocation5 + $0x58] sm:$0xff]
    %v116 = vld [vmem:[#allocation5 + $0x60] sm:$0xff]
    %v117 = vld [vmem:[#allocation5 + $0x68] sm:$0xff]
    %v118 = vld [vmem:[#allocation5 + $0x70] sm:$0xff]
    %v119 = vld [vmem:[#allocation5 + $0x78] sm:$0xff]
    %v120 = vld [vmem:[#allocation5 + $0x80] sm:$0xff]
    %v121 = vld [vmem:[#allocation5 + $0x88] sm:$0xff]
    %v122 = vld [vmem:[#allocation5 + $0x90] sm:$0xff]
    %v123 = vld [vmem:[#allocation5 + $0x98] sm:$0xff]
    %v124 = vld [vmem:[#allocation5 + $0xa0] sm:$0xff]
    %v125 = vld [vmem:[#allocation5 + $0xa8] sm:$0xff]
    %v126 = vld [vmem:[#allocation5 + $0xb0] sm:$0xff]
    %v127 = vld [vmem:[#allocation5 + $0xb8] sm:$0xff]
    %v128 = vld [vmem:[#allocation5 + $0xc0] sm:$0xff]
    %v129 = vld [vmem:[#allocation5 + $0xc8] sm:$0xff]
    %v130 = vld [vmem:[#allocation5 + $0xd0] sm:$0xff]
    %v131 = vld [vmem:[#allocation5 + $0xd8] sm:$0xff]
    %v132 = vld [vmem:[#allocation5 + $0xe0] sm:$0xff]
    %v133 = vld [vmem:[#allocation5 + $0xe8] sm:$0xff]
    %v134 = vld [vmem:[#allocation5 + $0xf0] sm:$0xff]
    %v135 = vld [vmem:[#allocation5 + $0xf8] sm:$0xff]
    %v136 = vld [vmem:[#allocation5 + $0x100] sm:$0xff]
    %v137 = vld [vmem:[#allocation5 + $0x108] sm:$0xff]
    %v138 = vld [vmem:[#allocation5 + $0x110] sm:$0xff]
    %v139 = vld [vmem:[#allocation5 + $0x118] sm:$0xff]
    %v140 = vld [vmem:[#allocation5 + $0x120] sm:$0xff]
    %v141 = vld [vmem:[#allocation5 + $0x128] sm:$0xff]
    %v142 = vld [vmem:[#allocation5 + $0x130] sm:$0xff]
    %v143 = vld [vmem:[#allocation5 + $0x138] sm:$0xff]
    %v144 = vld [vmem:[#allocation5 + $0x140] sm:$0xff]
    %v145 = vld [vmem:[#allocation5 + $0x148] sm:$0xff]
    %v146 = vld [vmem:[#allocation5 + $0x150] sm:$0xff]
    %v147 = vld [vmem:[#allocation5 + $0x158] sm:$0xff]
    %v148 = vld [vmem:[#allocation5 + $0x160] sm:$0xff]
    %v149 = vld [vmem:[#allocation5 + $0x168] sm:$0xff]
    %v150 = vld [vmem:[#allocation5 + $0x170] sm:$0xff]
    %v151 = vld [vmem:[#allocation5 + $0x178] sm:$0xff]
    %v152 = vld [vmem:[#allocation5 + $0x180] sm:$0xff]
    %v153 = vld [vmem:[#allocation5 + $0x188] sm:$0xff]
    %v154 = vld [vmem:[#allocation5 + $0x190] sm:$0xff]
    %v155 = vld [vmem:[#allocation5 + $0x198] sm:$0xff]
    %v156 = vld [vmem:[#allocation5 + $0x1a0] sm:$0xff]
    %v157 = vld [vmem:[#allocation5 + $0x1a8] sm:$0xff]
    %v158 = vld [vmem:[#allocation5 + $0x1b0] sm:$0xff]
    %v159 = vld [vmem:[#allocation5 + $0x1b8] sm:$0xff]
    %v160 = vld [vmem:[#allocation5 + $0x1c0] sm:$0xff]
    %v161 = vld [vmem:[#allocation5 + $0x1c8] sm:$0xff]
    %v162 = vld [vmem:[#allocation5 + $0x1d0] sm:$0xff]
    %v163 = vld [vmem:[#allocation5 + $0x1d8] sm:$0xff]
    %v164 = vld [vmem:[#allocation5 + $0x1e0] sm:$0xff]
    %v165 = vld [vmem:[#allocation5 + $0x1e8] sm:$0xff]
    %v166 = vld [vmem:[#allocation5 + $0x1f0] sm:$0xff]
    %v167 = vld [vmem:[#allocation5 + $0x1f8] sm:$0xff]
    %v168 = vld [vmem:[#allocation5 + $0x200] sm:$0xff]
    %v169 = vld [vmem:[#allocation5 + $0x208] sm:$0xff]
    %v170 = vld [vmem:[#allocation5 + $0x210] sm:$0xff]
    %v171 = vld [vmem:[#allocation5 + $0x218] sm:$0xff]
    %v172 = vld [vmem:[#allocation5 + $0x220] sm:$0xff]
    %v173 = vld [vmem:[#allocation5 + $0x228] sm:$0xff]
    %v174 = vld [vmem:[#allocation5 + $0x230] sm:$0xff]
    %v175 = vld [vmem:[#allocation5 + $0x238] sm:$0xff]
    %v176 = vld [vmem:[#allocation5 + $0x240] sm:$0xff]
    %v177 = vld [vmem:[#allocation5 + $0x248] sm:$0xff]
    %v178 = vld [vmem:[#allocation5 + $0x250] sm:$0xff]
    %v179 = vld [vmem:[#allocation5 + $0x258] sm:$0xff]
    %v180 = vld [vmem:[#allocation5 + $0x260] sm:$0xff]
    %v181 = vld [vmem:[#allocation5 + $0x268] sm:$0xff]
    %v182 = vld [vmem:[#allocation5 + $0x270] sm:$0xff]
    %v183 = vld [vmem:[#allocation5 + $0x278] sm:$0xff]
    %v184 = vld [vmem:[#allocation5 + $0x280] sm:$0xff]
    %v185 = vld [vmem:[#allocation5 + $0x288] sm:$0xff]
    %v186 = vld [vmem:[#allocation5 + $0x290] sm:$0xff]
    %v187 = vld [vmem:[#allocation5 + $0x298] sm:$0xff]
    %v188 = vld [vmem:[#allocation5 + $0x2a0] sm:$0xff]
    %v189 = vld [vmem:[#allocation5 + $0x2a8] sm:$0xff]
    %v190 = vld [vmem:[#allocation5 + $0x2b0] sm:$0xff]
    %v191 = vld [vmem:[#allocation5 + $0x2b8] sm:$0xff]
    %v192 = vld [vmem:[#allocation5 + $0x2c0] sm:$0xff]
    %v193 = vld [vmem:[#allocation5 + $0x2c8] sm:$0xff]
    %v194 = vld [vmem:[#allocation5 + $0x2d0] sm:$0xff]
    %v195 = vld [vmem:[#allocation5 + $0x2d8] sm:$0xff]
    %v196 = vld [vmem:[#allocation5 + $0x2e0] sm:$0xff]
    %v197 = vld [vmem:[#allocation5 + $0x2e8] sm:$0xff]
    %v198 = vld [vmem:[#allocation5 + $0x2f0] sm:$0xff]
    %v199 = vld [vmem:[#allocation5 + $0x2f8] sm:$0xff]
    %v200 = vld [vmem:[#allocation5 + $0x300] sm:$0xff]
    %v201 = vld [vmem:[#allocation5 + $0x308] sm:$0xff]
    %v202 = vld [vmem:[#allocation5 + $0x310] sm:$0xff]
    %v203 = vld [vmem:[#allocation5 + $0x318] sm:$0xff]
    %v204 = vld [vmem:[#allocation5 + $0x320] sm:$0xff]
    %v205 = vld [vmem:[#allocation5 + $0x328] sm:$0xff]
    %v206 = vld [vmem:[#allocation5 + $0x330] sm:$0xff]
    %v207 = vld [vmem:[#allocation5 + $0x338] sm:$0xff]
    %v208 = vld [vmem:[#allocation5 + $0x340] sm:$0xff]
    %v209 = vld [vmem:[#allocation5 + $0x348] sm:$0xff]
    %v210 = vld [vmem:[#allocation5 + $0x350] sm:$0xff]
    %v211 = vld [vmem:[#allocation5 + $0x358] sm:$0xff]
    %v212 = vld [vmem:[#allocation5 + $0x360] sm:$0xff]
    %v213 = vld [vmem:[#allocation5 + $0x368] sm:$0xff]
    %v214 = vld [vmem:[#allocation5 + $0x370] sm:$0xff]
    %v215 = vld [vmem:[#allocation5 + $0x378] sm:$0xff]
    %v216 = vld [vmem:[#allocation5 + $0x380] sm:$0xff]
    %v217 = vld [vmem:[#allocation5 + $0x388] sm:$0xff]
    %v218 = vld [vmem:[#allocation5 + $0x390] sm:$0xff]
    %v219 = vld [vmem:[#allocation5 + $0x398] sm:$0xff]
    %v220 = vld [vmem:[#allocation5 + $0x3a0] sm:$0xff]
    %v221 = vld [vmem:[#allocation5 + $0x3a8] sm:$0xff]
    %v222 = vld [vmem:[#allocation5 + $0x3b0] sm:$0xff]
    %v223 = vld [vmem:[#allocation5 + $0x3b8] sm:$0xff]
    %v224 = vld [vmem:[#allocation5 + $0x3c0] sm:$0xff]
    %v225 = vld [vmem:[#allocation5 + $0x3c8] sm:$0xff]
    %v226 = vld [vmem:[#allocation5 + $0x3d0] sm:$0xff]
    %v227 = vld [vmem:[#allocation5 + $0x3d8] sm:$0xff]
    %v228 = vld [vmem:[#allocation5 + $0x3e0] sm:$0xff]
    %v229 = vld [vmem:[#allocation5 + $0x3e8] sm:$0xff]
    %v230 = vld [vmem:[#allocation5 + $0x3f0] sm:$0xff]
    %v231 = vld [vmem:[#allocation5 + $0x3f8] sm:$0xff]
    %v232 = vld [vmem:[#allocation7] sm:$0xf]
    %v234 = vlaneseq
    %v235 = vshrl.u32 %v234, 7
    %v236 = vsub.s32 0, %v235
    %v237 = vrot.slane %v232, %v236
    %v238 = vlaneseq
    %v239 = vshrl.u32 %v238, 7
    %v240 = vsub.s32 1, %v239
    %v241 = vrot.slane %v232, %v240
    %v242 = vlaneseq
    %v243 = vshrl.u32 %v242, 7
    %v244 = vsub.s32 2, %v243
    %v245 = vrot.slane %v232, %v244
    %v246 = vlaneseq
    %v247 = vshrl.u32 %v246, 7
    %v248 = vsub.s32 3, %v247
    %v249 = vrot.slane %v232, %v248
    %254 = vmatprep.subr.mxu0 %v105
    %255 = vmatpush1.msra.mxu0 %v104
    %256 = vmatprep.subr.mxu0 %v109
    %257 = vmatpush1.msra.mxu0 %v108
    %258 = vmatprep.subr.mxu0 %v113
    %259 = vmatpush1.msra.mxu0 %v112
    %260 = vmatprep.subr.mxu0 %v117
    %261 = vmatpush1.msra.mxu0 %v116
    %262 = vmatprep.subr.mxu0 %v121
    %263 = vmatpush1.msra.mxu0 %v120
    %264 = vmatprep.subr.mxu0 %v125
    %265 = vmatpush1.msra.mxu0 %v124
    %266 = vmatprep.subr.mxu0 %v129
    %267 = vmatpush1.msra.mxu0 %v128
    %268 = vmatprep.subr.mxu0 %v133
    %269 = vmatpush1.msra.mxu0 %v132
    %270 = vmatprep.subr.mxu0 %v137
    %271 = vmatpush1.msra.mxu0 %v136
    %272 = vmatprep.subr.mxu0 %v141
    %273 = vmatpush1.msra.mxu0 %v140
    %274 = vmatprep.subr.mxu0 %v145
    %275 = vmatpush1.msra.mxu0 %v144
    %276 = vmatprep.subr.mxu0 %v149
    %277 = vmatpush1.msra.mxu0 %v148
    %278 = vmatprep.subr.mxu0 %v153
    %279 = vmatpush1.msra.mxu0 %v152
    %280 = vmatprep.subr.mxu0 %v157
    %281 = vmatpush1.msra.mxu0 %v156
    %282 = vmatprep.subr.mxu0 %v161
    %283 = vmatpush1.msra.mxu0 %v160
    %284 = vmatprep.subr.mxu0 %v165
    %285 = vmatpush1.msra.mxu0 %v164
    %286 = vmatprep.subr.mxu0 %v169
    %287 = vmatpush1.msra.mxu0 %v168
    %288 = vmatprep.subr.mxu0 %v173
    %289 = vmatpush1.msra.mxu0 %v172
    %290 = vmatprep.subr.mxu0 %v177
    %291 = vmatpush1.msra.mxu0 %v176
    %292 = vmatprep.subr.mxu0 %v181
    %293 = vmatpush1.msra.mxu0 %v180
    %294 = vmatprep.subr.mxu0 %v185
    %295 = vmatpush1.msra.mxu0 %v184
    %296 = vmatprep.subr.mxu0 %v189
    %297 = vmatpush1.msra.mxu0 %v188
    %298 = vmatprep.subr.mxu0 %v193
    %299 = vmatpush1.msra.mxu0 %v192
    %300 = vmatprep.subr.mxu0 %v197
    %301 = vmatpush1.msra.mxu0 %v196
    %302 = vmatprep.subr.mxu0 %v201
    %303 = vmatpush1.msra.mxu0 %v200
    %304 = vmatprep.subr.mxu0 %v205
    %305 = vmatpush1.msra.mxu0 %v204
    %306 = vmatprep.subr.mxu0 %v209
    %307 = vmatpush1.msra.mxu0 %v208
    %308 = vmatprep.subr.mxu0 %v213
    %309 = vmatpush1.msra.mxu0 %v212
    %310 = vmatprep.subr.mxu0 %v217
    %311 = vmatpush1.msra.mxu0 %v216
    %312 = vmatprep.subr.mxu0 %v221
    %313 = vmatpush1.msra.mxu0 %v220
    %314 = vmatprep.subr.mxu0 %v225
    %315 = vmatpush1.msra.mxu0 %v224
    %316 = vmatprep.subr.mxu0 %v229
    %317 = vmatpush1.msra.mxu0 %v228
    %318 = vmatprep.mubr.f32.mxu0 %v103
    %319 = vmatmul.mubr.f32.gmra.mrb[0].mxu0 %v102
    %v320 = vpop.f32.mrb[0].mxu0
    %v321 = vadd.f32 %v237, %v320
    %v322 = vpop.f32.mrb[0].mxu0
    %v323 = vadd.f32 %v241, %v322
    %324 = vdwg.mxu0
    %325 = vmatprep.subr.mxu0 %v107
    %326 = vmatpush1.msra.mxu0 %v106
    %327 = vmatprep.subr.mxu0 %v111
    %328 = vmatpush1.msra.mxu0 %v110
    %329 = vmatprep.subr.mxu0 %v115
    %330 = vmatpush1.msra.mxu0 %v114
    %331 = vmatprep.subr.mxu0 %v119
    %332 = vmatpush1.msra.mxu0 %v118
    %333 = vmatprep.subr.mxu0 %v123
    %334 = vmatpush1.msra.mxu0 %v122
    %335 = vmatprep.subr.mxu0 %v127
    %336 = vmatpush1.msra.mxu0 %v126
    %337 = vmatprep.subr.mxu0 %v131
    %338 = vmatpush1.msra.mxu0 %v130
    %339 = vmatprep.subr.mxu0 %v135
    %340 = vmatpush1.msra.mxu0 %v134
    %341 = vmatprep.subr.mxu0 %v139
    %342 = vmatpush1.msra.mxu0 %v138
    %343 = vmatprep.subr.mxu0 %v143
    %344 = vmatpush1.msra.mxu0 %v142
    %345 = vmatprep.subr.mxu0 %v147
    %346 = vmatpush1.msra.mxu0 %v146
    %347 = vmatprep.subr.mxu0 %v151
    %348 = vmatpush1.msra.mxu0 %v150
    %349 = vmatprep.subr.mxu0 %v155
    %350 = vmatpush1.msra.mxu0 %v154
    %351 = vmatprep.subr.mxu0 %v159
    %352 = vmatpush1.msra.mxu0 %v158
    %353 = vmatprep.subr.mxu0 %v163
    %354 = vmatpush1.msra.mxu0 %v162
    %355 = vmatprep.subr.mxu0 %v167
    %356 = vmatpush1.msra.mxu0 %v166
    %357 = vmatprep.subr.mxu0 %v171
    %358 = vmatpush1.msra.mxu0 %v170
    %359 = vmatprep.subr.mxu0 %v175
    %360 = vmatpush1.msra.mxu0 %v174
    %361 = vmatprep.subr.mxu0 %v179
    %362 = vmatpush1.msra.mxu0 %v178
    %363 = vmatprep.subr.mxu0 %v183
    %364 = vmatpush1.msra.mxu0 %v182
    %365 = vmatprep.subr.mxu0 %v187
    %366 = vmatpush1.msra.mxu0 %v186
    %367 = vmatprep.subr.mxu0 %v191
    %368 = vmatpush1.msra.mxu0 %v190
    %369 = vmatprep.subr.mxu0 %v195
    %370 = vmatpush1.msra.mxu0 %v194
    %371 = vmatprep.subr.mxu0 %v199
    %372 = vmatpush1.msra.mxu0 %v198
    %373 = vmatprep.subr.mxu0 %v203
    %374 = vmatpush1.msra.mxu0 %v202
    %375 = vmatprep.subr.mxu0 %v207
    %376 = vmatpush1.msra.mxu0 %v206
    %377 = vmatprep.subr.mxu0 %v211
    %378 = vmatpush1.msra.mxu0 %v210
    %379 = vmatprep.subr.mxu0 %v215
    %380 = vmatpush1.msra.mxu0 %v214
    %381 = vmatprep.subr.mxu0 %v219
    %382 = vmatpush1.msra.mxu0 %v218
    %383 = vmatprep.subr.mxu0 %v223
    %384 = vmatpush1.msra.mxu0 %v222
    %385 = vmatprep.subr.mxu0 %v227
    %386 = vmatpush1.msra.mxu0 %v226
    %387 = vmatprep.subr.mxu0 %v231
    %388 = vmatpush1.msra.mxu0 %v230
    %389 = vmatprep.mubr.f32.mxu0 %v103
    %390 = vmatmul.mubr.f32.gmra.mrb[0].mxu0 %v102
    %v391 = vpop.f32.mrb[0].mxu0
    %v392 = vadd.f32 %v245, %v391
    %v393 = vpop.f32.mrb[0].mxu0
    %v394 = vadd.f32 %v249, %v393
    %395 = vdwg.mxu0
    %v396 = vmax.f32 %v321, 0.0
    %v397 = vmax.f32 %v323, 0.0
    %v398 = vmax.f32 %v392, 0.0
    %v399 = vmax.f32 %v394, 0.0
    %v400 = vld [vmem:[#allocation8] sm:$0xff]
    %v401 = vld [vmem:[#allocation8 + $0x8] sm:$0xff]
    %v402 = vld [vmem:[#allocation8 + $0x10] sm:$0xff]
    %v403 = vld [vmem:[#allocation8 + $0x18] sm:$0xff]
    %v404 = vld [vmem:[#allocation8 + $0x20] sm:$0xff]
    %v405 = vld [vmem:[#allocation8 + $0x28] sm:$0xff]
    %v406 = vld [vmem:[#allocation8 + $0x30] sm:$0xff]
    %v407 = vld [vmem:[#allocation8 + $0x38] sm:$0xff]
    %v408 = vld [vmem:[#allocation8 + $0x40] sm:$0xff]
    %v409 = vld [vmem:[#allocation8 + $0x48] sm:$0xff]
    %v410 = vld [vmem:[#allocation8 + $0x50] sm:$0xff]
    %v411 = vld [vmem:[#allocation8 + $0x58] sm:$0xff]
    %v412 = vld [vmem:[#allocation8 + $0x60] sm:$0xff]
    %v413 = vld [vmem:[#allocation8 + $0x68] sm:$0xff]
    %v414 = vld [vmem:[#allocation8 + $0x70] sm:$0xff]
    %v415 = vld [vmem:[#allocation8 + $0x78] sm:$0xff]
    %v416 = vld [vmem:[#allocation8 + $0x80] sm:$0xff]
    %v417 = vld [vmem:[#allocation8 + $0x88] sm:$0xff]
    %v418 = vld [vmem:[#allocation8 + $0x90] sm:$0xff]
    %v419 = vld [vmem:[#allocation8 + $0x98] sm:$0xff]
    %v420 = vld [vmem:[#allocation8 + $0xa0] sm:$0xff]
    %v421 = vld [vmem:[#allocation8 + $0xa8] sm:$0xff]
    %v422 = vld [vmem:[#allocation8 + $0xb0] sm:$0xff]
    %v423 = vld [vmem:[#allocation8 + $0xb8] sm:$0xff]
    %v424 = vld [vmem:[#allocation8 + $0xc0] sm:$0xff]
    %v425 = vld [vmem:[#allocation8 + $0xc8] sm:$0xff]
    %v426 = vld [vmem:[#allocation8 + $0xd0] sm:$0xff]
    %v427 = vld [vmem:[#allocation8 + $0xd8] sm:$0xff]
    %v428 = vld [vmem:[#allocation8 + $0xe0] sm:$0xff]
    %v429 = vld [vmem:[#allocation8 + $0xe8] sm:$0xff]
    %v430 = vld [vmem:[#allocation8 + $0xf0] sm:$0xff]
    %v431 = vld [vmem:[#allocation8 + $0xf8] sm:$0xff]
    %v432 = vld [vmem:[#allocation8 + $0x100] sm:$0xff]
    %v433 = vld [vmem:[#allocation8 + $0x108] sm:$0xff]
    %v434 = vld [vmem:[#allocation8 + $0x110] sm:$0xff]
    %v435 = vld [vmem:[#allocation8 + $0x118] sm:$0xff]
    %v436 = vld [vmem:[#allocation8 + $0x120] sm:$0xff]
    %v437 = vld [vmem:[#allocation8 + $0x128] sm:$0xff]
    %v438 = vld [vmem:[#allocation8 + $0x130] sm:$0xff]
    %v439 = vld [vmem:[#allocation8 + $0x138] sm:$0xff]
    %v440 = vld [vmem:[#allocation8 + $0x140] sm:$0xff]
    %v441 = vld [vmem:[#allocation8 + $0x148] sm:$0xff]
    %v442 = vld [vmem:[#allocation8 + $0x150] sm:$0xff]
    %v443 = vld [vmem:[#allocation8 + $0x158] sm:$0xff]
    %v444 = vld [vmem:[#allocation8 + $0x160] sm:$0xff]
    %v445 = vld [vmem:[#allocation8 + $0x168] sm:$0xff]
    %v446 = vld [vmem:[#allocation8 + $0x170] sm:$0xff]
    %v447 = vld [vmem:[#allocation8 + $0x178] sm:$0xff]
    %v448 = vld [vmem:[#allocation8 + $0x180] sm:$0xff]
    %v449 = vld [vmem:[#allocation8 + $0x188] sm:$0xff]
    %v450 = vld [vmem:[#allocation8 + $0x190] sm:$0xff]
    %v451 = vld [vmem:[#allocation8 + $0x198] sm:$0xff]
    %v452 = vld [vmem:[#allocation8 + $0x1a0] sm:$0xff]
    %v453 = vld [vmem:[#allocation8 + $0x1a8] sm:$0xff]
    %v454 = vld [vmem:[#allocation8 + $0x1b0] sm:$0xff]
    %v455 = vld [vmem:[#allocation8 + $0x1b8] sm:$0xff]
    %v456 = vld [vmem:[#allocation8 + $0x1c0] sm:$0xff]
    %v457 = vld [vmem:[#allocation8 + $0x1c8] sm:$0xff]
    %v458 = vld [vmem:[#allocation8 + $0x1d0] sm:$0xff]
    %v459 = vld [vmem:[#allocation8 + $0x1d8] sm:$0xff]
    %v460 = vld [vmem:[#allocation8 + $0x1e0] sm:$0xff]
    %v461 = vld [vmem:[#allocation8 + $0x1e8] sm:$0xff]
    %v462 = vld [vmem:[#allocation8 + $0x1f0] sm:$0xff]
    %v463 = vld [vmem:[#allocation8 + $0x1f8] sm:$0xff]
    %v464 = vld [vmem:[#allocation8 + $0x200] sm:$0xff]
    %v465 = vld [vmem:[#allocation8 + $0x208] sm:$0xff]
    %v466 = vld [vmem:[#allocation8 + $0x210] sm:$0xff]
    %v467 = vld [vmem:[#allocation8 + $0x218] sm:$0xff]
    %v468 = vld [vmem:[#allocation8 + $0x220] sm:$0xff]
    %v469 = vld [vmem:[#allocation8 + $0x228] sm:$0xff]
    %v470 = vld [vmem:[#allocation8 + $0x230] sm:$0xff]
    %v471 = vld [vmem:[#allocation8 + $0x238] sm:$0xff]
    %v472 = vld [vmem:[#allocation8 + $0x240] sm:$0xff]
    %v473 = vld [vmem:[#allocation8 + $0x248] sm:$0xff]
    %v474 = vld [vmem:[#allocation8 + $0x250] sm:$0xff]
    %v475 = vld [vmem:[#allocation8 + $0x258] sm:$0xff]
    %v476 = vld [vmem:[#allocation8 + $0x260] sm:$0xff]
    %v477 = vld [vmem:[#allocation8 + $0x268] sm:$0xff]
    %v478 = vld [vmem:[#allocation8 + $0x270] sm:$0xff]
    %v479 = vld [vmem:[#allocation8 + $0x278] sm:$0xff]
    %v480 = vld [vmem:[#allocation8 + $0x280] sm:$0xff]
    %v481 = vld [vmem:[#allocation8 + $0x288] sm:$0xff]
    %v482 = vld [vmem:[#allocation8 + $0x290] sm:$0xff]
    %v483 = vld [vmem:[#allocation8 + $0x298] sm:$0xff]
    %v484 = vld [vmem:[#allocation8 + $0x2a0] sm:$0xff]
    %v485 = vld [vmem:[#allocation8 + $0x2a8] sm:$0xff]
    %v486 = vld [vmem:[#allocation8 + $0x2b0] sm:$0xff]
    %v487 = vld [vmem:[#allocation8 + $0x2b8] sm:$0xff]
    %v488 = vld [vmem:[#allocation8 + $0x2c0] sm:$0xff]
    %v489 = vld [vmem:[#allocation8 + $0x2c8] sm:$0xff]
    %v490 = vld [vmem:[#allocation8 + $0x2d0] sm:$0xff]
    %v491 = vld [vmem:[#allocation8 + $0x2d8] sm:$0xff]
    %v492 = vld [vmem:[#allocation8 + $0x2e0] sm:$0xff]
    %v493 = vld [vmem:[#allocation8 + $0x2e8] sm:$0xff]
    %v494 = vld [vmem:[#allocation8 + $0x2f0] sm:$0xff]
    %v495 = vld [vmem:[#allocation8 + $0x2f8] sm:$0xff]
    %v496 = vld [vmem:[#allocation8 + $0x300] sm:$0xff]
    %v497 = vld [vmem:[#allocation8 + $0x308] sm:$0xff]
    %v498 = vld [vmem:[#allocation8 + $0x310] sm:$0xff]
    %v499 = vld [vmem:[#allocation8 + $0x318] sm:$0xff]
    %v500 = vld [vmem:[#allocation8 + $0x320] sm:$0xff]
    %v501 = vld [vmem:[#allocation8 + $0x328] sm:$0xff]
    %v502 = vld [vmem:[#allocation8 + $0x330] sm:$0xff]
    %v503 = vld [vmem:[#allocation8 + $0x338] sm:$0xff]
    %v504 = vld [vmem:[#allocation8 + $0x340] sm:$0xff]
    %v505 = vld [vmem:[#allocation8 + $0x348] sm:$0xff]
    %v506 = vld [vmem:[#allocation8 + $0x350] sm:$0xff]
    %v507 = vld [vmem:[#allocation8 + $0x358] sm:$0xff]
    %v508 = vld [vmem:[#allocation8 + $0x360] sm:$0xff]
    %v509 = vld [vmem:[#allocation8 + $0x368] sm:$0xff]
    %v510 = vld [vmem:[#allocation8 + $0x370] sm:$0xff]
    %v511 = vld [vmem:[#allocation8 + $0x378] sm:$0xff]
    %v512 = vld [vmem:[#allocation8 + $0x380] sm:$0xff]
    %v513 = vld [vmem:[#allocation8 + $0x388] sm:$0xff]
    %v514 = vld [vmem:[#allocation8 + $0x390] sm:$0xff]
    %v515 = vld [vmem:[#allocation8 + $0x398] sm:$0xff]
    %v516 = vld [vmem:[#allocation8 + $0x3a0] sm:$0xff]
    %v517 = vld [vmem:[#allocation8 + $0x3a8] sm:$0xff]
    %v518 = vld [vmem:[#allocation8 + $0x3b0] sm:$0xff]
    %v519 = vld [vmem:[#allocation8 + $0x3b8] sm:$0xff]
    %v520 = vld [vmem:[#allocation8 + $0x3c0] sm:$0xff]
    %v521 = vld [vmem:[#allocation8 + $0x3c8] sm:$0xff]
    %v522 = vld [vmem:[#allocation8 + $0x3d0] sm:$0xff]
    %v523 = vld [vmem:[#allocation8 + $0x3d8] sm:$0xff]
    %v524 = vld [vmem:[#allocation8 + $0x3e0] sm:$0xff]
    %v525 = vld [vmem:[#allocation8 + $0x3e8] sm:$0xff]
    %v526 = vld [vmem:[#allocation8 + $0x3f0] sm:$0xff]
    %v527 = vld [vmem:[#allocation8 + $0x3f8] sm:$0xff]
    %v528 = vld [vmem:[#allocation8 + $0x400] sm:$0xff]
    %v529 = vld [vmem:[#allocation8 + $0x408] sm:$0xff]
    %v530 = vld [vmem:[#allocation8 + $0x410] sm:$0xff]
    %v531 = vld [vmem:[#allocation8 + $0x418] sm:$0xff]
    %v532 = vld [vmem:[#allocation8 + $0x420] sm:$0xff]
    %v533 = vld [vmem:[#allocation8 + $0x428] sm:$0xff]
    %v534 = vld [vmem:[#allocation8 + $0x430] sm:$0xff]
    %v535 = vld [vmem:[#allocation8 + $0x438] sm:$0xff]
    %v536 = vld [vmem:[#allocation8 + $0x440] sm:$0xff]
    %v537 = vld [vmem:[#allocation8 + $0x448] sm:$0xff]
    %v538 = vld [vmem:[#allocation8 + $0x450] sm:$0xff]
    %v539 = vld [vmem:[#allocation8 + $0x458] sm:$0xff]
    %v540 = vld [vmem:[#allocation8 + $0x460] sm:$0xff]
    %v541 = vld [vmem:[#allocation8 + $0x468] sm:$0xff]
    %v542 = vld [vmem:[#allocation8 + $0x470] sm:$0xff]
    %v543 = vld [vmem:[#allocation8 + $0x478] sm:$0xff]
    %v544 = vld [vmem:[#allocation8 + $0x480] sm:$0xff]
    %v545 = vld [vmem:[#allocation8 + $0x488] sm:$0xff]
    %v546 = vld [vmem:[#allocation8 + $0x490] sm:$0xff]
    %v547 = vld [vmem:[#allocation8 + $0x498] sm:$0xff]
    %v548 = vld [vmem:[#allocation8 + $0x4a0] sm:$0xff]
    %v549 = vld [vmem:[#allocation8 + $0x4a8] sm:$0xff]
    %v550 = vld [vmem:[#allocation8 + $0x4b0] sm:$0xff]
    %v551 = vld [vmem:[#allocation8 + $0x4b8] sm:$0xff]
    %v552 = vld [vmem:[#allocation8 + $0x4c0] sm:$0xff]
    %v553 = vld [vmem:[#allocation8 + $0x4c8] sm:$0xff]
    %v554 = vld [vmem:[#allocation8 + $0x4d0] sm:$0xff]
    %v555 = vld [vmem:[#allocation8 + $0x4d8] sm:$0xff]
    %v556 = vld [vmem:[#allocation8 + $0x4e0] sm:$0xff]
    %v557 = vld [vmem:[#allocation8 + $0x4e8] sm:$0xff]
    %v558 = vld [vmem:[#allocation8 + $0x4f0] sm:$0xff]
    %v559 = vld [vmem:[#allocation8 + $0x4f8] sm:$0xff]
    %v560 = vld [vmem:[#allocation8 + $0x500] sm:$0xff]
    %v561 = vld [vmem:[#allocation8 + $0x508] sm:$0xff]
    %v562 = vld [vmem:[#allocation8 + $0x510] sm:$0xff]
    %v563 = vld [vmem:[#allocation8 + $0x518] sm:$0xff]
    %v564 = vld [vmem:[#allocation8 + $0x520] sm:$0xff]
    %v565 = vld [vmem:[#allocation8 + $0x528] sm:$0xff]
    %v566 = vld [vmem:[#allocation8 + $0x530] sm:$0xff]
    %v567 = vld [vmem:[#allocation8 + $0x538] sm:$0xff]
    %v568 = vld [vmem:[#allocation8 + $0x540] sm:$0xff]
    %v569 = vld [vmem:[#allocation8 + $0x548] sm:$0xff]
    %v570 = vld [vmem:[#allocation8 + $0x550] sm:$0xff]
    %v571 = vld [vmem:[#allocation8 + $0x558] sm:$0xff]
    %v572 = vld [vmem:[#allocation8 + $0x560] sm:$0xff]
    %v573 = vld [vmem:[#allocation8 + $0x568] sm:$0xff]
    %v574 = vld [vmem:[#allocation8 + $0x570] sm:$0xff]
    %v575 = vld [vmem:[#allocation8 + $0x578] sm:$0xff]
    %v576 = vld [vmem:[#allocation8 + $0x580] sm:$0xff]
    %v577 = vld [vmem:[#allocation8 + $0x588] sm:$0xff]
    %v578 = vld [vmem:[#allocation8 + $0x590] sm:$0xff]
    %v579 = vld [vmem:[#allocation8 + $0x598] sm:$0xff]
    %v580 = vld [vmem:[#allocation8 + $0x5a0] sm:$0xff]
    %v581 = vld [vmem:[#allocation8 + $0x5a8] sm:$0xff]
    %v582 = vld [vmem:[#allocation8 + $0x5b0] sm:$0xff]
    %v583 = vld [vmem:[#allocation8 + $0x5b8] sm:$0xff]
    %v584 = vld [vmem:[#allocation8 + $0x5c0] sm:$0xff]
    %v585 = vld [vmem:[#allocation8 + $0x5c8] sm:$0xff]
    %v586 = vld [vmem:[#allocation8 + $0x5d0] sm:$0xff]
    %v587 = vld [vmem:[#allocation8 + $0x5d8] sm:$0xff]
    %v588 = vld [vmem:[#allocation8 + $0x5e0] sm:$0xff]
    %v589 = vld [vmem:[#allocation8 + $0x5e8] sm:$0xff]
    %v590 = vld [vmem:[#allocation8 + $0x5f0] sm:$0xff]
    %v591 = vld [vmem:[#allocation8 + $0x5f8] sm:$0xff]
    %v592 = vld [vmem:[#allocation8 + $0x600] sm:$0xff]
    %v593 = vld [vmem:[#allocation8 + $0x608] sm:$0xff]
    %v594 = vld [vmem:[#allocation8 + $0x610] sm:$0xff]
    %v595 = vld [vmem:[#allocation8 + $0x618] sm:$0xff]
    %v596 = vld [vmem:[#allocation8 + $0x620] sm:$0xff]
    %v597 = vld [vmem:[#allocation8 + $0x628] sm:$0xff]
    %v598 = vld [vmem:[#allocation8 + $0x630] sm:$0xff]
    %v599 = vld [vmem:[#allocation8 + $0x638] sm:$0xff]
    %v600 = vld [vmem:[#allocation8 + $0x640] sm:$0xff]
    %v601 = vld [vmem:[#allocation8 + $0x648] sm:$0xff]
    %v602 = vld [vmem:[#allocation8 + $0x650] sm:$0xff]
    %v603 = vld [vmem:[#allocation8 + $0x658] sm:$0xff]
    %v604 = vld [vmem:[#allocation8 + $0x660] sm:$0xff]
    %v605 = vld [vmem:[#allocation8 + $0x668] sm:$0xff]
    %v606 = vld [vmem:[#allocation8 + $0x670] sm:$0xff]
    %v607 = vld [vmem:[#allocation8 + $0x678] sm:$0xff]
    %v608 = vld [vmem:[#allocation8 + $0x680] sm:$0xff]
    %v609 = vld [vmem:[#allocation8 + $0x688] sm:$0xff]
    %v610 = vld [vmem:[#allocation8 + $0x690] sm:$0xff]
    %v611 = vld [vmem:[#allocation8 + $0x698] sm:$0xff]
    %v612 = vld [vmem:[#allocation8 + $0x6a0] sm:$0xff]
    %v613 = vld [vmem:[#allocation8 + $0x6a8] sm:$0xff]
    %v614 = vld [vmem:[#allocation8 + $0x6b0] sm:$0xff]
    %v615 = vld [vmem:[#allocation8 + $0x6b8] sm:$0xff]
    %v616 = vld [vmem:[#allocation8 + $0x6c0] sm:$0xff]
    %v617 = vld [vmem:[#allocation8 + $0x6c8] sm:$0xff]
    %v618 = vld [vmem:[#allocation8 + $0x6d0] sm:$0xff]
    %v619 = vld [vmem:[#allocation8 + $0x6d8] sm:$0xff]
    %v620 = vld [vmem:[#allocation8 + $0x6e0] sm:$0xff]
    %v621 = vld [vmem:[#allocation8 + $0x6e8] sm:$0xff]
    %v622 = vld [vmem:[#allocation8 + $0x6f0] sm:$0xff]
    %v623 = vld [vmem:[#allocation8 + $0x6f8] sm:$0xff]
    %v624 = vld [vmem:[#allocation8 + $0x700] sm:$0xff]
    %v625 = vld [vmem:[#allocation8 + $0x708] sm:$0xff]
    %v626 = vld [vmem:[#allocation8 + $0x710] sm:$0xff]
    %v627 = vld [vmem:[#allocation8 + $0x718] sm:$0xff]
    %v628 = vld [vmem:[#allocation8 + $0x720] sm:$0xff]
    %v629 = vld [vmem:[#allocation8 + $0x728] sm:$0xff]
    %v630 = vld [vmem:[#allocation8 + $0x730] sm:$0xff]
    %v631 = vld [vmem:[#allocation8 + $0x738] sm:$0xff]
    %v632 = vld [vmem:[#allocation8 + $0x740] sm:$0xff]
    %v633 = vld [vmem:[#allocation8 + $0x748] sm:$0xff]
    %v634 = vld [vmem:[#allocation8 + $0x750] sm:$0xff]
    %v635 = vld [vmem:[#allocation8 + $0x758] sm:$0xff]
    %v636 = vld [vmem:[#allocation8 + $0x760] sm:$0xff]
    %v637 = vld [vmem:[#allocation8 + $0x768] sm:$0xff]
    %v638 = vld [vmem:[#allocation8 + $0x770] sm:$0xff]
    %v639 = vld [vmem:[#allocation8 + $0x778] sm:$0xff]
    %v640 = vld [vmem:[#allocation8 + $0x780] sm:$0xff]
    %v641 = vld [vmem:[#allocation8 + $0x788] sm:$0xff]
    %v642 = vld [vmem:[#allocation8 + $0x790] sm:$0xff]
    %v643 = vld [vmem:[#allocation8 + $0x798] sm:$0xff]
    %v644 = vld [vmem:[#allocation8 + $0x7a0] sm:$0xff]
    %v645 = vld [vmem:[#allocation8 + $0x7a8] sm:$0xff]
    %v646 = vld [vmem:[#allocation8 + $0x7b0] sm:$0xff]
    %v647 = vld [vmem:[#allocation8 + $0x7b8] sm:$0xff]
    %v648 = vld [vmem:[#allocation8 + $0x7c0] sm:$0xff]
    %v649 = vld [vmem:[#allocation8 + $0x7c8] sm:$0xff]
    %v650 = vld [vmem:[#allocation8 + $0x7d0] sm:$0xff]
    %v651 = vld [vmem:[#allocation8 + $0x7d8] sm:$0xff]
    %v652 = vld [vmem:[#allocation8 + $0x7e0] sm:$0xff]
    %v653 = vld [vmem:[#allocation8 + $0x7e8] sm:$0xff]
    %v654 = vld [vmem:[#allocation8 + $0x7f0] sm:$0xff]
    %v655 = vld [vmem:[#allocation8 + $0x7f8] sm:$0xff]
    %v656 = vld [vmem:[#allocation8 + $0x800] sm:$0xff]
    %v657 = vld [vmem:[#allocation8 + $0x808] sm:$0xff]
    %v658 = vld [vmem:[#allocation8 + $0x810] sm:$0xff]
    %v659 = vld [vmem:[#allocation8 + $0x818] sm:$0xff]
    %v660 = vld [vmem:[#allocation8 + $0x820] sm:$0xff]
    %v661 = vld [vmem:[#allocation8 + $0x828] sm:$0xff]
    %v662 = vld [vmem:[#allocation8 + $0x830] sm:$0xff]
    %v663 = vld [vmem:[#allocation8 + $0x838] sm:$0xff]
    %v664 = vld [vmem:[#allocation8 + $0x840] sm:$0xff]
    %v665 = vld [vmem:[#allocation8 + $0x848] sm:$0xff]
    %v666 = vld [vmem:[#allocation8 + $0x850] sm:$0xff]
    %v667 = vld [vmem:[#allocation8 + $0x858] sm:$0xff]
    %v668 = vld [vmem:[#allocation8 + $0x860] sm:$0xff]
    %v669 = vld [vmem:[#allocation8 + $0x868] sm:$0xff]
    %v670 = vld [vmem:[#allocation8 + $0x870] sm:$0xff]
    %v671 = vld [vmem:[#allocation8 + $0x878] sm:$0xff]
    %v672 = vld [vmem:[#allocation8 + $0x880] sm:$0xff]
    %v673 = vld [vmem:[#allocation8 + $0x888] sm:$0xff]
    %v674 = vld [vmem:[#allocation8 + $0x890] sm:$0xff]
    %v675 = vld [vmem:[#allocation8 + $0x898] sm:$0xff]
    %v676 = vld [vmem:[#allocation8 + $0x8a0] sm:$0xff]
    %v677 = vld [vmem:[#allocation8 + $0x8a8] sm:$0xff]
    %v678 = vld [vmem:[#allocation8 + $0x8b0] sm:$0xff]
    %v679 = vld [vmem:[#allocation8 + $0x8b8] sm:$0xff]
    %v680 = vld [vmem:[#allocation8 + $0x8c0] sm:$0xff]
    %v681 = vld [vmem:[#allocation8 + $0x8c8] sm:$0xff]
    %v682 = vld [vmem:[#allocation8 + $0x8d0] sm:$0xff]
    %v683 = vld [vmem:[#allocation8 + $0x8d8] sm:$0xff]
    %v684 = vld [vmem:[#allocation8 + $0x8e0] sm:$0xff]
    %v685 = vld [vmem:[#allocation8 + $0x8e8] sm:$0xff]
    %v686 = vld [vmem:[#allocation8 + $0x8f0] sm:$0xff]
    %v687 = vld [vmem:[#allocation8 + $0x8f8] sm:$0xff]
    %v688 = vld [vmem:[#allocation8 + $0x900] sm:$0xff]
    %v689 = vld [vmem:[#allocation8 + $0x908] sm:$0xff]
    %v690 = vld [vmem:[#allocation8 + $0x910] sm:$0xff]
    %v691 = vld [vmem:[#allocation8 + $0x918] sm:$0xff]
    %v692 = vld [vmem:[#allocation8 + $0x920] sm:$0xff]
    %v693 = vld [vmem:[#allocation8 + $0x928] sm:$0xff]
    %v694 = vld [vmem:[#allocation8 + $0x930] sm:$0xff]
    %v695 = vld [vmem:[#allocation8 + $0x938] sm:$0xff]
    %v696 = vld [vmem:[#allocation8 + $0x940] sm:$0xff]
    %v697 = vld [vmem:[#allocation8 + $0x948] sm:$0xff]
    %v698 = vld [vmem:[#allocation8 + $0x950] sm:$0xff]
    %v699 = vld [vmem:[#allocation8 + $0x958] sm:$0xff]
    %v700 = vld [vmem:[#allocation8 + $0x960] sm:$0xff]
    %v701 = vld [vmem:[#allocation8 + $0x968] sm:$0xff]
    %v702 = vld [vmem:[#allocation8 + $0x970] sm:$0xff]
    %v703 = vld [vmem:[#allocation8 + $0x978] sm:$0xff]
    %v704 = vld [vmem:[#allocation8 + $0x980] sm:$0xff]
    %v705 = vld [vmem:[#allocation8 + $0x988] sm:$0xff]
    %v706 = vld [vmem:[#allocation8 + $0x990] sm:$0xff]
    %v707 = vld [vmem:[#allocation8 + $0x998] sm:$0xff]
    %v708 = vld [vmem:[#allocation8 + $0x9a0] sm:$0xff]
    %v709 = vld [vmem:[#allocation8 + $0x9a8] sm:$0xff]
    %v710 = vld [vmem:[#allocation8 + $0x9b0] sm:$0xff]
    %v711 = vld [vmem:[#allocation8 + $0x9b8] sm:$0xff]
    %v712 = vld [vmem:[#allocation8 + $0x9c0] sm:$0xff]
    %v713 = vld [vmem:[#allocation8 + $0x9c8] sm:$0xff]
    %v714 = vld [vmem:[#allocation8 + $0x9d0] sm:$0xff]
    %v715 = vld [vmem:[#allocation8 + $0x9d8] sm:$0xff]
    %v716 = vld [vmem:[#allocation8 + $0x9e0] sm:$0xff]
    %v717 = vld [vmem:[#allocation8 + $0x9e8] sm:$0xff]
    %v718 = vld [vmem:[#allocation8 + $0x9f0] sm:$0xff]
    %v719 = vld [vmem:[#allocation8 + $0x9f8] sm:$0xff]
    %v720 = vld [vmem:[#allocation8 + $0xa00] sm:$0xff]
    %v721 = vld [vmem:[#allocation8 + $0xa08] sm:$0xff]
    %v722 = vld [vmem:[#allocation8 + $0xa10] sm:$0xff]
    %v723 = vld [vmem:[#allocation8 + $0xa18] sm:$0xff]
    %v724 = vld [vmem:[#allocation8 + $0xa20] sm:$0xff]
    %v725 = vld [vmem:[#allocation8 + $0xa28] sm:$0xff]
    %v726 = vld [vmem:[#allocation8 + $0xa30] sm:$0xff]
    %v727 = vld [vmem:[#allocation8 + $0xa38] sm:$0xff]
    %v728 = vld [vmem:[#allocation8 + $0xa40] sm:$0xff]
    %v729 = vld [vmem:[#allocation8 + $0xa48] sm:$0xff]
    %v730 = vld [vmem:[#allocation8 + $0xa50] sm:$0xff]
    %v731 = vld [vmem:[#allocation8 + $0xa58] sm:$0xff]
    %v732 = vld [vmem:[#allocation8 + $0xa60] sm:$0xff]
    %v733 = vld [vmem:[#allocation8 + $0xa68] sm:$0xff]
    %v734 = vld [vmem:[#allocation8 + $0xa70] sm:$0xff]
    %v735 = vld [vmem:[#allocation8 + $0xa78] sm:$0xff]
    %v736 = vld [vmem:[#allocation8 + $0xa80] sm:$0xff]
    %v737 = vld [vmem:[#allocation8 + $0xa88] sm:$0xff]
    %v738 = vld [vmem:[#allocation8 + $0xa90] sm:$0xff]
    %v739 = vld [vmem:[#allocation8 + $0xa98] sm:$0xff]
    %v740 = vld [vmem:[#allocation8 + $0xaa0] sm:$0xff]
    %v741 = vld [vmem:[#allocation8 + $0xaa8] sm:$0xff]
    %v742 = vld [vmem:[#allocation8 + $0xab0] sm:$0xff]
    %v743 = vld [vmem:[#allocation8 + $0xab8] sm:$0xff]
    %v744 = vld [vmem:[#allocation8 + $0xac0] sm:$0xff]
    %v745 = vld [vmem:[#allocation8 + $0xac8] sm:$0xff]
    %v746 = vld [vmem:[#allocation8 + $0xad0] sm:$0xff]
    %v747 = vld [vmem:[#allocation8 + $0xad8] sm:$0xff]
    %v748 = vld [vmem:[#allocation8 + $0xae0] sm:$0xff]
    %v749 = vld [vmem:[#allocation8 + $0xae8] sm:$0xff]
    %v750 = vld [vmem:[#allocation8 + $0xaf0] sm:$0xff]
    %v751 = vld [vmem:[#allocation8 + $0xaf8] sm:$0xff]
    %v752 = vld [vmem:[#allocation8 + $0xb00] sm:$0xff]
    %v753 = vld [vmem:[#allocation8 + $0xb08] sm:$0xff]
    %v754 = vld [vmem:[#allocation8 + $0xb10] sm:$0xff]
    %v755 = vld [vmem:[#allocation8 + $0xb18] sm:$0xff]
    %v756 = vld [vmem:[#allocation8 + $0xb20] sm:$0xff]
    %v757 = vld [vmem:[#allocation8 + $0xb28] sm:$0xff]
    %v758 = vld [vmem:[#allocation8 + $0xb30] sm:$0xff]
    %v759 = vld [vmem:[#allocation8 + $0xb38] sm:$0xff]
    %v760 = vld [vmem:[#allocation8 + $0xb40] sm:$0xff]
    %v761 = vld [vmem:[#allocation8 + $0xb48] sm:$0xff]
    %v762 = vld [vmem:[#allocation8 + $0xb50] sm:$0xff]
    %v763 = vld [vmem:[#allocation8 + $0xb58] sm:$0xff]
    %v764 = vld [vmem:[#allocation8 + $0xb60] sm:$0xff]
    %v765 = vld [vmem:[#allocation8 + $0xb68] sm:$0xff]
    %v766 = vld [vmem:[#allocation8 + $0xb70] sm:$0xff]
    %v767 = vld [vmem:[#allocation8 + $0xb78] sm:$0xff]
    %v768 = vld [vmem:[#allocation8 + $0xb80] sm:$0xff]
    %v769 = vld [vmem:[#allocation8 + $0xb88] sm:$0xff]
    %v770 = vld [vmem:[#allocation8 + $0xb90] sm:$0xff]
    %v771 = vld [vmem:[#allocation8 + $0xb98] sm:$0xff]
    %v772 = vld [vmem:[#allocation8 + $0xba0] sm:$0xff]
    %v773 = vld [vmem:[#allocation8 + $0xba8] sm:$0xff]
    %v774 = vld [vmem:[#allocation8 + $0xbb0] sm:$0xff]
    %v775 = vld [vmem:[#allocation8 + $0xbb8] sm:$0xff]
    %v776 = vld [vmem:[#allocation8 + $0xbc0] sm:$0xff]
    %v777 = vld [vmem:[#allocation8 + $0xbc8] sm:$0xff]
    %v778 = vld [vmem:[#allocation8 + $0xbd0] sm:$0xff]
    %v779 = vld [vmem:[#allocation8 + $0xbd8] sm:$0xff]
    %v780 = vld [vmem:[#allocation8 + $0xbe0] sm:$0xff]
    %v781 = vld [vmem:[#allocation8 + $0xbe8] sm:$0xff]
    %v782 = vld [vmem:[#allocation8 + $0xbf0] sm:$0xff]
    %v783 = vld [vmem:[#allocation8 + $0xbf8] sm:$0xff]
    %784 = vmatprep.subr.mxu0 %v401
    %785 = vmatpush1.msra.mxu0 %v400
    %786 = vmatprep.subr.mxu0 %v407
    %787 = vmatpush1.msra.mxu0 %v406
    %788 = vmatprep.subr.mxu0 %v413
    %789 = vmatpush1.msra.mxu0 %v412
    %790 = vmatprep.subr.mxu0 %v419
    %791 = vmatpush1.msra.mxu0 %v418
    %792 = vmatprep.subr.mxu0 %v425
    %793 = vmatpush1.msra.mxu0 %v424
    %794 = vmatprep.subr.mxu0 %v431
    %795 = vmatpush1.msra.mxu0 %v430
    %796 = vmatprep.subr.mxu0 %v437
    %797 = vmatpush1.msra.mxu0 %v436
    %798 = vmatprep.subr.mxu0 %v443
    %799 = vmatpush1.msra.mxu0 %v442
    %800 = vmatprep.subr.mxu0 %v449
    %801 = vmatpush1.msra.mxu0 %v448
    %802 = vmatprep.subr.mxu0 %v455
    %803 = vmatpush1.msra.mxu0 %v454
    %804 = vmatprep.subr.mxu0 %v461
    %805 = vmatpush1.msra.mxu0 %v460
    %806 = vmatprep.subr.mxu0 %v467
    %807 = vmatpush1.msra.mxu0 %v466
    %808 = vmatprep.subr.mxu0 %v473
    %809 = vmatpush1.msra.mxu0 %v472
    %810 = vmatprep.subr.mxu0 %v479
    %811 = vmatpush1.msra.mxu0 %v478
    %812 = vmatprep.subr.mxu0 %v485
    %813 = vmatpush1.msra.mxu0 %v484
    %814 = vmatprep.subr.mxu0 %v491
    %815 = vmatpush1.msra.mxu0 %v490
    %816 = vmatprep.subr.mxu0 %v497
    %817 = vmatpush1.msra.mxu0 %v496
    %818 = vmatprep.subr.mxu0 %v503
    %819 = vmatpush1.msra.mxu0 %v502
    %820 = vmatprep.subr.mxu0 %v509
    %821 = vmatpush1.msra.mxu0 %v508
    %822 = vmatprep.subr.mxu0 %v515
    %823 = vmatpush1.msra.mxu0 %v514
    %824 = vmatprep.subr.mxu0 %v521
    %825 = vmatpush1.msra.mxu0 %v520
    %826 = vmatprep.subr.mxu0 %v527
    %827 = vmatpush1.msra.mxu0 %v526
    %828 = vmatprep.subr.mxu0 %v533
    %829 = vmatpush1.msra.mxu0 %v532
    %830 = vmatprep.subr.mxu0 %v539
    %831 = vmatpush1.msra.mxu0 %v538
    %832 = vmatprep.subr.mxu0 %v545
    %833 = vmatpush1.msra.mxu0 %v544
    %834 = vmatprep.subr.mxu0 %v551
    %835 = vmatpush1.msra.mxu0 %v550
    %836 = vmatprep.subr.mxu0 %v557
    %837 = vmatpush1.msra.mxu0 %v556
    %838 = vmatprep.subr.mxu0 %v563
    %839 = vmatpush1.msra.mxu0 %v562
    %840 = vmatprep.subr.mxu0 %v569
    %841 = vmatpush1.msra.mxu0 %v568
    %842 = vmatprep.subr.mxu0 %v575
    %843 = vmatpush1.msra.mxu0 %v574
    %844 = vmatprep.subr.mxu0 %v581
    %845 = vmatpush1.msra.mxu0 %v580
    %846 = vmatprep.subr.mxu0 %v587
    %847 = vmatpush1.msra.mxu0 %v586
    %848 = vmatprep.mubr.f32.mxu0 %v397
    %849 = vmatmul.mubr.f32.gmra.mrb[0].mxu0 %v396
    %v850 = vpop.f32.mrb[0].mxu0
    %v851 = vadd.f32 0.0, %v850
    %v852 = vpop.f32.mrb[0].mxu0
    %v853 = vadd.f32 0.0, %v852
    %854 = vdwg.mxu0
    %855 = vmatprep.subr.mxu0 %v593
    %856 = vmatpush1.msra.mxu0 %v592
    %857 = vmatprep.subr.mxu0 %v599
    %858 = vmatpush1.msra.mxu0 %v598
    %859 = vmatprep.subr.mxu0 %v605
    %860 = vmatpush1.msra.mxu0 %v604
    %861 = vmatprep.subr.mxu0 %v611
    %862 = vmatpush1.msra.mxu0 %v610
    %863 = vmatprep.subr.mxu0 %v617
    %864 = vmatpush1.msra.mxu0 %v616
    %865 = vmatprep.subr.mxu0 %v623
    %866 = vmatpush1.msra.mxu0 %v622
    %867 = vmatprep.subr.mxu0 %v629
    %868 = vmatpush1.msra.mxu0 %v628
    %869 = vmatprep.subr.mxu0 %v635
    %870 = vmatpush1.msra.mxu0 %v634
    %871 = vmatprep.subr.mxu0 %v641
    %872 = vmatpush1.msra.mxu0 %v640
    %873 = vmatprep.subr.mxu0 %v647
    %874 = vmatpush1.msra.mxu0 %v646
    %875 = vmatprep.subr.mxu0 %v653
    %876 = vmatpush1.msra.mxu0 %v652
    %877 = vmatprep.subr.mxu0 %v659
    %878 = vmatpush1.msra.mxu0 %v658
    %879 = vmatprep.subr.mxu0 %v665
    %880 = vmatpush1.msra.mxu0 %v664
    %881 = vmatprep.subr.mxu0 %v671
    %882 = vmatpush1.msra.mxu0 %v670
    %883 = vmatprep.subr.mxu0 %v677
    %884 = vmatpush1.msra.mxu0 %v676
    %885 = vmatprep.subr.mxu0 %v683
    %886 = vmatpush1.msra.mxu0 %v682
    %887 = vmatprep.subr.mxu0 %v689
    %888 = vmatpush1.msra.mxu0 %v688
    %889 = vmatprep.subr.mxu0 %v695
    %890 = vmatpush1.msra.mxu0 %v694
    %891 = vmatprep.subr.mxu0 %v701
    %892 = vmatpush1.msra.mxu0 %v700
    %893 = vmatprep.subr.mxu0 %v707
    %894 = vmatpush1.msra.mxu0 %v706
    %895 = vmatprep.subr.mxu0 %v713
    %896 = vmatpush1.msra.mxu0 %v712
    %897 = vmatprep.subr.mxu0 %v719
    %898 = vmatpush1.msra.mxu0 %v718
    %899 = vmatprep.subr.mxu0 %v725
    %900 = vmatpush1.msra.mxu0 %v724
    %901 = vmatprep.subr.mxu0 %v731
    %902 = vmatpush1.msra.mxu0 %v730
    %903 = vmatprep.subr.mxu0 %v737
    %904 = vmatpush1.msra.mxu0 %v736
    %905 = vmatprep.subr.mxu0 %v743
    %906 = vmatpush1.msra.mxu0 %v742
    %907 = vmatprep.subr.mxu0 %v749
    %908 = vmatpush1.msra.mxu0 %v748
    %909 = vmatprep.subr.mxu0 %v755
    %910 = vmatpush1.msra.mxu0 %v754
    %911 = vmatprep.subr.mxu0 %v761
    %912 = vmatpush1.msra.mxu0 %v760
    %913 = vmatprep.subr.mxu0 %v767
    %914 = vmatpush1.msra.mxu0 %v766
    %915 = vmatprep.subr.mxu0 %v773
    %916 = vmatpush1.msra.mxu0 %v772
    %917 = vmatprep.subr.mxu0 %v779
    %918 = vmatpush1.msra.mxu0 %v778
    %919 = vmatprep.mubr.f32.mxu0 %v399
    %920 = vmatmul.mubr.f32.gmra.mrb[0].mxu0 %v398
    %v921 = vpop.f32.mrb[0].mxu0
    %v922 = vadd.f32 %v851, %v921
    %v923 = vpop.f32.mrb[0].mxu0
    %v924 = vadd.f32 %v853, %v923
    %925 = vdwg.mxu0
    %926 = vmatprep.subr.mxu0 %v403
    %927 = vmatpush1.msra.mxu0 %v402
    %928 = vmatprep.subr.mxu0 %v409
    %929 = vmatpush1.msra.mxu0 %v408
    %930 = vmatprep.subr.mxu0 %v415
    %931 = vmatpush1.msra.mxu0 %v414
    %932 = vmatprep.subr.mxu0 %v421
    %933 = vmatpush1.msra.mxu0 %v420
    %934 = vmatprep.subr.mxu0 %v427
    %935 = vmatpush1.msra.mxu0 %v426
    %936 = vmatprep.subr.mxu0 %v433
    %937 = vmatpush1.msra.mxu0 %v432
    %938 = vmatprep.subr.mxu0 %v439
    %939 = vmatpush1.msra.mxu0 %v438
    %940 = vmatprep.subr.mxu0 %v445
    %941 = vmatpush1.msra.mxu0 %v444
    %942 = vmatprep.subr.mxu0 %v451
    %943 = vmatpush1.msra.mxu0 %v450
    %944 = vmatprep.subr.mxu0 %v457
    %945 = vmatpush1.msra.mxu0 %v456
    %946 = vmatprep.subr.mxu0 %v463
    %947 = vmatpush1.msra.mxu0 %v462
    %948 = vmatprep.subr.mxu0 %v469
    %949 = vmatpush1.msra.mxu0 %v468
    %950 = vmatprep.subr.mxu0 %v475
    %951 = vmatpush1.msra.mxu0 %v474
    %952 = vmatprep.subr.mxu0 %v481
    %953 = vmatpush1.msra.mxu0 %v480
    %954 = vmatprep.subr.mxu0 %v487
    %955 = vmatpush1.msra.mxu0 %v486
    %956 = vmatprep.subr.mxu0 %v493
    %957 = vmatpush1.msra.mxu0 %v492
    %958 = vmatprep.subr.mxu0 %v499
    %959 = vmatpush1.msra.mxu0 %v498
    %960 = vmatprep.subr.mxu0 %v505
    %961 = vmatpush1.msra.mxu0 %v504
    %962 = vmatprep.subr.mxu0 %v511
    %963 = vmatpush1.msra.mxu0 %v510
    %964 = vmatprep.subr.mxu0 %v517
    %965 = vmatpush1.msra.mxu0 %v516
    %966 = vmatprep.subr.mxu0 %v523
    %967 = vmatpush1.msra.mxu0 %v522
    %968 = vmatprep.subr.mxu0 %v529
    %969 = vmatpush1.msra.mxu0 %v528
    %970 = vmatprep.subr.mxu0 %v535
    %971 = vmatpush1.msra.mxu0 %v534
    %972 = vmatprep.subr.mxu0 %v541
    %973 = vmatpush1.msra.mxu0 %v540
    %974 = vmatprep.subr.mxu0 %v547
    %975 = vmatpush1.msra.mxu0 %v546
    %976 = vmatprep.subr.mxu0 %v553
    %977 = vmatpush1.msra.mxu0 %v552
    %978 = vmatprep.subr.mxu0 %v559
    %979 = vmatpush1.msra.mxu0 %v558
    %980 = vmatprep.subr.mxu0 %v565
    %981 = vmatpush1.msra.mxu0 %v564
    %982 = vmatprep.subr.mxu0 %v571
    %983 = vmatpush1.msra.mxu0 %v570
    %984 = vmatprep.subr.mxu0 %v577
    %985 = vmatpush1.msra.mxu0 %v576
    %986 = vmatprep.subr.mxu0 %v583
    %987 = vmatpush1.msra.mxu0 %v582
    %988 = vmatprep.subr.mxu0 %v589
    %989 = vmatpush1.msra.mxu0 %v588
    %990 = vmatprep.mubr.f32.mxu0 %v397
    %991 = vmatmul.mubr.f32.gmra.mrb[0].mxu0 %v396
    %v992 = vpop.f32.mrb[0].mxu0
    %v993 = vadd.f32 0.0, %v992
    %v994 = vpop.f32.mrb[0].mxu0
    %v995 = vadd.f32 0.0, %v994
    %996 = vdwg.mxu0
    %997 = vmatprep.subr.mxu0 %v595
    %998 = vmatpush1.msra.mxu0 %v594
    %999 = vmatprep.subr.mxu0 %v601
    %1000 = vmatpush1.msra.mxu0 %v600
    %1001 = vmatprep.subr.mxu0 %v607
    %1002 = vmatpush1.msra.mxu0 %v606
    %1003 = vmatprep.subr.mxu0 %v613
    %1004 = vmatpush1.msra.mxu0 %v612
    %1005 = vmatprep.subr.mxu0 %v619
    %1006 = vmatpush1.msra.mxu0 %v618
    %1007 = vmatprep.subr.mxu0 %v625
    %1008 = vmatpush1.msra.mxu0 %v624
    %1009 = vmatprep.subr.mxu0 %v631
    %1010 = vmatpush1.msra.mxu0 %v630
    %1011 = vmatprep.subr.mxu0 %v637
    %1012 = vmatpush1.msra.mxu0 %v636
    %1013 = vmatprep.subr.mxu0 %v643
    %1014 = vmatpush1.msra.mxu0 %v642
    %1015 = vmatprep.subr.mxu0 %v649
    %1016 = vmatpush1.msra.mxu0 %v648
    %1017 = vmatprep.subr.mxu0 %v655
    %1018 = vmatpush1.msra.mxu0 %v654
    %1019 = vmatprep.subr.mxu0 %v661
    %1020 = vmatpush1.msra.mxu0 %v660
    %1021 = vmatprep.subr.mxu0 %v667
    %1022 = vmatpush1.msra.mxu0 %v666
    %1023 = vmatprep.subr.mxu0 %v673
    %1024 = vmatpush1.msra.mxu0 %v672
    %1025 = vmatprep.subr.mxu0 %v679
    %1026 = vmatpush1.msra.mxu0 %v678
    %1027 = vmatprep.subr.mxu0 %v685
    %1028 = vmatpush1.msra.mxu0 %v684
    %1029 = vmatprep.subr.mxu0 %v691
    %1030 = vmatpush1.msra.mxu0 %v690
    %1031 = vmatprep.subr.mxu0 %v697
    %1032 = vmatpush1.msra.mxu0 %v696
    %1033 = vmatprep.subr.mxu0 %v703
    %1034 = vmatpush1.msra.mxu0 %v702
    %1035 = vmatprep.subr.mxu0 %v709
    %1036 = vmatpush1.msra.mxu0 %v708
    %1037 = vmatprep.subr.mxu0 %v715
    %1038 = vmatpush1.msra.mxu0 %v714
    %1039 = vmatprep.subr.mxu0 %v721
    %1040 = vmatpush1.msra.mxu0 %v720
    %1041 = vmatprep.subr.mxu0 %v727
    %1042 = vmatpush1.msra.mxu0 %v726
    %1043 = vmatprep.subr.mxu0 %v733
    %1044 = vmatpush1.msra.mxu0 %v732
    %1045 = vmatprep.subr.mxu0 %v739
    %1046 = vmatpush1.msra.mxu0 %v738
    %1047 = vmatprep.subr.mxu0 %v745
    %1048 = vmatpush1.msra.mxu0 %v744
    %1049 = vmatprep.subr.mxu0 %v751
    %1050 = vmatpush1.msra.mxu0 %v750
    %1051 = vmatprep.subr.mxu0 %v757
    %1052 = vmatpush1.msra.mxu0 %v756
    %1053 = vmatprep.subr.mxu0 %v763
    %1054 = vmatpush1.msra.mxu0 %v762
    %1055 = vmatprep.subr.mxu0 %v769
    %1056 = vmatpush1.msra.mxu0 %v768
    %1057 = vmatprep.subr.mxu0 %v775
    %1058 = vmatpush1.msra.mxu0 %v774
    %1059 = vmatprep.subr.mxu0 %v781
    %1060 = vmatpush1.msra.mxu0 %v780
    %1061 = vmatprep.mubr.f32.mxu0 %v399
    %1062 = vmatmul.mubr.f32.gmra.mrb[0].mxu0 %v398
    %v1063 = vpop.f32.mrb[0].mxu0
    %v1064 = vadd.f32 %v993, %v1063
    %v1065 = vpop.f32.mrb[0].mxu0
    %v1066 = vadd.f32 %v995, %v1065
    %1067 = vdwg.mxu0
    %1068 = vmatprep.subr.mxu0 %v405
    %1069 = vmatpush1.msra.mxu0 %v404
    %1070 = vmatprep.subr.mxu0 %v411
    %1071 = vmatpush1.msra.mxu0 %v410
    %1072 = vmatprep.subr.mxu0 %v417
    %1073 = vmatpush1.msra.mxu0 %v416
    %1074 = vmatprep.subr.mxu0 %v423
    %1075 = vmatpush1.msra.mxu0 %v422
    %1076 = vmatprep.subr.mxu0 %v429
    %1077 = vmatpush1.msra.mxu0 %v428
    %1078 = vmatprep.subr.mxu0 %v435
    %1079 = vmatpush1.msra.mxu0 %v434
    %1080 = vmatprep.subr.mxu0 %v441
    %1081 = vmatpush1.msra.mxu0 %v440
    %1082 = vmatprep.subr.mxu0 %v447
    %1083 = vmatpush1.msra.mxu0 %v446
    %1084 = vmatprep.subr.mxu0 %v453
    %1085 = vmatpush1.msra.mxu0 %v452
    %1086 = vmatprep.subr.mxu0 %v459
    %1087 = vmatpush1.msra.mxu0 %v458
    %1088 = vmatprep.subr.mxu0 %v465
    %1089 = vmatpush1.msra.mxu0 %v464
    %1090 = vmatprep.subr.mxu0 %v471
    %1091 = vmatpush1.msra.mxu0 %v470
    %1092 = vmatprep.subr.mxu0 %v477
    %1093 = vmatpush1.msra.mxu0 %v476
    %1094 = vmatprep.subr.mxu0 %v483
    %1095 = vmatpush1.msra.mxu0 %v482
    %1096 = vmatprep.subr.mxu0 %v489
    %1097 = vmatpush1.msra.mxu0 %v488
    %1098 = vmatprep.subr.mxu0 %v495
    %1099 = vmatpush1.msra.mxu0 %v494
    %1100 = vmatprep.subr.mxu0 %v501
    %1101 = vmatpush1.msra.mxu0 %v500
    %1102 = vmatprep.subr.mxu0 %v507
    %1103 = vmatpush1.msra.mxu0 %v506
    %1104 = vmatprep.subr.mxu0 %v513
    %1105 = vmatpush1.msra.mxu0 %v512
    %1106 = vmatprep.subr.mxu0 %v519
    %1107 = vmatpush1.msra.mxu0 %v518
    %1108 = vmatprep.subr.mxu0 %v525
    %1109 = vmatpush1.msra.mxu0 %v524
    %1110 = vmatprep.subr.mxu0 %v531
    %1111 = vmatpush1.msra.mxu0 %v530
    %1112 = vmatprep.subr.mxu0 %v537
    %1113 = vmatpush1.msra.mxu0 %v536
    %1114 = vmatprep.subr.mxu0 %v543
    %1115 = vmatpush1.msra.mxu0 %v542
    %1116 = vmatprep.subr.mxu0 %v549
    %1117 = vmatpush1.msra.mxu0 %v548
    %1118 = vmatprep.subr.mxu0 %v555
    %1119 = vmatpush1.msra.mxu0 %v554
    %1120 = vmatprep.subr.mxu0 %v561
    %1121 = vmatpush1.msra.mxu0 %v560
    %1122 = vmatprep.subr.mxu0 %v567
    %1123 = vmatpush1.msra.mxu0 %v566
    %1124 = vmatprep.subr.mxu0 %v573
    %1125 = vmatpush1.msra.mxu0 %v572
    %1126 = vmatprep.subr.mxu0 %v579
    %1127 = vmatpush1.msra.mxu0 %v578
    %1128 = vmatprep.subr.mxu0 %v585
    %1129 = vmatpush1.msra.mxu0 %v584
    %1130 = vmatprep.subr.mxu0 %v591
    %1131 = vmatpush1.msra.mxu0 %v590
    %1132 = vmatprep.mubr.f32.mxu0 %v397
    %1133 = vmatmul.mubr.f32.gmra.mrb[0].mxu0 %v396
    %v1134 = vpop.f32.mrb[0].mxu0
    %v1135 = vadd.f32 0.0, %v1134
    %v1136 = vpop.f32.mrb[0].mxu0
    %v1137 = vadd.f32 0.0, %v1136
    %1138 = vdwg.mxu0
    %1139 = vmatprep.subr.mxu0 %v597
    %1140 = vmatpush1.msra.mxu0 %v596
    %1141 = vmatprep.subr.mxu0 %v603
    %1142 = vmatpush1.msra.mxu0 %v602
    %1143 = vmatprep.subr.mxu0 %v609
    %1144 = vmatpush1.msra.mxu0 %v608
    %1145 = vmatprep.subr.mxu0 %v615
    %1146 = vmatpush1.msra.mxu0 %v614
    %1147 = vmatprep.subr.mxu0 %v621
    %1148 = vmatpush1.msra.mxu0 %v620
    %1149 = vmatprep.subr.mxu0 %v627
    %1150 = vmatpush1.msra.mxu0 %v626
    %1151 = vmatprep.subr.mxu0 %v633
    %1152 = vmatpush1.msra.mxu0 %v632
    %1153 = vmatprep.subr.mxu0 %v639
    %1154 = vmatpush1.msra.mxu0 %v638
    %1155 = vmatprep.subr.mxu0 %v645
    %1156 = vmatpush1.msra.mxu0 %v644
    %1157 = vmatprep.subr.mxu0 %v651
    %1158 = vmatpush1.msra.mxu0 %v650
    %1159 = vmatprep.subr.mxu0 %v657
    %1160 = vmatpush1.msra.mxu0 %v656
    %1161 = vmatprep.subr.mxu0 %v663
    %1162 = vmatpush1.msra.mxu0 %v662
    %1163 = vmatprep.subr.mxu0 %v669
    %1164 = vmatpush1.msra.mxu0 %v668
    %1165 = vmatprep.subr.mxu0 %v675
    %1166 = vmatpush1.msra.mxu0 %v674
    %1167 = vmatprep.subr.mxu0 %v681
    %1168 = vmatpush1.msra.mxu0 %v680
    %1169 = vmatprep.subr.mxu0 %v687
    %1170 = vmatpush1.msra.mxu0 %v686
    %1171 = vmatprep.subr.mxu0 %v693
    %1172 = vmatpush1.msra.mxu0 %v692
    %1173 = vmatprep.subr.mxu0 %v699
    %1174 = vmatpush1.msra.mxu0 %v698
    %1175 = vmatprep.subr.mxu0 %v705
    %1176 = vmatpush1.msra.mxu0 %v704
    %1177 = vmatprep.subr.mxu0 %v711
    %1178 = vmatpush1.msra.mxu0 %v710
    %1179 = vmatprep.subr.mxu0 %v717
    %1180 = vmatpush1.msra.mxu0 %v716
    %1181 = vmatprep.subr.mxu0 %v723
    %1182 = vmatpush1.msra.mxu0 %v722
    %1183 = vmatprep.subr.mxu0 %v729
    %1184 = vmatpush1.msra.mxu0 %v728
    %1185 = vmatprep.subr.mxu0 %v735
    %1186 = vmatpush1.msra.mxu0 %v734
    %1187 = vmatprep.subr.mxu0 %v741
    %1188 = vmatpush1.msra.mxu0 %v740
    %1189 = vmatprep.subr.mxu0 %v747
    %1190 = vmatpush1.msra.mxu0 %v746
    %1191 = vmatprep.subr.mxu0 %v753
    %1192 = vmatpush1.msra.mxu0 %v752
    %1193 = vmatprep.subr.mxu0 %v759
    %1194 = vmatpush1.msra.mxu0 %v758
    %1195 = vmatprep.subr.mxu0 %v765
    %1196 = vmatpush1.msra.mxu0 %v764
    %1197 = vmatprep.subr.mxu0 %v771
    %1198 = vmatpush1.msra.mxu0 %v770
    %1199 = vmatprep.subr.mxu0 %v777
    %1200 = vmatpush1.msra.mxu0 %v776
    %1201 = vmatprep.subr.mxu0 %v783
    %1202 = vmatpush1.msra.mxu0 %v782
    %1203 = vmatprep.mubr.f32.mxu0 %v399
    %1204 = vmatmul.mubr.f32.gmra.mrb[0].mxu0 %v398
    %v1205 = vpop.f32.mrb[0].mxu0
    %v1206 = vadd.f32 %v1135, %v1205
    %v1207 = vpop.f32.mrb[0].mxu0
    %v1208 = vadd.f32 %v1137, %v1207
    %1209 = vdwg.mxu0
    %v1210 = vmax.f32 %v922, 0.0
    %v1211 = vmax.f32 %v924, 0.0
    %v1212 = vmax.f32 %v1064, 0.0
    %v1213 = vmax.f32 %v1066, 0.0
    %v1214 = vmax.f32 %v1206, 0.0
    %v1215 = vmax.f32 %v1208, 0.0
    %v1216 = vld [vmem:[#allocation10] sm:$0xff]
    %v1217 = vld [vmem:[#allocation10 + $0x8] sm:$0xff]
    %v1218 = vld [vmem:[#allocation10 + $0x10] sm:$0xff]
    %v1219 = vld [vmem:[#allocation10 + $0x18] sm:$0xff]
    %v1220 = vld [vmem:[#allocation10 + $0x20] sm:$0xff]
    %v1221 = vld [vmem:[#allocation10 + $0x28] sm:$0xff]
    %v1222 = vld [vmem:[#allocation10 + $0x30] sm:$0xff]
    %v1223 = vld [vmem:[#allocation10 + $0x38] sm:$0xff]
    %v1224 = vld [vmem:[#allocation10 + $0x40] sm:$0xff]
    %v1225 = vld [vmem:[#allocation10 + $0x48] sm:$0xff]
    %v1226 = vld [vmem:[#allocation10 + $0x50] sm:$0xff]
    %v1227 = vld [vmem:[#allocation10 + $0x58] sm:$0xff]
    %v1228 = vld [vmem:[#allocation10 + $0x60] sm:$0xff]
    %v1229 = vld [vmem:[#allocation10 + $0x68] sm:$0xff]
    %v1230 = vld [vmem:[#allocation10 + $0x70] sm:$0xff]
    %v1231 = vld [vmem:[#allocation10 + $0x78] sm:$0xff]
    %v1232 = vld [vmem:[#allocation10 + $0x80] sm:$0xff]
    %v1233 = vld [vmem:[#allocation10 + $0x88] sm:$0xff]
    %v1234 = vld [vmem:[#allocation10 + $0x90] sm:$0xff]
    %v1235 = vld [vmem:[#allocation10 + $0x98] sm:$0xff]
    %v1236 = vld [vmem:[#allocation10 + $0xa0] sm:$0xff]
    %v1237 = vld [vmem:[#allocation10 + $0xa8] sm:$0xff]
    %v1238 = vld [vmem:[#allocation10 + $0xb0] sm:$0xff]
    %v1239 = vld [vmem:[#allocation10 + $0xb8] sm:$0xff]
    %v1240 = vld [vmem:[#allocation10 + $0xc0] sm:$0xff]
    %v1241 = vld [vmem:[#allocation10 + $0xc8] sm:$0xff]
    %v1242 = vld [vmem:[#allocation10 + $0xd0] sm:$0xff]
    %v1243 = vld [vmem:[#allocation10 + $0xd8] sm:$0xff]
    %v1244 = vld [vmem:[#allocation10 + $0xe0] sm:$0xff]
    %v1245 = vld [vmem:[#allocation10 + $0xe8] sm:$0xff]
    %v1246 = vld [vmem:[#allocation10 + $0xf0] sm:$0xff]
    %v1247 = vld [vmem:[#allocation10 + $0xf8] sm:$0xff]
    %v1248 = vld [vmem:[#allocation10 + $0x100] sm:$0xff]
    %v1249 = vld [vmem:[#allocation10 + $0x108] sm:$0xff]
    %v1250 = vld [vmem:[#allocation10 + $0x110] sm:$0xff]
    %v1251 = vld [vmem:[#allocation10 + $0x118] sm:$0xff]
    %v1252 = vld [vmem:[#allocation10 + $0x120] sm:$0xff]
    %v1253 = vld [vmem:[#allocation10 + $0x128] sm:$0xff]
    %v1254 = vld [vmem:[#allocation10 + $0x130] sm:$0xff]
    %v1255 = vld [vmem:[#allocation10 + $0x138] sm:$0xff]
    %v1256 = vld [vmem:[#allocation10 + $0x140] sm:$0xff]
    %v1257 = vld [vmem:[#allocation10 + $0x148] sm:$0xff]
    %v1258 = vld [vmem:[#allocation10 + $0x150] sm:$0xff]
    %v1259 = vld [vmem:[#allocation10 + $0x158] sm:$0xff]
    %v1260 = vld [vmem:[#allocation10 + $0x160] sm:$0xff]
    %v1261 = vld [vmem:[#allocation10 + $0x168] sm:$0xff]
    %v1262 = vld [vmem:[#allocation10 + $0x170] sm:$0xff]
    %v1263 = vld [vmem:[#allocation10 + $0x178] sm:$0xff]
    %v1264 = vld [vmem:[#allocation10 + $0x180] sm:$0xff]
    %v1265 = vld [vmem:[#allocation10 + $0x188] sm:$0xff]
    %v1266 = vld [vmem:[#allocation10 + $0x190] sm:$0xff]
    %v1267 = vld [vmem:[#allocation10 + $0x198] sm:$0xff]
    %v1268 = vld [vmem:[#allocation10 + $0x1a0] sm:$0xff]
    %v1269 = vld [vmem:[#allocation10 + $0x1a8] sm:$0xff]
    %v1270 = vld [vmem:[#allocation10 + $0x1b0] sm:$0xff]
    %v1271 = vld [vmem:[#allocation10 + $0x1b8] sm:$0xff]
    %v1272 = vld [vmem:[#allocation10 + $0x1c0] sm:$0xff]
    %v1273 = vld [vmem:[#allocation10 + $0x1c8] sm:$0xff]
    %v1274 = vld [vmem:[#allocation10 + $0x1d0] sm:$0xff]
    %v1275 = vld [vmem:[#allocation10 + $0x1d8] sm:$0xff]
    %v1276 = vld [vmem:[#allocation10 + $0x1e0] sm:$0xff]
    %v1277 = vld [vmem:[#allocation10 + $0x1e8] sm:$0xff]
    %v1278 = vld [vmem:[#allocation10 + $0x1f0] sm:$0xff]
    %v1279 = vld [vmem:[#allocation10 + $0x1f8] sm:$0xff]
    %v1280 = vld [vmem:[#allocation10 + $0x200] sm:$0xff]
    %v1281 = vld [vmem:[#allocation10 + $0x208] sm:$0xff]
    %v1282 = vld [vmem:[#allocation10 + $0x210] sm:$0xff]
    %v1283 = vld [vmem:[#allocation10 + $0x218] sm:$0xff]
    %v1284 = vld [vmem:[#allocation10 + $0x220] sm:$0xff]
    %v1285 = vld [vmem:[#allocation10 + $0x228] sm:$0xff]
    %v1286 = vld [vmem:[#allocation10 + $0x230] sm:$0xff]
    %v1287 = vld [vmem:[#allocation10 + $0x238] sm:$0xff]
    %v1288 = vld [vmem:[#allocation10 + $0x240] sm:$0xff]
    %v1289 = vld [vmem:[#allocation10 + $0x248] sm:$0xff]
    %v1290 = vld [vmem:[#allocation10 + $0x250] sm:$0xff]
    %v1291 = vld [vmem:[#allocation10 + $0x258] sm:$0xff]
    %v1292 = vld [vmem:[#allocation10 + $0x260] sm:$0xff]
    %v1293 = vld [vmem:[#allocation10 + $0x268] sm:$0xff]
    %v1294 = vld [vmem:[#allocation10 + $0x270] sm:$0xff]
    %v1295 = vld [vmem:[#allocation10 + $0x278] sm:$0xff]
    %v1296 = vld [vmem:[#allocation10 + $0x280] sm:$0xff]
    %v1297 = vld [vmem:[#allocation10 + $0x288] sm:$0xff]
    %v1298 = vld [vmem:[#allocation10 + $0x290] sm:$0xff]
    %v1299 = vld [vmem:[#allocation10 + $0x298] sm:$0xff]
    %v1300 = vld [vmem:[#allocation10 + $0x2a0] sm:$0xff]
    %v1301 = vld [vmem:[#allocation10 + $0x2a8] sm:$0xff]
    %v1302 = vld [vmem:[#allocation10 + $0x2b0] sm:$0xff]
    %v1303 = vld [vmem:[#allocation10 + $0x2b8] sm:$0xff]
    %v1304 = vld [vmem:[#allocation10 + $0x2c0] sm:$0xff]
    %v1305 = vld [vmem:[#allocation10 + $0x2c8] sm:$0xff]
    %v1306 = vld [vmem:[#allocation10 + $0x2d0] sm:$0xff]
    %v1307 = vld [vmem:[#allocation10 + $0x2d8] sm:$0xff]
    %v1308 = vld [vmem:[#allocation10 + $0x2e0] sm:$0xff]
    %v1309 = vld [vmem:[#allocation10 + $0x2e8] sm:$0xff]
    %v1310 = vld [vmem:[#allocation10 + $0x2f0] sm:$0xff]
    %v1311 = vld [vmem:[#allocation10 + $0x2f8] sm:$0xff]
    %v1312 = vld [vmem:[#allocation11] sm:$0x1]
    %v1314 = vlaneseq
    %v1315 = vshrl.u32 %v1314, 7
    %v1316 = vsub.s32 0, %v1315
    %v1317 = vrot.slane %v1312, %v1316
    %1319 = vmatprep.subr.mxu0 0.0
    %1320 = vmatpush1.msra.mxu0 %v1216
    %1321 = vmatprep.subr.mxu0 0.0
    %1322 = vmatpush1.msra.mxu0 %v1217
    %1323 = vmatprep.subr.mxu0 0.0
    %1324 = vmatpush1.msra.mxu0 %v1218
    %1325 = vmatprep.subr.mxu0 0.0
    %1326 = vmatpush1.msra.mxu0 %v1219
    %1327 = vmatprep.subr.mxu0 0.0
    %1328 = vmatpush1.msra.mxu0 %v1220
    %1329 = vmatprep.subr.mxu0 0.0
    %1330 = vmatpush1.msra.mxu0 %v1221
    %1331 = vmatprep.subr.mxu0 0.0
    %1332 = vmatpush1.msra.mxu0 %v1222
    %1333 = vmatprep.subr.mxu0 0.0
    %1334 = vmatpush1.msra.mxu0 %v1223
    %1335 = vmatprep.subr.mxu0 0.0
    %1336 = vmatpush1.msra.mxu0 %v1224
    %1337 = vmatprep.subr.mxu0 0.0
    %1338 = vmatpush1.msra.mxu0 %v1225
    %1339 = vmatprep.subr.mxu0 0.0
    %1340 = vmatpush1.msra.mxu0 %v1226
    %1341 = vmatprep.subr.mxu0 0.0
    %1342 = vmatpush1.msra.mxu0 %v1227
    %1343 = vmatprep.subr.mxu0 0.0
    %1344 = vmatpush1.msra.mxu0 %v1228
    %1345 = vmatprep.subr.mxu0 0.0
    %1346 = vmatpush1.msra.mxu0 %v1229
    %1347 = vmatprep.subr.mxu0 0.0
    %1348 = vmatpush1.msra.mxu0 %v1230
    %1349 = vmatprep.subr.mxu0 0.0
    %1350 = vmatpush1.msra.mxu0 %v1231
    %1351 = vmatprep.subr.mxu0 0.0
    %1352 = vmatpush1.msra.mxu0 %v1232
    %1353 = vmatprep.subr.mxu0 0.0
    %1354 = vmatpush1.msra.mxu0 %v1233
    %1355 = vmatprep.subr.mxu0 0.0
    %1356 = vmatpush1.msra.mxu0 %v1234
    %1357 = vmatprep.subr.mxu0 0.0
    %1358 = vmatpush1.msra.mxu0 %v1235
    %1359 = vmatprep.subr.mxu0 0.0
    %1360 = vmatpush1.msra.mxu0 %v1236
    %1361 = vmatprep.subr.mxu0 0.0
    %1362 = vmatpush1.msra.mxu0 %v1237
    %1363 = vmatprep.subr.mxu0 0.0
    %1364 = vmatpush1.msra.mxu0 %v1238
    %1365 = vmatprep.subr.mxu0 0.0
    %1366 = vmatpush1.msra.mxu0 %v1239
    %1367 = vmatprep.subr.mxu0 0.0
    %1368 = vmatpush1.msra.mxu0 %v1240
    %1369 = vmatprep.subr.mxu0 0.0
    %1370 = vmatpush1.msra.mxu0 %v1241
    %1371 = vmatprep.subr.mxu0 0.0
    %1372 = vmatpush1.msra.mxu0 %v1242
    %1373 = vmatprep.subr.mxu0 0.0
    %1374 = vmatpush1.msra.mxu0 %v1243
    %1375 = vmatprep.subr.mxu0 0.0
    %1376 = vmatpush1.msra.mxu0 %v1244
    %1377 = vmatprep.subr.mxu0 0.0
    %1378 = vmatpush1.msra.mxu0 %v1245
    %1379 = vmatprep.subr.mxu0 0.0
    %1380 = vmatpush1.msra.mxu0 %v1246
    %1381 = vmatprep.subr.mxu0 0.0
    %1382 = vmatpush1.msra.mxu0 %v1247
    %1383 = vmatprep.mubr.f32.mxu0 %v1211
    %1384 = vmatmul.mubr.f32.gmra.mrb[0].mxu0 %v1210
    %v1385 = vpop.f32.mrb[0].mxu0
    %v1386 = vadd.f32 %v1317, %v1385
    %v1387 = vpop.f32.mrb[0].mxu0
    %1388 = vdwg.mxu0
    %1389 = vmatprep.subr.mxu0 0.0
    %1390 = vmatpush1.msra.mxu0 %v1248
    %1391 = vmatprep.subr.mxu0 0.0
    %1392 = vmatpush1.msra.mxu0 %v1249
    %1393 = vmatprep.subr.mxu0 0.0
    %1394 = vmatpush1.msra.mxu0 %v1250
    %1395 = vmatprep.subr.mxu0 0.0
    %1396 = vmatpush1.msra.mxu0 %v1251
    %1397 = vmatprep.subr.mxu0 0.0
    %1398 = vmatpush1.msra.mxu0 %v1252
    %1399 = vmatprep.subr.mxu0 0.0
    %1400 = vmatpush1.msra.mxu0 %v1253
    %1401 = vmatprep.subr.mxu0 0.0
    %1402 = vmatpush1.msra.mxu0 %v1254
    %1403 = vmatprep.subr.mxu0 0.0
    %1404 = vmatpush1.msra.mxu0 %v1255
    %1405 = vmatprep.subr.mxu0 0.0
    %1406 = vmatpush1.msra.mxu0 %v1256
    %1407 = vmatprep.subr.mxu0 0.0
    %1408 = vmatpush1.msra.mxu0 %v1257
    %1409 = vmatprep.subr.mxu0 0.0
    %1410 = vmatpush1.msra.mxu0 %v1258
    %1411 = vmatprep.subr.mxu0 0.0
    %1412 = vmatpush1.msra.mxu0 %v1259
    %1413 = vmatprep.subr.mxu0 0.0
    %1414 = vmatpush1.msra.mxu0 %v1260
    %1415 = vmatprep.subr.mxu0 0.0
    %1416 = vmatpush1.msra.mxu0 %v1261
    %1417 = vmatprep.subr.mxu0 0.0
    %1418 = vmatpush1.msra.mxu0 %v1262
    %1419 = vmatprep.subr.mxu0 0.0
    %1420 = vmatpush1.msra.mxu0 %v1263
    %1421 = vmatprep.subr.mxu0 0.0
    %1422 = vmatpush1.msra.mxu0 %v1264
    %1423 = vmatprep.subr.mxu0 0.0
    %1424 = vmatpush1.msra.mxu0 %v1265
    %1425 = vmatprep.subr.mxu0 0.0
    %1426 = vmatpush1.msra.mxu0 %v1266
    %1427 = vmatprep.subr.mxu0 0.0
    %1428 = vmatpush1.msra.mxu0 %v1267
    %1429 = vmatprep.subr.mxu0 0.0
    %1430 = vmatpush1.msra.mxu0 %v1268
    %1431 = vmatprep.subr.mxu0 0.0
    %1432 = vmatpush1.msra.mxu0 %v1269
    %1433 = vmatprep.subr.mxu0 0.0
    %1434 = vmatpush1.msra.mxu0 %v1270
    %1435 = vmatprep.subr.mxu0 0.0
    %1436 = vmatpush1.msra.mxu0 %v1271
    %1437 = vmatprep.subr.mxu0 0.0
    %1438 = vmatpush1.msra.mxu0 %v1272
    %1439 = vmatprep.subr.mxu0 0.0
    %1440 = vmatpush1.msra.mxu0 %v1273
    %1441 = vmatprep.subr.mxu0 0.0
    %1442 = vmatpush1.msra.mxu0 %v1274
    %1443 = vmatprep.subr.mxu0 0.0
    %1444 = vmatpush1.msra.mxu0 %v1275
    %1445 = vmatprep.subr.mxu0 0.0
    %1446 = vmatpush1.msra.mxu0 %v1276
    %1447 = vmatprep.subr.mxu0 0.0
    %1448 = vmatpush1.msra.mxu0 %v1277
    %1449 = vmatprep.subr.mxu0 0.0
    %1450 = vmatpush1.msra.mxu0 %v1278
    %1451 = vmatprep.subr.mxu0 0.0
    %1452 = vmatpush1.msra.mxu0 %v1279
    %1453 = vmatprep.mubr.f32.mxu0 %v1213
    %1454 = vmatmul.mubr.f32.gmra.mrb[0].mxu0 %v1212
    %v1455 = vpop.f32.mrb[0].mxu0
    %v1456 = vadd.f32 %v1386, %v1455
    %v1457 = vpop.f32.mrb[0].mxu0
    %1458 = vdwg.mxu0
    %1459 = vmatprep.subr.mxu0 0.0
    %1460 = vmatpush1.msra.mxu0 %v1280
    %1461 = vmatprep.subr.mxu0 0.0
    %1462 = vmatpush1.msra.mxu0 %v1281
    %1463 = vmatprep.subr.mxu0 0.0
    %1464 = vmatpush1.msra.mxu0 %v1282
    %1465 = vmatprep.subr.mxu0 0.0
    %1466 = vmatpush1.msra.mxu0 %v1283
    %1467 = vmatprep.subr.mxu0 0.0
    %1468 = vmatpush1.msra.mxu0 %v1284
    %1469 = vmatprep.subr.mxu0 0.0
    %1470 = vmatpush1.msra.mxu0 %v1285
    %1471 = vmatprep.subr.mxu0 0.0
    %1472 = vmatpush1.msra.mxu0 %v1286
    %1473 = vmatprep.subr.mxu0 0.0
    %1474 = vmatpush1.msra.mxu0 %v1287
    %1475 = vmatprep.subr.mxu0 0.0
    %1476 = vmatpush1.msra.mxu0 %v1288
    %1477 = vmatprep.subr.mxu0 0.0
    %1478 = vmatpush1.msra.mxu0 %v1289
    %1479 = vmatprep.subr.mxu0 0.0
    %1480 = vmatpush1.msra.mxu0 %v1290
    %1481 = vmatprep.subr.mxu0 0.0
    %1482 = vmatpush1.msra.mxu0 %v1291
    %1483 = vmatprep.subr.mxu0 0.0
    %1484 = vmatpush1.msra.mxu0 %v1292
    %1485 = vmatprep.subr.mxu0 0.0
    %1486 = vmatpush1.msra.mxu0 %v1293
    %1487 = vmatprep.subr.mxu0 0.0
    %1488 = vmatpush1.msra.mxu0 %v1294
    %1489 = vmatprep.subr.mxu0 0.0
    %1490 = vmatpush1.msra.mxu0 %v1295
    %1491 = vmatprep.subr.mxu0 0.0
    %1492 = vmatpush1.msra.mxu0 %v1296
    %1493 = vmatprep.subr.mxu0 0.0
    %1494 = vmatpush1.msra.mxu0 %v1297
    %1495 = vmatprep.subr.mxu0 0.0
    %1496 = vmatpush1.msra.mxu0 %v1298
    %1497 = vmatprep.subr.mxu0 0.0
    %1498 = vmatpush1.msra.mxu0 %v1299
    %1499 = vmatprep.subr.mxu0 0.0
    %1500 = vmatpush1.msra.mxu0 %v1300
    %1501 = vmatprep.subr.mxu0 0.0
    %1502 = vmatpush1.msra.mxu0 %v1301
    %1503 = vmatprep.subr.mxu0 0.0
    %1504 = vmatpush1.msra.mxu0 %v1302
    %1505 = vmatprep.subr.mxu0 0.0
    %1506 = vmatpush1.msra.mxu0 %v1303
    %1507 = vmatprep.subr.mxu0 0.0
    %1508 = vmatpush1.msra.mxu0 %v1304
    %1509 = vmatprep.subr.mxu0 0.0
    %1510 = vmatpush1.msra.mxu0 %v1305
    %1511 = vmatprep.subr.mxu0 0.0
    %1512 = vmatpush1.msra.mxu0 %v1306
    %1513 = vmatprep.subr.mxu0 0.0
    %1514 = vmatpush1.msra.mxu0 %v1307
    %1515 = vmatprep.subr.mxu0 0.0
    %1516 = vmatpush1.msra.mxu0 %v1308
    %1517 = vmatprep.subr.mxu0 0.0
    %1518 = vmatpush1.msra.mxu0 %v1309
    %1519 = vmatprep.subr.mxu0 0.0
    %1520 = vmatpush1.msra.mxu0 %v1310
    %1521 = vmatprep.subr.mxu0 0.0
    %1522 = vmatpush1.msra.mxu0 %v1311
    %1523 = vmatprep.mubr.f32.mxu0 %v1215
    %1524 = vmatmul.mubr.f32.gmra.mrb[0].mxu0 %v1214
    %v1525 = vpop.f32.mrb[0].mxu0
    %v1526 = vadd.f32 %v1456, %v1525
    %v1527 = vpop.f32.mrb[0].mxu0
    %1528 = vdwg.mxu0
    %1529 = vst [vmem:[#allocation13] sm:$0xff] %v1526
    // Predicated region
    $region50: #{tpu_custom_call.1} parent=1 // pred_check
      _
    $region51: #{tpu_custom_call.1} parent=1 // pred_check_branch
      %1531 = sbr.rel (0) target = $region53
    $region52: #{tpu_custom_call.1} parent=1 // pred_region
      %s1533 = ssub.s32 128, 128
      %1534 = vsyncadd [#allocation4], %s1533
      %s1536 = sshll.u32 [#allocation13], 4
      %s1537 = int_to_ptr.vmem [resolvable:$true] %s1536
      %1539 = dma.vmem_to_hbm [thread:$0]  %s1537, 128, %s6, [#allocation4]
    $region53: #{tpu_custom_call.1} parent=1 // pred_fallthru
      _
    // Predicated region
    $region54: #{tpu_custom_call.1} parent=1 // pred_check
      _
    $region55: #{tpu_custom_call.1} parent=1 // pred_check_branch
      %1541 = sbr.rel (0) target = $region57
    $region56: #{tpu_custom_call.1} parent=1 // pred_region
      %1542 = dma.done [#allocation4], 128
    $region57: #{tpu_custom_call.1} parent=1 // pred_fallthru
      _
    %1543 = vsyncpa [#allocation3], 1
    %1544 = vsyncpa [#allocation6], 1
    %1545 = vsyncpa [#allocation9], 1
    %1546 = vsyncpa [#allocation12], 1
    %1547 = vsyncpa [#allocation4], 1

// kernel: tpu_custom_call.1
$region0: #{tpu_custom_call.1}
  #allocation0 [shape = 'u32[]', space=smem, size = 0x4, offset = 0x4, fixed_abs, tag = 'smem constant byte address 0x4 - core index']
  #allocation1 [shape = 'u32[144,128]{1,0:T(1,128)}', space=vmem, size = 0x12000, scoped, tag = 'internal scratch']
  %s0 = inlined_call_operand.hbm [shape: f32[8,256], index: 0, kind: input, shape index: {}]
  %s1 = inlined_call_operand.hbm [shape: f32[256,512], index: 1, kind: input, shape index: {}]
  %s2 = inlined_call_operand.hbm [shape: f32[1,512], index: 2, kind: input, shape index: {}]
  %s3 = inlined_call_operand.hbm [shape: f32[512,768], index: 3, kind: input, shape index: {}]
  %s4 = inlined_call_operand.hbm [shape: f32[768,128], index: 4, kind: input, shape index: {}]
  %s5 = inlined_call_operand.hbm [shape: f32[1,128], index: 5, kind: input, shape index: {}]
  %s6 = inlined_call_operand.hbm [shape: f32[8,128], index: 6, kind: output, shape index: {}]
  %s7 = sld [smem:[#allocation0]]
  $region58: #{tpu_custom_call.1} parent=0
    _
  %s9 = ssub.s32 1, %s7
  %s10 = scalar_select 0, %s9, %s7
  $region1: #{tpu_custom_call.1} parent=0
    #allocation2 [shape = 'u8[8192]{0}', space=vmem, size = 0x2000, scoped, tag = 'input window, operand 0, single buffered']
    #allocation3 [shape = 's32[1]{0}', space=sflag, size = 0x4, scoped, tag = 'scoped memory for tpu_custom_call.1']
    #allocation4 [shape = 's32[1]{0}', space=sflag, size = 0x4, scoped, tag = 'scoped memory for tpu_custom_call.1']
    #allocation5 [shape = 'u8[524288]{0}', space=vmem, size = 0x80000, scoped, tag = 'input window, operand 1, single buffered']
    #allocation6 [shape = 's32[1]{0}', space=sflag, size = 0x4, scoped, tag = 'scoped memory for tpu_custom_call.1']
    #allocation7 [shape = 'u8[2048]{0}', space=vmem, size = 0x800, scoped, tag = 'input window, operand 2, single buffered']
    #allocation8 [shape = 'u8[1572864]{0}', space=vmem, size = 0x180000, scoped, tag = 'input window, operand 3, single buffered']
    #allocation9 [shape = 's32[1]{0}', space=sflag, size = 0x4, scoped, tag = 'scoped memory for tpu_custom_call.1']
    #allocation10 [shape = 'u8[393216]{0}', space=vmem, size = 0x60000, scoped, tag = 'input window, operand 4, single buffered']
    #allocation11 [shape = 'u8[512]{0}', space=vmem, size = 0x400, scoped, tag = 'input window, operand 5, single buffered']
    #allocation12 [shape = 's32[1]{0}', space=sflag, size = 0x4, scoped, tag = 'scoped memory for tpu_custom_call.1']
    #allocation13 [shape = 'u8[4096]{0}', space=vmem, size = 0x1000, scoped, tag = 'output window, operand 0, single buffered']
    %11 = vsyncpa [#allocation3], 0
    %12 = vsyncpa [#allocation6], 0
    %13 = vsyncpa [#allocation9], 0
    %14 = vsyncpa [#allocation12], 0
    %15 = vsyncpa [#allocation4], 0
    // Predicated region
    $region2: #{tpu_custom_call.1} parent=1 // pred_check
      _
    $region3: #{tpu_custom_call.1} parent=1 // pred_check_branch
      %17 = sbr.rel (0) target = $region5
    $region4: #{tpu_custom_call.1} parent=1 // pred_region
      %s19 = ssub.s32 256, 256
      %20 = vsyncadd [#allocation3], %s19
      %s22 = sshll.u32 [#allocation2], 4
      %s23 = int_to_ptr.vmem [resolvable:$true] %s22
      %25 = dma.hbm_to_vmem [thread:$0]  %s0, 256, %s23, [#allocation3]
    $region5: #{tpu_custom_call.1} parent=1 // pred_fallthru
      _
    // Predicated region
    $region6: #{tpu_custom_call.1} parent=1 // pred_check
      _
    $region7: #{tpu_custom_call.1} parent=1 // pred_check_branch
      %27 = sbr.rel (0) target = $region9
    $region8: #{tpu_custom_call.1} parent=1 // pred_region
      %s29 = ssub.s32 16384, 16384
      %30 = vsyncadd [#allocation6], %s29
      %s31 = sshll.u32 [#allocation5], 4
      %s32 = int_to_ptr.vmem [resolvable:$true] %s31
      %37 = dma.hbm_to_vmem [thread:$0]  %s1, 16384, %s32, [#allocation6], 512, 512, 32
    $region9: #{tpu_custom_call.1} parent=1 // pred_fallthru
      _
    // Predicated region
    $region10: #{tpu_custom_call.1} parent=1 // pred_check
      _
    $region11: #{tpu_custom_call.1} parent=1 // pred_check_branch
      %39 = sbr.rel (0) target = $region13
    $region12: #{tpu_custom_call.1} parent=1 // pred_region
      %s41 = ssub.s32 64, 64
      %42 = vsyncadd [#allocation6], %s41
      %s44 = sshll.u32 [#allocation7], 4
      %s45 = int_to_ptr.vmem [resolvable:$true] %s44
      %47 = dma.hbm_to_vmem [thread:$0]  %s2, 64, %s45, [#allocation6]
    $region13: #{tpu_custom_call.1} parent=1 // pred_fallthru
      _
    // Predicated region
    $region14: #{tpu_custom_call.1} parent=1 // pred_check
      _
    $region15: #{tpu_custom_call.1} parent=1 // pred_check_branch
      %49 = sbr.rel (0) target = $region17
    $region16: #{tpu_custom_call.1} parent=1 // pred_region
      %s51 = ssub.s32 49152, 49152
      %52 = vsyncadd [#allocation9], %s51
      %s53 = sshll.u32 [#allocation8], 4
      %s54 = int_to_ptr.vmem [resolvable:$true] %s53
      %59 = dma.hbm_to_vmem [thread:$0]  %s3, 49152, %s54, [#allocation9], 768, 768, 48
    $region17: #{tpu_custom_call.1} parent=1 // pred_fallthru
      _
    // Predicated region
    $region18: #{tpu_custom_call.1} parent=1 // pred_check
      _
    $region19: #{tpu_custom_call.1} parent=1 // pred_check_branch
      %61 = sbr.rel (0) target = $region21
    $region20: #{tpu_custom_call.1} parent=1 // pred_region
      %s63 = ssub.s32 12288, 12288
      %64 = vsyncadd [#allocation9], %s63
      %s65 = sshll.u32 [#allocation10], 4
      %s66 = int_to_ptr.vmem [resolvable:$true] %s65
      %71 = dma.hbm_to_vmem [thread:$0]  %s4, 12288, %s66, [#allocation9], 128, 128, 8
    $region21: #{tpu_custom_call.1} parent=1 // pred_fallthru
      _
    // Predicated region
    $region22: #{tpu_custom_call.1} parent=1 // pred_check
      _
    $region23: #{tpu_custom_call.1} parent=1 // pred_check_branch
      %73 = sbr.rel (0) target = $region25
    $region24: #{tpu_custom_call.1} parent=1 // pred_region
      %s75 = ssub.s32 16, 16
      %76 = vsyncadd [#allocation12], %s75
      %s78 = sshll.u32 [#allocation11], 4
      %s79 = int_to_ptr.vmem [resolvable:$true] %s78
      %81 = dma.hbm_to_vmem [thread:$0]  %s5, 16, %s79, [#allocation12]
    $region25: #{tpu_custom_call.1} parent=1 // pred_fallthru
      _
    // Predicated region
    $region26: #{tpu_custom_call.1} parent=1 // pred_check
      _
    $region27: #{tpu_custom_call.1} parent=1 // pred_check_branch
      %83 = sbr.rel (0) target = $region29
    $region28: #{tpu_custom_call.1} parent=1 // pred_region
      %84 = dma.done [#allocation3], 256
    $region29: #{tpu_custom_call.1} parent=1 // pred_fallthru
      _
    // Predicated region
    $region30: #{tpu_custom_call.1} parent=1 // pred_check
      _
    $region31: #{tpu_custom_call.1} parent=1 // pred_check_branch
      %86 = sbr.rel (0) target = $region33
    $region32: #{tpu_custom_call.1} parent=1 // pred_region
      %87 = dma.done [#allocation6], 16384
    $region33: #{tpu_custom_call.1} parent=1 // pred_fallthru
      _
    // Predicated region
    $region34: #{tpu_custom_call.1} parent=1 // pred_check
      _
    $region35: #{tpu_custom_call.1} parent=1 // pred_check_branch
      %89 = sbr.rel (0) target = $region37
    $region36: #{tpu_custom_call.1} parent=1 // pred_region
      %90 = dma.done [#allocation6], 64
    $region37: #{tpu_custom_call.1} parent=1 // pred_fallthru
      _
    // Predicated region
    $region38: #{tpu_custom_call.1} parent=1 // pred_check
      _
    $region39: #{tpu_custom_call.1} parent=1 // pred_check_branch
      %92 = sbr.rel (0) target = $region41
    $region40: #{tpu_custom_call.1} parent=1 // pred_region
      %93 = dma.done [#allocation9], 49152
    $region41: #{tpu_custom_call.1} parent=1 // pred_fallthru
      _
    // Predicated region
    $region42: #{tpu_custom_call.1} parent=1 // pred_check
      _
    $region43: #{tpu_custom_call.1} parent=1 // pred_check_branch
      %95 = sbr.rel (0) target = $region45
    $region44: #{tpu_custom_call.1} parent=1 // pred_region
      %96 = dma.done [#allocation9], 12288
    $region45: #{tpu_custom_call.1} parent=1 // pred_fallthru
      _
    // Predicated region
    $region46: #{tpu_custom_call.1} parent=1 // pred_check
      _
    $region47: #{tpu_custom_call.1} parent=1 // pred_check_branch
      %98 = sbr.rel (0) target = $region49
    $region48: #{tpu_custom_call.1} parent=1 // pred_region
      %99 = dma.done [#allocation12], 16
    $region49: #{tpu_custom_call.1} parent=1 // pred_fallthru
      _
    %v100 = vld [vmem:[#allocation2] sm:$0xff]
    %v101 = vld [vmem:[#allocation2 + $0x8] sm:$0xff]
    %v102 = vmax.f32 %v100, 0.0
    %v103 = vmax.f32 %v101, 0.0
    %v104 = vld [vmem:[#allocation5] sm:$0xff]
    %v105 = vld [vmem:[#allocation5 + $0x8] sm:$0xff]
    %v106 = vld [vmem:[#allocation5 + $0x10] sm:$0xff]
    %v107 = vld [vmem:[#allocation5 + $0x18] sm:$0xff]
    %v108 = vld [vmem:[#allocation5 + $0x20] sm:$0xff]
    %v109 = vld [vmem:[#allocation5 + $0x28] sm:$0xff]
    %v110 = vld [vmem:[#allocation5 + $0x30] sm:$0xff]
    %v111 = vld [vmem:[#allocation5 + $0x38] sm:$0xff]
    %v112 = vld [vmem:[#allocation5 + $0x40] sm:$0xff]
    %v113 = vld [vmem:[#allocation5 + $0x48] sm:$0xff]
    %v114 = vld [vmem:[#allocation5 + $0x50] sm:$0xff]
    %v115 = vld [vmem:[#allocation5 + $0x58] sm:$0xff]
    %v116 = vld [vmem:[#allocation5 + $0x60] sm:$0xff]
    %v117 = vld [vmem:[#allocation5 + $0x68] sm:$0xff]
    %v118 = vld [vmem:[#allocation5 + $0x70] sm:$0xff]
    %v119 = vld [vmem:[#allocation5 + $0x78] sm:$0xff]
    %v120 = vld [vmem:[#allocation5 + $0x80] sm:$0xff]
    %v121 = vld [vmem:[#allocation5 + $0x88] sm:$0xff]
    %v122 = vld [vmem:[#allocation5 + $0x90] sm:$0xff]
    %v123 = vld [vmem:[#allocation5 + $0x98] sm:$0xff]
    %v124 = vld [vmem:[#allocation5 + $0xa0] sm:$0xff]
    %v125 = vld [vmem:[#allocation5 + $0xa8] sm:$0xff]
    %v126 = vld [vmem:[#allocation5 + $0xb0] sm:$0xff]
    %v127 = vld [vmem:[#allocation5 + $0xb8] sm:$0xff]
    %v128 = vld [vmem:[#allocation5 + $0xc0] sm:$0xff]
    %v129 = vld [vmem:[#allocation5 + $0xc8] sm:$0xff]
    %v130 = vld [vmem:[#allocation5 + $0xd0] sm:$0xff]
    %v131 = vld [vmem:[#allocation5 + $0xd8] sm:$0xff]
    %v132 = vld [vmem:[#allocation5 + $0xe0] sm:$0xff]
    %v133 = vld [vmem:[#allocation5 + $0xe8] sm:$0xff]
    %v134 = vld [vmem:[#allocation5 + $0xf0] sm:$0xff]
    %v135 = vld [vmem:[#allocation5 + $0xf8] sm:$0xff]
    %v136 = vld [vmem:[#allocation5 + $0x100] sm:$0xff]
    %v137 = vld [vmem:[#allocation5 + $0x108] sm:$0xff]
    %v138 = vld [vmem:[#allocation5 + $0x110] sm:$0xff]
    %v139 = vld [vmem:[#allocation5 + $0x118] sm:$0xff]
    %v140 = vld [vmem:[#allocation5 + $0x120] sm:$0xff]
    %v141 = vld [vmem:[#allocation5 + $0x128] sm:$0xff]
    %v142 = vld [vmem:[#allocation5 + $0x130] sm:$0xff]
    %v143 = vld [vmem:[#allocation5 + $0x138] sm:$0xff]
    %v144 = vld [vmem:[#allocation5 + $0x140] sm:$0xff]
    %v145 = vld [vmem:[#allocation5 + $0x148] sm:$0xff]
    %v146 = vld [vmem:[#allocation5 + $0x150] sm:$0xff]
    %v147 = vld [vmem:[#allocation5 + $0x158] sm:$0xff]
    %v148 = vld [vmem:[#allocation5 + $0x160] sm:$0xff]
    %v149 = vld [vmem:[#allocation5 + $0x168] sm:$0xff]
    %v150 = vld [vmem:[#allocation5 + $0x170] sm:$0xff]
    %v151 = vld [vmem:[#allocation5 + $0x178] sm:$0xff]
    %v152 = vld [vmem:[#allocation5 + $0x180] sm:$0xff]
    %v153 = vld [vmem:[#allocation5 + $0x188] sm:$0xff]
    %v154 = vld [vmem:[#allocation5 + $0x190] sm:$0xff]
    %v155 = vld [vmem:[#allocation5 + $0x198] sm:$0xff]
    %v156 = vld [vmem:[#allocation5 + $0x1a0] sm:$0xff]
    %v157 = vld [vmem:[#allocation5 + $0x1a8] sm:$0xff]
    %v158 = vld [vmem:[#allocation5 + $0x1b0] sm:$0xff]
    %v159 = vld [vmem:[#allocation5 + $0x1b8] sm:$0xff]
    %v160 = vld [vmem:[#allocation5 + $0x1c0] sm:$0xff]
    %v161 = vld [vmem:[#allocation5 + $0x1c8] sm:$0xff]
    %v162 = vld [vmem:[#allocation5 + $0x1d0] sm:$0xff]
    %v163 = vld [vmem:[#allocation5 + $0x1d8] sm:$0xff]
    %v164 = vld [vmem:[#allocation5 + $0x1e0] sm:$0xff]
    %v165 = vld [vmem:[#allocation5 + $0x1e8] sm:$0xff]
    %v166 = vld [vmem:[#allocation5 + $0x1f0] sm:$0xff]
    %v167 = vld [vmem:[#allocation5 + $0x1f8] sm:$0xff]
    %v168 = vld [vmem:[#allocation5 + $0x200] sm:$0xff]
    %v169 = vld [vmem:[#allocation5 + $0x208] sm:$0xff]
    %v170 = vld [vmem:[#allocation5 + $0x210] sm:$0xff]
    %v171 = vld [vmem:[#allocation5 + $0x218] sm:$0xff]
    %v172 = vld [vmem:[#allocation5 + $0x220] sm:$0xff]
    %v173 = vld [vmem:[#allocation5 + $0x228] sm:$0xff]
    %v174 = vld [vmem:[#allocation5 + $0x230] sm:$0xff]
    %v175 = vld [vmem:[#allocation5 + $0x238] sm:$0xff]
    %v176 = vld [vmem:[#allocation5 + $0x240] sm:$0xff]
    %v177 = vld [vmem:[#allocation5 + $0x248] sm:$0xff]
    %v178 = vld [vmem:[#allocation5 + $0x250] sm:$0xff]
    %v179 = vld [vmem:[#allocation5 + $0x258] sm:$0xff]
    %v180 = vld [vmem:[#allocation5 + $0x260] sm:$0xff]
    %v181 = vld [vmem:[#allocation5 + $0x268] sm:$0xff]
    %v182 = vld [vmem:[#allocation5 + $0x270] sm:$0xff]
    %v183 = vld [vmem:[#allocation5 + $0x278] sm:$0xff]
    %v184 = vld [vmem:[#allocation5 + $0x280] sm:$0xff]
    %v185 = vld [vmem:[#allocation5 + $0x288] sm:$0xff]
    %v186 = vld [vmem:[#allocation5 + $0x290] sm:$0xff]
    %v187 = vld [vmem:[#allocation5 + $0x298] sm:$0xff]
    %v188 = vld [vmem:[#allocation5 + $0x2a0] sm:$0xff]
    %v189 = vld [vmem:[#allocation5 + $0x2a8] sm:$0xff]
    %v190 = vld [vmem:[#allocation5 + $0x2b0] sm:$0xff]
    %v191 = vld [vmem:[#allocation5 + $0x2b8] sm:$0xff]
    %v192 = vld [vmem:[#allocation5 + $0x2c0] sm:$0xff]
    %v193 = vld [vmem:[#allocation5 + $0x2c8] sm:$0xff]
    %v194 = vld [vmem:[#allocation5 + $0x2d0] sm:$0xff]
    %v195 = vld [vmem:[#allocation5 + $0x2d8] sm:$0xff]
    %v196 = vld [vmem:[#allocation5 + $0x2e0] sm:$0xff]
    %v197 = vld [vmem:[#allocation5 + $0x2e8] sm:$0xff]
    %v198 = vld [vmem:[#allocation5 + $0x2f0] sm:$0xff]
    %v199 = vld [vmem:[#allocation5 + $0x2f8] sm:$0xff]
    %v200 = vld [vmem:[#allocation5 + $0x300] sm:$0xff]
    %v201 = vld [vmem:[#allocation5 + $0x308] sm:$0xff]
    %v202 = vld [vmem:[#allocation5 + $0x310] sm:$0xff]
    %v203 = vld [vmem:[#allocation5 + $0x318] sm:$0xff]
    %v204 = vld [vmem:[#allocation5 + $0x320] sm:$0xff]
    %v205 = vld [vmem:[#allocation5 + $0x328] sm:$0xff]
    %v206 = vld [vmem:[#allocation5 + $0x330] sm:$0xff]
    %v207 = vld [vmem:[#allocation5 + $0x338] sm:$0xff]
    %v208 = vld [vmem:[#allocation5 + $0x340] sm:$0xff]
    %v209 = vld [vmem:[#allocation5 + $0x348] sm:$0xff]
    %v210 = vld [vmem:[#allocation5 + $0x350] sm:$0xff]
    %v211 = vld [vmem:[#allocation5 + $0x358] sm:$0xff]
    %v212 = vld [vmem:[#allocation5 + $0x360] sm:$0xff]
    %v213 = vld [vmem:[#allocation5 + $0x368] sm:$0xff]
    %v214 = vld [vmem:[#allocation5 + $0x370] sm:$0xff]
    %v215 = vld [vmem:[#allocation5 + $0x378] sm:$0xff]
    %v216 = vld [vmem:[#allocation5 + $0x380] sm:$0xff]
    %v217 = vld [vmem:[#allocation5 + $0x388] sm:$0xff]
    %v218 = vld [vmem:[#allocation5 + $0x390] sm:$0xff]
    %v219 = vld [vmem:[#allocation5 + $0x398] sm:$0xff]
    %v220 = vld [vmem:[#allocation5 + $0x3a0] sm:$0xff]
    %v221 = vld [vmem:[#allocation5 + $0x3a8] sm:$0xff]
    %v222 = vld [vmem:[#allocation5 + $0x3b0] sm:$0xff]
    %v223 = vld [vmem:[#allocation5 + $0x3b8] sm:$0xff]
    %v224 = vld [vmem:[#allocation5 + $0x3c0] sm:$0xff]
    %v225 = vld [vmem:[#allocation5 + $0x3c8] sm:$0xff]
    %v226 = vld [vmem:[#allocation5 + $0x3d0] sm:$0xff]
    %v227 = vld [vmem:[#allocation5 + $0x3d8] sm:$0xff]
    %v228 = vld [vmem:[#allocation5 + $0x3e0] sm:$0xff]
    %v229 = vld [vmem:[#allocation5 + $0x3e8] sm:$0xff]
    %v230 = vld [vmem:[#allocation5 + $0x3f0] sm:$0xff]
    %v231 = vld [vmem:[#allocation5 + $0x3f8] sm:$0xff]
    %v232 = vld [vmem:[#allocation7] sm:$0xf]
    %v234 = vlaneseq
    %v235 = vshrl.u32 %v234, 7
    %v236 = vsub.s32 0, %v235
    %v237 = vrot.slane %v232, %v236
    %v238 = vlaneseq
    %v239 = vshrl.u32 %v238, 7
    %v240 = vsub.s32 1, %v239
    %v241 = vrot.slane %v232, %v240
    %v242 = vlaneseq
    %v243 = vshrl.u32 %v242, 7
    %v244 = vsub.s32 2, %v243
    %v245 = vrot.slane %v232, %v244
    %v246 = vlaneseq
    %v247 = vshrl.u32 %v246, 7
    %v248 = vsub.s32 3, %v247
    %v249 = vrot.slane %v232, %v248
    %254 = vmatprep.subr.mxu0 %v105
    %255 = vmatpush1.msra.mxu0 %v104
    %256 = vmatprep.subr.mxu0 %v109
    %257 = vmatpush1.msra.mxu0 %v108
    %258 = vmatprep.subr.mxu0 %v113
    %259 = vmatpush1.msra.mxu0 %v112
    %260 = vmatprep.subr.mxu0 %v117
    %261 = vmatpush1.msra.mxu0 %v116
    %262 = vmatprep.subr.mxu0 %v121
    %263 = vmatpush1.msra.mxu0 %v120
    %264 = vmatprep.subr.mxu0 %v125
    %265 = vmatpush1.msra.mxu0 %v124
    %266 = vmatprep.subr.mxu0 %v129
    %267 = vmatpush1.msra.mxu0 %v128
    %268 = vmatprep.subr.mxu0 %v133
    %269 = vmatpush1.msra.mxu0 %v132
    %270 = vmatprep.subr.mxu0 %v137
    %271 = vmatpush1.msra.mxu0 %v136
    %272 = vmatprep.subr.mxu0 %v141
    %273 = vmatpush1.msra.mxu0 %v140
    %274 = vmatprep.subr.mxu0 %v145
    %275 = vmatpush1.msra.mxu0 %v144
    %276 = vmatprep.subr.mxu0 %v149
    %277 = vmatpush1.msra.mxu0 %v148
    %278 = vmatprep.subr.mxu0 %v153
    %279 = vmatpush1.msra.mxu0 %v152
    %280 = vmatprep.subr.mxu0 %v157
    %281 = vmatpush1.msra.mxu0 %v156
    %282 = vmatprep.subr.mxu0 %v161
    %283 = vmatpush1.msra.mxu0 %v160
    %284 = vmatprep.subr.mxu0 %v165
    %285 = vmatpush1.msra.mxu0 %v164
    %286 = vmatprep.subr.mxu0 %v169
    %287 = vmatpush1.msra.mxu0 %v168
    %288 = vmatprep.subr.mxu0 %v173
    %289 = vmatpush1.msra.mxu0 %v172
    %290 = vmatprep.subr.mxu0 %v177
    %291 = vmatpush1.msra.mxu0 %v176
    %292 = vmatprep.subr.mxu0 %v181
    %293 = vmatpush1.msra.mxu0 %v180
    %294 = vmatprep.subr.mxu0 %v185
    %295 = vmatpush1.msra.mxu0 %v184
    %296 = vmatprep.subr.mxu0 %v189
    %297 = vmatpush1.msra.mxu0 %v188
    %298 = vmatprep.subr.mxu0 %v193
    %299 = vmatpush1.msra.mxu0 %v192
    %300 = vmatprep.subr.mxu0 %v197
    %301 = vmatpush1.msra.mxu0 %v196
    %302 = vmatprep.subr.mxu0 %v201
    %303 = vmatpush1.msra.mxu0 %v200
    %304 = vmatprep.subr.mxu0 %v205
    %305 = vmatpush1.msra.mxu0 %v204
    %306 = vmatprep.subr.mxu0 %v209
    %307 = vmatpush1.msra.mxu0 %v208
    %308 = vmatprep.subr.mxu0 %v213
    %309 = vmatpush1.msra.mxu0 %v212
    %310 = vmatprep.subr.mxu0 %v217
    %311 = vmatpush1.msra.mxu0 %v216
    %312 = vmatprep.subr.mxu0 %v221
    %313 = vmatpush1.msra.mxu0 %v220
    %314 = vmatprep.subr.mxu0 %v225
    %315 = vmatpush1.msra.mxu0 %v224
    %316 = vmatprep.subr.mxu0 %v229
    %317 = vmatpush1.msra.mxu0 %v228
    %318 = vmatprep.mubr.f32.mxu0 %v103
    %319 = vmatmul.mubr.f32.gmra.mrb[0].mxu0 %v102
    %v320 = vpop.f32.mrb[0].mxu0
    %v321 = vadd.f32 %v237, %v320
    %v322 = vpop.f32.mrb[0].mxu0
    %v323 = vadd.f32 %v241, %v322
    %324 = vdwg.mxu0
    %325 = vmatprep.subr.mxu0 %v107
    %326 = vmatpush1.msra.mxu0 %v106
    %327 = vmatprep.subr.mxu0 %v111
    %328 = vmatpush1.msra.mxu0 %v110
    %329 = vmatprep.subr.mxu0 %v115
    %330 = vmatpush1.msra.mxu0 %v114
    %331 = vmatprep.subr.mxu0 %v119
    %332 = vmatpush1.msra.mxu0 %v118
    %333 = vmatprep.subr.mxu0 %v123
    %334 = vmatpush1.msra.mxu0 %v122
    %335 = vmatprep.subr.mxu0 %v127
    %336 = vmatpush1.msra.mxu0 %v126
    %337 = vmatprep.subr.mxu0 %v131
    %338 = vmatpush1.msra.mxu0 %v130
    %339 = vmatprep.subr.mxu0 %v135
    %340 = vmatpush1.msra.mxu0 %v134
    %341 = vmatprep.subr.mxu0 %v139
    %342 = vmatpush1.msra.mxu0 %v138
    %343 = vmatprep.subr.mxu0 %v143
    %344 = vmatpush1.msra.mxu0 %v142
    %345 = vmatprep.subr.mxu0 %v147
    %346 = vmatpush1.msra.mxu0 %v146
    %347 = vmatprep.subr.mxu0 %v151
    %348 = vmatpush1.msra.mxu0 %v150
    %349 = vmatprep.subr.mxu0 %v155
    %350 = vmatpush1.msra.mxu0 %v154
    %351 = vmatprep.subr.mxu0 %v159
    %352 = vmatpush1.msra.mxu0 %v158
    %353 = vmatprep.subr.mxu0 %v163
    %354 = vmatpush1.msra.mxu0 %v162
    %355 = vmatprep.subr.mxu0 %v167
    %356 = vmatpush1.msra.mxu0 %v166
    %357 = vmatprep.subr.mxu0 %v171
    %358 = vmatpush1.msra.mxu0 %v170
    %359 = vmatprep.subr.mxu0 %v175
    %360 = vmatpush1.msra.mxu0 %v174
    %361 = vmatprep.subr.mxu0 %v179
    %362 = vmatpush1.msra.mxu0 %v178
    %363 = vmatprep.subr.mxu0 %v183
    %364 = vmatpush1.msra.mxu0 %v182
    %365 = vmatprep.subr.mxu0 %v187
    %366 = vmatpush1.msra.mxu0 %v186
    %367 = vmatprep.subr.mxu0 %v191
    %368 = vmatpush1.msra.mxu0 %v190
    %369 = vmatprep.subr.mxu0 %v195
    %370 = vmatpush1.msra.mxu0 %v194
    %371 = vmatprep.subr.mxu0 %v199
    %372 = vmatpush1.msra.mxu0 %v198
    %373 = vmatprep.subr.mxu0 %v203
    %374 = vmatpush1.msra.mxu0 %v202
    %375 = vmatprep.subr.mxu0 %v207
    %376 = vmatpush1.msra.mxu0 %v206
    %377 = vmatprep.subr.mxu0 %v211
    %378 = vmatpush1.msra.mxu0 %v210
    %379 = vmatprep.subr.mxu0 %v215
    %380 = vmatpush1.msra.mxu0 %v214
    %381 = vmatprep.subr.mxu0 %v219
    %382 = vmatpush1.msra.mxu0 %v218
    %383 = vmatprep.subr.mxu0 %v223
    %384 = vmatpush1.msra.mxu0 %v222
    %385 = vmatprep.subr.mxu0 %v227
    %386 = vmatpush1.msra.mxu0 %v226
    %387 = vmatprep.subr.mxu0 %v231
    %388 = vmatpush1.msra.mxu0 %v230
    %389 = vmatprep.mubr.f32.mxu0 %v103
    %390 = vmatmul.mubr.f32.gmra.mrb[0].mxu0 %v102
    %v391 = vpop.f32.mrb[0].mxu0
    %v392 = vadd.f32 %v245, %v391
    %v393 = vpop.f32.mrb[0].mxu0
    %v394 = vadd.f32 %v249, %v393
    %395 = vdwg.mxu0
    %v396 = vmax.f32 %v321, 0.0
    %v397 = vmax.f32 %v323, 0.0
    %v398 = vmax.f32 %v392, 0.0
    %v399 = vmax.f32 %v394, 0.0
    %v400 = vld [vmem:[#allocation8] sm:$0xff]
    %v401 = vld [vmem:[#allocation8 + $0x8] sm:$0xff]
    %v402 = vld [vmem:[#allocation8 + $0x10] sm:$0xff]
    %v403 = vld [vmem:[#allocation8 + $0x18] sm:$0xff]
    %v404 = vld [vmem:[#allocation8 + $0x20] sm:$0xff]
    %v405 = vld [vmem:[#allocation8 + $0x28] sm:$0xff]
    %v406 = vld [vmem:[#allocation8 + $0x30] sm:$0xff]
    %v407 = vld [vmem:[#allocation8 + $0x38] sm:$0xff]
    %v408 = vld [vmem:[#allocation8 + $0x40] sm:$0xff]
    %v409 = vld [vmem:[#allocation8 + $0x48] sm:$0xff]
    %v410 = vld [vmem:[#allocation8 + $0x50] sm:$0xff]
    %v411 = vld [vmem:[#allocation8 + $0x58] sm:$0xff]
    %v412 = vld [vmem:[#allocation8 + $0x60] sm:$0xff]
    %v413 = vld [vmem:[#allocation8 + $0x68] sm:$0xff]
    %v414 = vld [vmem:[#allocation8 + $0x70] sm:$0xff]
    %v415 = vld [vmem:[#allocation8 + $0x78] sm:$0xff]
    %v416 = vld [vmem:[#allocation8 + $0x80] sm:$0xff]
    %v417 = vld [vmem:[#allocation8 + $0x88] sm:$0xff]
    %v418 = vld [vmem:[#allocation8 + $0x90] sm:$0xff]
    %v419 = vld [vmem:[#allocation8 + $0x98] sm:$0xff]
    %v420 = vld [vmem:[#allocation8 + $0xa0] sm:$0xff]
    %v421 = vld [vmem:[#allocation8 + $0xa8] sm:$0xff]
    %v422 = vld [vmem:[#allocation8 + $0xb0] sm:$0xff]
    %v423 = vld [vmem:[#allocation8 + $0xb8] sm:$0xff]
    %v424 = vld [vmem:[#allocation8 + $0xc0] sm:$0xff]
    %v425 = vld [vmem:[#allocation8 + $0xc8] sm:$0xff]
    %v426 = vld [vmem:[#allocation8 + $0xd0] sm:$0xff]
    %v427 = vld [vmem:[#allocation8 + $0xd8] sm:$0xff]
    %v428 = vld [vmem:[#allocation8 + $0xe0] sm:$0xff]
    %v429 = vld [vmem:[#allocation8 + $0xe8] sm:$0xff]
    %v430 = vld [vmem:[#allocation8 + $0xf0] sm:$0xff]
    %v431 = vld [vmem:[#allocation8 + $0xf8] sm:$0xff]
    %v432 = vld [vmem:[#allocation8 + $0x100] sm:$0xff]
    %v433 = vld [vmem:[#allocation8 + $0x108] sm:$0xff]
    %v434 = vld [vmem:[#allocation8 + $0x110] sm:$0xff]
    %v435 = vld [vmem:[#allocation8 + $0x118] sm:$0xff]
    %v436 = vld [vmem:[#allocation8 + $0x120] sm:$0xff]
    %v437 = vld [vmem:[#allocation8 + $0x128] sm:$0xff]
    %v438 = vld [vmem:[#allocation8 + $0x130] sm:$0xff]
    %v439 = vld [vmem:[#allocation8 + $0x138] sm:$0xff]
    %v440 = vld [vmem:[#allocation8 + $0x140] sm:$0xff]
    %v441 = vld [vmem:[#allocation8 + $0x148] sm:$0xff]
    %v442 = vld [vmem:[#allocation8 + $0x150] sm:$0xff]
    %v443 = vld [vmem:[#allocation8 + $0x158] sm:$0xff]
    %v444 = vld [vmem:[#allocation8 + $0x160] sm:$0xff]
    %v445 = vld [vmem:[#allocation8 + $0x168] sm:$0xff]
    %v446 = vld [vmem:[#allocation8 + $0x170] sm:$0xff]
    %v447 = vld [vmem:[#allocation8 + $0x178] sm:$0xff]
    %v448 = vld [vmem:[#allocation8 + $0x180] sm:$0xff]
    %v449 = vld [vmem:[#allocation8 + $0x188] sm:$0xff]
    %v450 = vld [vmem:[#allocation8 + $0x190] sm:$0xff]
    %v451 = vld [vmem:[#allocation8 + $0x198] sm:$0xff]
    %v452 = vld [vmem:[#allocation8 + $0x1a0] sm:$0xff]
    %v453 = vld [vmem:[#allocation8 + $0x1a8] sm:$0xff]
    %v454 = vld [vmem:[#allocation8 + $0x1b0] sm:$0xff]
    %v455 = vld [vmem:[#allocation8 + $0x1b8] sm:$0xff]
    %v456 = vld [vmem:[#allocation8 + $0x1c0] sm:$0xff]
    %v457 = vld [vmem:[#allocation8 + $0x1c8] sm:$0xff]
    %v458 = vld [vmem:[#allocation8 + $0x1d0] sm:$0xff]
    %v459 = vld [vmem:[#allocation8 + $0x1d8] sm:$0xff]
    %v460 = vld [vmem:[#allocation8 + $0x1e0] sm:$0xff]
    %v461 = vld [vmem:[#allocation8 + $0x1e8] sm:$0xff]
    %v462 = vld [vmem:[#allocation8 + $0x1f0] sm:$0xff]
    %v463 = vld [vmem:[#allocation8 + $0x1f8] sm:$0xff]
    %v464 = vld [vmem:[#allocation8 + $0x200] sm:$0xff]
    %v465 = vld [vmem:[#allocation8 + $0x208] sm:$0xff]
    %v466 = vld [vmem:[#allocation8 + $0x210] sm:$0xff]
    %v467 = vld [vmem:[#allocation8 + $0x218] sm:$0xff]
    %v468 = vld [vmem:[#allocation8 + $0x220] sm:$0xff]
    %v469 = vld [vmem:[#allocation8 + $0x228] sm:$0xff]
    %v470 = vld [vmem:[#allocation8 + $0x230] sm:$0xff]
    %v471 = vld [vmem:[#allocation8 + $0x238] sm:$0xff]
    %v472 = vld [vmem:[#allocation8 + $0x240] sm:$0xff]
    %v473 = vld [vmem:[#allocation8 + $0x248] sm:$0xff]
    %v474 = vld [vmem:[#allocation8 + $0x250] sm:$0xff]
    %v475 = vld [vmem:[#allocation8 + $0x258] sm:$0xff]
    %v476 = vld [vmem:[#allocation8 + $0x260] sm:$0xff]
    %v477 = vld [vmem:[#allocation8 + $0x268] sm:$0xff]
    %v478 = vld [vmem:[#allocation8 + $0x270] sm:$0xff]
    %v479 = vld [vmem:[#allocation8 + $0x278] sm:$0xff]
    %v480 = vld [vmem:[#allocation8 + $0x280] sm:$0xff]
    %v481 = vld [vmem:[#allocation8 + $0x288] sm:$0xff]
    %v482 = vld [vmem:[#allocation8 + $0x290] sm:$0xff]
    %v483 = vld [vmem:[#allocation8 + $0x298] sm:$0xff]
    %v484 = vld [vmem:[#allocation8 + $0x2a0] sm:$0xff]
    %v485 = vld [vmem:[#allocation8 + $0x2a8] sm:$0xff]
    %v486 = vld [vmem:[#allocation8 + $0x2b0] sm:$0xff]
    %v487 = vld [vmem:[#allocation8 + $0x2b8] sm:$0xff]
    %v488 = vld [vmem:[#allocation8 + $0x2c0] sm:$0xff]
    %v489 = vld [vmem:[#allocation8 + $0x2c8] sm:$0xff]
    %v490 = vld [vmem:[#allocation8 + $0x2d0] sm:$0xff]
    %v491 = vld [vmem:[#allocation8 + $0x2d8] sm:$0xff]
    %v492 = vld [vmem:[#allocation8 + $0x2e0] sm:$0xff]
    %v493 = vld [vmem:[#allocation8 + $0x2e8] sm:$0xff]
    %v494 = vld [vmem:[#allocation8 + $0x2f0] sm:$0xff]
    %v495 = vld [vmem:[#allocation8 + $0x2f8] sm:$0xff]
    %v496 = vld [vmem:[#allocation8 + $0x300] sm:$0xff]
    %v497 = vld [vmem:[#allocation8 + $0x308] sm:$0xff]
    %v498 = vld [vmem:[#allocation8 + $0x310] sm:$0xff]
    %v499 = vld [vmem:[#allocation8 + $0x318] sm:$0xff]
    %v500 = vld [vmem:[#allocation8 + $0x320] sm:$0xff]
    %v501 = vld [vmem:[#allocation8 + $0x328] sm:$0xff]
    %v502 = vld [vmem:[#allocation8 + $0x330] sm:$0xff]
    %v503 = vld [vmem:[#allocation8 + $0x338] sm:$0xff]
    %v504 = vld [vmem:[#allocation8 + $0x340] sm:$0xff]
    %v505 = vld [vmem:[#allocation8 + $0x348] sm:$0xff]
    %v506 = vld [vmem:[#allocation8 + $0x350] sm:$0xff]
    %v507 = vld [vmem:[#allocation8 + $0x358] sm:$0xff]
    %v508 = vld [vmem:[#allocation8 + $0x360] sm:$0xff]
    %v509 = vld [vmem:[#allocation8 + $0x368] sm:$0xff]
    %v510 = vld [vmem:[#allocation8 + $0x370] sm:$0xff]
    %v511 = vld [vmem:[#allocation8 + $0x378] sm:$0xff]
    %v512 = vld [vmem:[#allocation8 + $0x380] sm:$0xff]
    %v513 = vld [vmem:[#allocation8 + $0x388] sm:$0xff]
    %v514 = vld [vmem:[#allocation8 + $0x390] sm:$0xff]
    %v515 = vld [vmem:[#allocation8 + $0x398] sm:$0xff]
    %v516 = vld [vmem:[#allocation8 + $0x3a0] sm:$0xff]
    %v517 = vld [vmem:[#allocation8 + $0x3a8] sm:$0xff]
    %v518 = vld [vmem:[#allocation8 + $0x3b0] sm:$0xff]
    %v519 = vld [vmem:[#allocation8 + $0x3b8] sm:$0xff]
    %v520 = vld [vmem:[#allocation8 + $0x3c0] sm:$0xff]
    %v521 = vld [vmem:[#allocation8 + $0x3c8] sm:$0xff]
    %v522 = vld [vmem:[#allocation8 + $0x3d0] sm:$0xff]
    %v523 = vld [vmem:[#allocation8 + $0x3d8] sm:$0xff]
    %v524 = vld [vmem:[#allocation8 + $0x3e0] sm:$0xff]
    %v525 = vld [vmem:[#allocation8 + $0x3e8] sm:$0xff]
    %v526 = vld [vmem:[#allocation8 + $0x3f0] sm:$0xff]
    %v527 = vld [vmem:[#allocation8 + $0x3f8] sm:$0xff]
    %v528 = vld [vmem:[#allocation8 + $0x400] sm:$0xff]
    %v529 = vld [vmem:[#allocation8 + $0x408] sm:$0xff]
    %v530 = vld [vmem:[#allocation8 + $0x410] sm:$0xff]
    %v531 = vld [vmem:[#allocation8 + $0x418] sm:$0xff]
    %v532 = vld [vmem:[#allocation8 + $0x420] sm:$0xff]
    %v533 = vld [vmem:[#allocation8 + $0x428] sm:$0xff]
    %v534 = vld [vmem:[#allocation8 + $0x430] sm:$0xff]
    %v535 = vld [vmem:[#allocation8 + $0x438] sm:$0xff]
    %v536 = vld [vmem:[#allocation8 + $0x440] sm:$0xff]
    %v537 = vld [vmem:[#allocation8 + $0x448] sm:$0xff]
    %v538 = vld [vmem:[#allocation8 + $0x450] sm:$0xff]
    %v539 = vld [vmem:[#allocation8 + $0x458] sm:$0xff]
    %v540 = vld [vmem:[#allocation8 + $0x460] sm:$0xff]
    %v541 = vld [vmem:[#allocation8 + $0x468] sm:$0xff]
    %v542 = vld [vmem:[#allocation8 + $0x470] sm:$0xff]
    %v543 = vld [vmem:[#allocation8 + $0x478] sm:$0xff]
    %v544 = vld [vmem:[#allocation8 + $0x480] sm:$0xff]
    %v545 = vld [vmem:[#allocation8 + $0x488] sm:$0xff]
    %v546 = vld [vmem:[#allocation8 + $0x490] sm:$0xff]
    %v547 = vld [vmem:[#allocation8 + $0x498] sm:$0xff]
    %v548 = vld [vmem:[#allocation8 + $0x4a0] sm:$0xff]
    %v549 = vld [vmem:[#allocation8 + $0x4a8] sm:$0xff]
    %v550 = vld [vmem:[#allocation8 + $0x4b0] sm:$0xff]
    %v551 = vld [vmem:[#allocation8 + $0x4b8] sm:$0xff]
    %v552 = vld [vmem:[#allocation8 + $0x4c0] sm:$0xff]
    %v553 = vld [vmem:[#allocation8 + $0x4c8] sm:$0xff]
    %v554 = vld [vmem:[#allocation8 + $0x4d0] sm:$0xff]
    %v555 = vld [vmem:[#allocation8 + $0x4d8] sm:$0xff]
    %v556 = vld [vmem:[#allocation8 + $0x4e0] sm:$0xff]
    %v557 = vld [vmem:[#allocation8 + $0x4e8] sm:$0xff]
    %v558 = vld [vmem:[#allocation8 + $0x4f0] sm:$0xff]
    %v559 = vld [vmem:[#allocation8 + $0x4f8] sm:$0xff]
    %v560 = vld [vmem:[#allocation8 + $0x500] sm:$0xff]
    %v561 = vld [vmem:[#allocation8 + $0x508] sm:$0xff]
    %v562 = vld [vmem:[#allocation8 + $0x510] sm:$0xff]
    %v563 = vld [vmem:[#allocation8 + $0x518] sm:$0xff]
    %v564 = vld [vmem:[#allocation8 + $0x520] sm:$0xff]
    %v565 = vld [vmem:[#allocation8 + $0x528] sm:$0xff]
    %v566 = vld [vmem:[#allocation8 + $0x530] sm:$0xff]
    %v567 = vld [vmem:[#allocation8 + $0x538] sm:$0xff]
    %v568 = vld [vmem:[#allocation8 + $0x540] sm:$0xff]
    %v569 = vld [vmem:[#allocation8 + $0x548] sm:$0xff]
    %v570 = vld [vmem:[#allocation8 + $0x550] sm:$0xff]
    %v571 = vld [vmem:[#allocation8 + $0x558] sm:$0xff]
    %v572 = vld [vmem:[#allocation8 + $0x560] sm:$0xff]
    %v573 = vld [vmem:[#allocation8 + $0x568] sm:$0xff]
    %v574 = vld [vmem:[#allocation8 + $0x570] sm:$0xff]
    %v575 = vld [vmem:[#allocation8 + $0x578] sm:$0xff]
    %v576 = vld [vmem:[#allocation8 + $0x580] sm:$0xff]
    %v577 = vld [vmem:[#allocation8 + $0x588] sm:$0xff]
    %v578 = vld [vmem:[#allocation8 + $0x590] sm:$0xff]
    %v579 = vld [vmem:[#allocation8 + $0x598] sm:$0xff]
    %v580 = vld [vmem:[#allocation8 + $0x5a0] sm:$0xff]
    %v581 = vld [vmem:[#allocation8 + $0x5a8] sm:$0xff]
    %v582 = vld [vmem:[#allocation8 + $0x5b0] sm:$0xff]
    %v583 = vld [vmem:[#allocation8 + $0x5b8] sm:$0xff]
    %v584 = vld [vmem:[#allocation8 + $0x5c0] sm:$0xff]
    %v585 = vld [vmem:[#allocation8 + $0x5c8] sm:$0xff]
    %v586 = vld [vmem:[#allocation8 + $0x5d0] sm:$0xff]
    %v587 = vld [vmem:[#allocation8 + $0x5d8] sm:$0xff]
    %v588 = vld [vmem:[#allocation8 + $0x5e0] sm:$0xff]
    %v589 = vld [vmem:[#allocation8 + $0x5e8] sm:$0xff]
    %v590 = vld [vmem:[#allocation8 + $0x5f0] sm:$0xff]
    %v591 = vld [vmem:[#allocation8 + $0x5f8] sm:$0xff]
    %v592 = vld [vmem:[#allocation8 + $0x600] sm:$0xff]
    %v593 = vld [vmem:[#allocation8 + $0x608] sm:$0xff]
    %v594 = vld [vmem:[#allocation8 + $0x610] sm:$0xff]
    %v595 = vld [vmem:[#allocation8 + $0x618] sm:$0xff]
    %v596 = vld [vmem:[#allocation8 + $0x620] sm:$0xff]
    %v597 = vld [vmem:[#allocation8 + $0x628] sm:$0xff]
    %v598 = vld [vmem:[#allocation8 + $0x630] sm:$0xff]
    %v599 = vld [vmem:[#allocation8 + $0x638] sm:$0xff]
    %v600 = vld [vmem:[#allocation8 + $0x640] sm:$0xff]
    %v601 = vld [vmem:[#allocation8 + $0x648] sm:$0xff]
    %v602 = vld [vmem:[#allocation8 + $0x650] sm:$0xff]
    %v603 = vld [vmem:[#allocation8 + $0x658] sm:$0xff]
    %v604 = vld [vmem:[#allocation8 + $0x660] sm:$0xff]
    %v605 = vld [vmem:[#allocation8 + $0x668] sm:$0xff]
    %v606 = vld [vmem:[#allocation8 + $0x670] sm:$0xff]
    %v607 = vld [vmem:[#allocation8 + $0x678] sm:$0xff]
    %v608 = vld [vmem:[#allocation8 + $0x680] sm:$0xff]
    %v609 = vld [vmem:[#allocation8 + $0x688] sm:$0xff]
    %v610 = vld [vmem:[#allocation8 + $0x690] sm:$0xff]
    %v611 = vld [vmem:[#allocation8 + $0x698] sm:$0xff]
    %v612 = vld [vmem:[#allocation8 + $0x6a0] sm:$0xff]
    %v613 = vld [vmem:[#allocation8 + $0x6a8] sm:$0xff]
    %v614 = vld [vmem:[#allocation8 + $0x6b0] sm:$0xff]
    %v615 = vld [vmem:[#allocation8 + $0x6b8] sm:$0xff]
    %v616 = vld [vmem:[#allocation8 + $0x6c0] sm:$0xff]
    %v617 = vld [vmem:[#allocation8 + $0x6c8] sm:$0xff]
    %v618 = vld [vmem:[#allocation8 + $0x6d0] sm:$0xff]
    %v619 = vld [vmem:[#allocation8 + $0x6d8] sm:$0xff]
    %v620 = vld [vmem:[#allocation8 + $0x6e0] sm:$0xff]
    %v621 = vld [vmem:[#allocation8 + $0x6e8] sm:$0xff]
    %v622 = vld [vmem:[#allocation8 + $0x6f0] sm:$0xff]
    %v623 = vld [vmem:[#allocation8 + $0x6f8] sm:$0xff]
    %v624 = vld [vmem:[#allocation8 + $0x700] sm:$0xff]
    %v625 = vld [vmem:[#allocation8 + $0x708] sm:$0xff]
    %v626 = vld [vmem:[#allocation8 + $0x710] sm:$0xff]
    %v627 = vld [vmem:[#allocation8 + $0x718] sm:$0xff]
    %v628 = vld [vmem:[#allocation8 + $0x720] sm:$0xff]
    %v629 = vld [vmem:[#allocation8 + $0x728] sm:$0xff]
    %v630 = vld [vmem:[#allocation8 + $0x730] sm:$0xff]
    %v631 = vld [vmem:[#allocation8 + $0x738] sm:$0xff]
    %v632 = vld [vmem:[#allocation8 + $0x740] sm:$0xff]
    %v633 = vld [vmem:[#allocation8 + $0x748] sm:$0xff]
    %v634 = vld [vmem:[#allocation8 + $0x750] sm:$0xff]
    %v635 = vld [vmem:[#allocation8 + $0x758] sm:$0xff]
    %v636 = vld [vmem:[#allocation8 + $0x760] sm:$0xff]
    %v637 = vld [vmem:[#allocation8 + $0x768] sm:$0xff]
    %v638 = vld [vmem:[#allocation8 + $0x770] sm:$0xff]
    %v639 = vld [vmem:[#allocation8 + $0x778] sm:$0xff]
    %v640 = vld [vmem:[#allocation8 + $0x780] sm:$0xff]
    %v641 = vld [vmem:[#allocation8 + $0x788] sm:$0xff]
    %v642 = vld [vmem:[#allocation8 + $0x790] sm:$0xff]
    %v643 = vld [vmem:[#allocation8 + $0x798] sm:$0xff]
    %v644 = vld [vmem:[#allocation8 + $0x7a0] sm:$0xff]
    %v645 = vld [vmem:[#allocation8 + $0x7a8] sm:$0xff]
    %v646 = vld [vmem:[#allocation8 + $0x7b0] sm:$0xff]
    %v647 = vld [vmem:[#allocation8 + $0x7b8] sm:$0xff]
    %v648 = vld [vmem:[#allocation8 + $0x7c0] sm:$0xff]
    %v649 = vld [vmem:[#allocation8 + $0x7c8] sm:$0xff]
    %v650 = vld [vmem:[#allocation8 + $0x7d0] sm:$0xff]
    %v651 = vld [vmem:[#allocation8 + $0x7d8] sm:$0xff]
    %v652 = vld [vmem:[#allocation8 + $0x7e0] sm:$0xff]
    %v653 = vld [vmem:[#allocation8 + $0x7e8] sm:$0xff]
    %v654 = vld [vmem:[#allocation8 + $0x7f0] sm:$0xff]
    %v655 = vld [vmem:[#allocation8 + $0x7f8] sm:$0xff]
    %v656 = vld [vmem:[#allocation8 + $0x800] sm:$0xff]
    %v657 = vld [vmem:[#allocation8 + $0x808] sm:$0xff]
    %v658 = vld [vmem:[#allocation8 + $0x810] sm:$0xff]
    %v659 = vld [vmem:[#allocation8 + $0x818] sm:$0xff]
    %v660 = vld [vmem:[#allocation8 + $0x820] sm:$0xff]
    %v661 = vld [vmem:[#allocation8 + $0x828] sm:$0xff]
    %v662 = vld [vmem:[#allocation8 + $0x830] sm:$0xff]
    %v663 = vld [vmem:[#allocation8 + $0x838] sm:$0xff]
    %v664 = vld [vmem:[#allocation8 + $0x840] sm:$0xff]
    %v665 = vld [vmem:[#allocation8 + $0x848] sm:$0xff]
    %v666 = vld [vmem:[#allocation8 + $0x850] sm:$0xff]
    %v667 = vld [vmem:[#allocation8 + $0x858] sm:$0xff]
    %v668 = vld [vmem:[#allocation8 + $0x860] sm:$0xff]
    %v669 = vld [vmem:[#allocation8 + $0x868] sm:$0xff]
    %v670 = vld [vmem:[#allocation8 + $0x870] sm:$0xff]
    %v671 = vld [vmem:[#allocation8 + $0x878] sm:$0xff]
    %v672 = vld [vmem:[#allocation8 + $0x880] sm:$0xff]
    %v673 = vld [vmem:[#allocation8 + $0x888] sm:$0xff]
    %v674 = vld [vmem:[#allocation8 + $0x890] sm:$0xff]
    %v675 = vld [vmem:[#allocation8 + $0x898] sm:$0xff]
    %v676 = vld [vmem:[#allocation8 + $0x8a0] sm:$0xff]
    %v677 = vld [vmem:[#allocation8 + $0x8a8] sm:$0xff]
    %v678 = vld [vmem:[#allocation8 + $0x8b0] sm:$0xff]
    %v679 = vld [vmem:[#allocation8 + $0x8b8] sm:$0xff]
    %v680 = vld [vmem:[#allocation8 + $0x8c0] sm:$0xff]
    %v681 = vld [vmem:[#allocation8 + $0x8c8] sm:$0xff]
    %v682 = vld [vmem:[#allocation8 + $0x8d0] sm:$0xff]
    %v683 = vld [vmem:[#allocation8 + $0x8d8] sm:$0xff]
    %v684 = vld [vmem:[#allocation8 + $0x8e0] sm:$0xff]
    %v685 = vld [vmem:[#allocation8 + $0x8e8] sm:$0xff]
    %v686 = vld [vmem:[#allocation8 + $0x8f0] sm:$0xff]
    %v687 = vld [vmem:[#allocation8 + $0x8f8] sm:$0xff]
    %v688 = vld [vmem:[#allocation8 + $0x900] sm:$0xff]
    %v689 = vld [vmem:[#allocation8 + $0x908] sm:$0xff]
    %v690 = vld [vmem:[#allocation8 + $0x910] sm:$0xff]
    %v691 = vld [vmem:[#allocation8 + $0x918] sm:$0xff]
    %v692 = vld [vmem:[#allocation8 + $0x920] sm:$0xff]
    %v693 = vld [vmem:[#allocation8 + $0x928] sm:$0xff]
    %v694 = vld [vmem:[#allocation8 + $0x930] sm:$0xff]
    %v695 = vld [vmem:[#allocation8 + $0x938] sm:$0xff]
    %v696 = vld [vmem:[#allocation8 + $0x940] sm:$0xff]
    %v697 = vld [vmem:[#allocation8 + $0x948] sm:$0xff]
    %v698 = vld [vmem:[#allocation8 + $0x950] sm:$0xff]
    %v699 = vld [vmem:[#allocation8 + $0x958] sm:$0xff]
    %v700 = vld [vmem:[#allocation8 + $0x960] sm:$0xff]
    %v701 = vld [vmem:[#allocation8 + $0x968] sm:$0xff]
    %v702 = vld [vmem:[#allocation8 + $0x970] sm:$0xff]
    %v703 = vld [vmem:[#allocation8 + $0x978] sm:$0xff]
    %v704 = vld [vmem:[#allocation8 + $0x980] sm:$0xff]
    %v705 = vld [vmem:[#allocation8 + $0x988] sm:$0xff]
    %v706 = vld [vmem:[#allocation8 + $0x990] sm:$0xff]
    %v707 = vld [vmem:[#allocation8 + $0x998] sm:$0xff]
    %v708 = vld [vmem:[#allocation8 + $0x9a0] sm:$0xff]
    %v709 = vld [vmem:[#allocation8 + $0x9a8] sm:$0xff]
    %v710 = vld [vmem:[#allocation8 + $0x9b0] sm:$0xff]
    %v711 = vld [vmem:[#allocation8 + $0x9b8] sm:$0xff]
    %v712 = vld [vmem:[#allocation8 + $0x9c0] sm:$0xff]
    %v713 = vld [vmem:[#allocation8 + $0x9c8] sm:$0xff]
    %v714 = vld [vmem:[#allocation8 + $0x9d0] sm:$0xff]
    %v715 = vld [vmem:[#allocation8 + $0x9d8] sm:$0xff]
    %v716 = vld [vmem:[#allocation8 + $0x9e0] sm:$0xff]
    %v717 = vld [vmem:[#allocation8 + $0x9e8] sm:$0xff]
    %v718 = vld [vmem:[#allocation8 + $0x9f0] sm:$0xff]
    %v719 = vld [vmem:[#allocation8 + $0x9f8] sm:$0xff]
    %v720 = vld [vmem:[#allocation8 + $0xa00] sm:$0xff]
    %v721 = vld [vmem:[#allocation8 + $0xa08] sm:$0xff]
    %v722 = vld [vmem:[#allocation8 + $0xa10] sm:$0xff]
    %v723 = vld [vmem:[#allocation8 + $0xa18] sm:$0xff]
    %v724 = vld [vmem:[#allocation8 + $0xa20] sm:$0xff]
    %v725 = vld [vmem:[#allocation8 + $0xa28] sm:$0xff]
    %v726 = vld [vmem:[#allocation8 + $0xa30] sm:$0xff]
    %v727 = vld [vmem:[#allocation8 + $0xa38] sm:$0xff]
    %v728 = vld [vmem:[#allocation8 + $0xa40] sm:$0xff]
    %v729 = vld [vmem:[#allocation8 + $0xa48] sm:$0xff]
    %v730 = vld [vmem:[#allocation8 + $0xa50] sm:$0xff]
    %v731 = vld [vmem:[#allocation8 + $0xa58] sm:$0xff]
    %v732 = vld [vmem:[#allocation8 + $0xa60] sm:$0xff]
    %v733 = vld [vmem:[#allocation8 + $0xa68] sm:$0xff]
    %v734 = vld [vmem:[#allocation8 + $0xa70] sm:$0xff]
    %v735 = vld [vmem:[#allocation8 + $0xa78] sm:$0xff]
    %v736 = vld [vmem:[#allocation8 + $0xa80] sm:$0xff]
    %v737 = vld [vmem:[#allocation8 + $0xa88] sm:$0xff]
    %v738 = vld [vmem:[#allocation8 + $0xa90] sm:$0xff]
    %v739 = vld [vmem:[#allocation8 + $0xa98] sm:$0xff]
    %v740 = vld [vmem:[#allocation8 + $0xaa0] sm:$0xff]
    %v741 = vld [vmem:[#allocation8 + $0xaa8] sm:$0xff]
    %v742 = vld [vmem:[#allocation8 + $0xab0] sm:$0xff]
    %v743 = vld [vmem:[#allocation8 + $0xab8] sm:$0xff]
    %v744 = vld [vmem:[#allocation8 + $0xac0] sm:$0xff]
    %v745 = vld [vmem:[#allocation8 + $0xac8] sm:$0xff]
    %v746 = vld [vmem:[#allocation8 + $0xad0] sm:$0xff]
    %v747 = vld [vmem:[#allocation8 + $0xad8] sm:$0xff]
    %v748 = vld [vmem:[#allocation8 + $0xae0] sm:$0xff]
    %v749 = vld [vmem:[#allocation8 + $0xae8] sm:$0xff]
    %v750 = vld [vmem:[#allocation8 + $0xaf0] sm:$0xff]
    %v751 = vld [vmem:[#allocation8 + $0xaf8] sm:$0xff]
    %v752 = vld [vmem:[#allocation8 + $0xb00] sm:$0xff]
    %v753 = vld [vmem:[#allocation8 + $0xb08] sm:$0xff]
    %v754 = vld [vmem:[#allocation8 + $0xb10] sm:$0xff]
    %v755 = vld [vmem:[#allocation8 + $0xb18] sm:$0xff]
    %v756 = vld [vmem:[#allocation8 + $0xb20] sm:$0xff]
    %v757 = vld [vmem:[#allocation8 + $0xb28] sm:$0xff]
    %v758 = vld [vmem:[#allocation8 + $0xb30] sm:$0xff]
    %v759 = vld [vmem:[#allocation8 + $0xb38] sm:$0xff]
    %v760 = vld [vmem:[#allocation8 + $0xb40] sm:$0xff]
    %v761 = vld [vmem:[#allocation8 + $0xb48] sm:$0xff]
    %v762 = vld [vmem:[#allocation8 + $0xb50] sm:$0xff]
    %v763 = vld [vmem:[#allocation8 + $0xb58] sm:$0xff]
    %v764 = vld [vmem:[#allocation8 + $0xb60] sm:$0xff]
    %v765 = vld [vmem:[#allocation8 + $0xb68] sm:$0xff]
    %v766 = vld [vmem:[#allocation8 + $0xb70] sm:$0xff]
    %v767 = vld [vmem:[#allocation8 + $0xb78] sm:$0xff]
    %v768 = vld [vmem:[#allocation8 + $0xb80] sm:$0xff]
    %v769 = vld [vmem:[#allocation8 + $0xb88] sm:$0xff]
    %v770 = vld [vmem:[#allocation8 + $0xb90] sm:$0xff]
    %v771 = vld [vmem:[#allocation8 + $0xb98] sm:$0xff]
    %v772 = vld [vmem:[#allocation8 + $0xba0] sm:$0xff]
    %v773 = vld [vmem:[#allocation8 + $0xba8] sm:$0xff]
    %v774 = vld [vmem:[#allocation8 + $0xbb0] sm:$0xff]
    %v775 = vld [vmem:[#allocation8 + $0xbb8] sm:$0xff]
    %v776 = vld [vmem:[#allocation8 + $0xbc0] sm:$0xff]
    %v777 = vld [vmem:[#allocation8 + $0xbc8] sm:$0xff]
    %v778 = vld [vmem:[#allocation8 + $0xbd0] sm:$0xff]
    %v779 = vld [vmem:[#allocation8 + $0xbd8] sm:$0xff]
    %v780 = vld [vmem:[#allocation8 + $0xbe0] sm:$0xff]
    %v781 = vld [vmem:[#allocation8 + $0xbe8] sm:$0xff]
    %v782 = vld [vmem:[#allocation8 + $0xbf0] sm:$0xff]
    %v783 = vld [vmem:[#allocation8 + $0xbf8] sm:$0xff]
    %784 = vmatprep.subr.mxu0 %v401
    %785 = vmatpush1.msra.mxu0 %v400
    %786 = vmatprep.subr.mxu0 %v407
    %787 = vmatpush1.msra.mxu0 %v406
    %788 = vmatprep.subr.mxu0 %v413
    %789 = vmatpush1.msra.mxu0 %v412
    %790 = vmatprep.subr.mxu0 %v419
    %791 = vmatpush1.msra.mxu0 %v418
    %792 = vmatprep.subr.mxu0 %v425
    %793 = vmatpush1.msra.mxu0 %v424
    %794 = vmatprep.subr.mxu0 %v431
    %795 = vmatpush1.msra.mxu0 %v430
    %796 = vmatprep.subr.mxu0 %v437
    %797 = vmatpush1.msra.mxu0 %v436
    %798 = vmatprep.subr.mxu0 %v443
    %799 = vmatpush1.msra.mxu0 %v442
    %800 = vmatprep.subr.mxu0 %v449
    %801 = vmatpush1.msra.mxu0 %v448
    %802 = vmatprep.subr.mxu0 %v455
    %803 = vmatpush1.msra.mxu0 %v454
    %804 = vmatprep.subr.mxu0 %v461
    %805 = vmatpush1.msra.mxu0 %v460
    %806 = vmatprep.subr.mxu0 %v467
    %807 = vmatpush1.msra.mxu0 %v466
    %808 = vmatprep.subr.mxu0 %v473
    %809 = vmatpush1.msra.mxu0 %v472
    %810 = vmatprep.subr.mxu0 %v479
    %811 = vmatpush1.msra.mxu0 %v478
    %812 = vmatprep.subr.mxu0 %v485
    %813 = vmatpush1.msra.mxu0 %v484
    %814 = vmatprep.subr.mxu0 %v491
    %815 = vmatpush1.msra.mxu0 %v490
    %816 = vmatprep.subr.mxu0 %v497
    %817 = vmatpush1.msra.mxu0 %v496
    %818 = vmatprep.subr.mxu0 %v503
    %819 = vmatpush1.msra.mxu0 %v502
    %820 = vmatprep.subr.mxu0 %v509
    %821 = vmatpush1.msra.mxu0 %v508
    %822 = vmatprep.subr.mxu0 %v515
    %823 = vmatpush1.msra.mxu0 %v514
    %824 = vmatprep.subr.mxu0 %v521
    %825 = vmatpush1.msra.mxu0 %v520
    %826 = vmatprep.subr.mxu0 %v527
    %827 = vmatpush1.msra.mxu0 %v526
    %828 = vmatprep.subr.mxu0 %v533
    %829 = vmatpush1.msra.mxu0 %v532
    %830 = vmatprep.subr.mxu0 %v539
    %831 = vmatpush1.msra.mxu0 %v538
    %832 = vmatprep.subr.mxu0 %v545
    %833 = vmatpush1.msra.mxu0 %v544
    %834 = vmatprep.subr.mxu0 %v551
    %835 = vmatpush1.msra.mxu0 %v550
    %836 = vmatprep.subr.mxu0 %v557
    %837 = vmatpush1.msra.mxu0 %v556
    %838 = vmatprep.subr.mxu0 %v563
    %839 = vmatpush1.msra.mxu0 %v562
    %840 = vmatprep.subr.mxu0 %v569
    %841 = vmatpush1.msra.mxu0 %v568
    %842 = vmatprep.subr.mxu0 %v575
    %843 = vmatpush1.msra.mxu0 %v574
    %844 = vmatprep.subr.mxu0 %v581
    %845 = vmatpush1.msra.mxu0 %v580
    %846 = vmatprep.subr.mxu0 %v587
    %847 = vmatpush1.msra.mxu0 %v586
    %848 = vmatprep.mubr.f32.mxu0 %v397
    %849 = vmatmul.mubr.f32.gmra.mrb[0].mxu0 %v396
    %v850 = vpop.f32.mrb[0].mxu0
    %v851 = vadd.f32 0.0, %v850
    %v852 = vpop.f32.mrb[0].mxu0
    %v853 = vadd.f32 0.0, %v852
    %854 = vdwg.mxu0
    %855 = vmatprep.subr.mxu0 %v593
    %856 = vmatpush1.msra.mxu0 %v592
    %857 = vmatprep.subr.mxu0 %v599
    %858 = vmatpush1.msra.mxu0 %v598
    %859 = vmatprep.subr.mxu0 %v605
    %860 = vmatpush1.msra.mxu0 %v604
    %861 = vmatprep.subr.mxu0 %v611
    %862 = vmatpush1.msra.mxu0 %v610
    %863 = vmatprep.subr.mxu0 %v617
    %864 = vmatpush1.msra.mxu0 %v616
    %865 = vmatprep.subr.mxu0 %v623
    %866 = vmatpush1.msra.mxu0 %v622
    %867 = vmatprep.subr.mxu0 %v629
    %868 = vmatpush1.msra.mxu0 %v628
    %869 = vmatprep.subr.mxu0 %v635
    %870 = vmatpush1.msra.mxu0 %v634
    %871 = vmatprep.subr.mxu0 %v641
    %872 = vmatpush1.msra.mxu0 %v640
    %873 = vmatprep.subr.mxu0 %v647
    %874 = vmatpush1.msra.mxu0 %v646
    %875 = vmatprep.subr.mxu0 %v653
    %876 = vmatpush1.msra.mxu0 %v652
    %877 = vmatprep.subr.mxu0 %v659
    %878 = vmatpush1.msra.mxu0 %v658
    %879 = vmatprep.subr.mxu0 %v665
    %880 = vmatpush1.msra.mxu0 %v664
    %881 = vmatprep.subr.mxu0 %v671
    %882 = vmatpush1.msra.mxu0 %v670
    %883 = vmatprep.subr.mxu0 %v677
    %884 = vmatpush1.msra.mxu0 %v676
    %885 = vmatprep.subr.mxu0 %v683
    %886 = vmatpush1.msra.mxu0 %v682
    %887 = vmatprep.subr.mxu0 %v689
    %888 = vmatpush1.msra.mxu0 %v688
    %889 = vmatprep.subr.mxu0 %v695
    %890 = vmatpush1.msra.mxu0 %v694
    %891 = vmatprep.subr.mxu0 %v701
    %892 = vmatpush1.msra.mxu0 %v700
    %893 = vmatprep.subr.mxu0 %v707
    %894 = vmatpush1.msra.mxu0 %v706
    %895 = vmatprep.subr.mxu0 %v713
    %896 = vmatpush1.msra.mxu0 %v712
    %897 = vmatprep.subr.mxu0 %v719
    %898 = vmatpush1.msra.mxu0 %v718
    %899 = vmatprep.subr.mxu0 %v725
    %900 = vmatpush1.msra.mxu0 %v724
    %901 = vmatprep.subr.mxu0 %v731
    %902 = vmatpush1.msra.mxu0 %v730
    %903 = vmatprep.subr.mxu0 %v737
    %904 = vmatpush1.msra.mxu0 %v736
    %905 = vmatprep.subr.mxu0 %v743
    %906 = vmatpush1.msra.mxu0 %v742
    %907 = vmatprep.subr.mxu0 %v749
    %908 = vmatpush1.msra.mxu0 %v748
    %909 = vmatprep.subr.mxu0 %v755
    %910 = vmatpush1.msra.mxu0 %v754
    %911 = vmatprep.subr.mxu0 %v761
    %912 = vmatpush1.msra.mxu0 %v760
    %913 = vmatprep.subr.mxu0 %v767
    %914 = vmatpush1.msra.mxu0 %v766
    %915 = vmatprep.subr.mxu0 %v773
    %916 = vmatpush1.msra.mxu0 %v772
    %917 = vmatprep.subr.mxu0 %v779
    %918 = vmatpush1.msra.mxu0 %v778
    %919 = vmatprep.mubr.f32.mxu0 %v399
    %920 = vmatmul.mubr.f32.gmra.mrb[0].mxu0 %v398
    %v921 = vpop.f32.mrb[0].mxu0
    %v922 = vadd.f32 %v851, %v921
    %v923 = vpop.f32.mrb[0].mxu0
    %v924 = vadd.f32 %v853, %v923
    %925 = vdwg.mxu0
    %926 = vmatprep.subr.mxu0 %v403
    %927 = vmatpush1.msra.mxu0 %v402
    %928 = vmatprep.subr.mxu0 %v409
    %929 = vmatpush1.msra.mxu0 %v408
    %930 = vmatprep.subr.mxu0 %v415
    %931 = vmatpush1.msra.mxu0 %v414
    %932 = vmatprep.subr.mxu0 %v421
    %933 = vmatpush1.msra.mxu0 %v420
    %934 = vmatprep.subr.mxu0 %v427
    %935 = vmatpush1.msra.mxu0 %v426
    %936 = vmatprep.subr.mxu0 %v433
    %937 = vmatpush1.msra.mxu0 %v432
    %938 = vmatprep.subr.mxu0 %v439
    %939 = vmatpush1.msra.mxu0 %v438
    %940 = vmatprep.subr.mxu0 %v445
    %941 = vmatpush1.msra.mxu0 %v444
    %942 = vmatprep.subr.mxu0 %v451
    %943 = vmatpush1.msra.mxu0 %v450
    %944 = vmatprep.subr.mxu0 %v457
    %945 = vmatpush1.msra.mxu0 %v456
    %946 = vmatprep.subr.mxu0 %v463
    %947 = vmatpush1.msra.mxu0 %v462
    %948 = vmatprep.subr.mxu0 %v469
    %949 = vmatpush1.msra.mxu0 %v468
    %950 = vmatprep.subr.mxu0 %v475
    %951 = vmatpush1.msra.mxu0 %v474
    %952 = vmatprep.subr.mxu0 %v481
    %953 = vmatpush1.msra.mxu0 %v480
    %954 = vmatprep.subr.mxu0 %v487
    %955 = vmatpush1.msra.mxu0 %v486
    %956 = vmatprep.subr.mxu0 %v493
    %957 = vmatpush1.msra.mxu0 %v492
    %958 = vmatprep.subr.mxu0 %v499
    %959 = vmatpush1.msra.mxu0 %v498
    %960 = vmatprep.subr.mxu0 %v505
    %961 = vmatpush1.msra.mxu0 %v504
    %962 = vmatprep.subr.mxu0 %v511
    %963 = vmatpush1.msra.mxu0 %v510
    %964 = vmatprep.subr.mxu0 %v517
    %965 = vmatpush1.msra.mxu0 %v516
    %966 = vmatprep.subr.mxu0 %v523
    %967 = vmatpush1.msra.mxu0 %v522
    %968 = vmatprep.subr.mxu0 %v529
    %969 = vmatpush1.msra.mxu0 %v528
    %970 = vmatprep.subr.mxu0 %v535
    %971 = vmatpush1.msra.mxu0 %v534
    %972 = vmatprep.subr.mxu0 %v541
    %973 = vmatpush1.msra.mxu0 %v540
    %974 = vmatprep.subr.mxu0 %v547
    %975 = vmatpush1.msra.mxu0 %v546
    %976 = vmatprep.subr.mxu0 %v553
    %977 = vmatpush1.msra.mxu0 %v552
    %978 = vmatprep.subr.mxu0 %v559
    %979 = vmatpush1.msra.mxu0 %v558
    %980 = vmatprep.subr.mxu0 %v565
    %981 = vmatpush1.msra.mxu0 %v564
    %982 = vmatprep.subr.mxu0 %v571
    %983 = vmatpush1.msra.mxu0 %v570
    %984 = vmatprep.subr.mxu0 %v577
    %985 = vmatpush1.msra.mxu0 %v576
    %986 = vmatprep.subr.mxu0 %v583
    %987 = vmatpush1.msra.mxu0 %v582
    %988 = vmatprep.subr.mxu0 %v589
    %989 = vmatpush1.msra.mxu0 %v588
    %990 = vmatprep.mubr.f32.mxu0 %v397
    %991 = vmatmul.mubr.f32.gmra.mrb[0].mxu0 %v396
    %v992 = vpop.f32.mrb[0].mxu0
    %v993 = vadd.f32 0.0, %v992
    %v994 = vpop.f32.mrb[0].mxu0
    %v995 = vadd.f32 0.0, %v994
    %996 = vdwg.mxu0
    %997 = vmatprep.subr.mxu0 %v595
    %998 = vmatpush1.msra.mxu0 %v594
    %999 = vmatprep.subr.mxu0 %v601
    %1000 = vmatpush1.msra.mxu0 %v600
    %1001 = vmatprep.subr.mxu0 %v607
    %1002 = vmatpush1.msra.mxu0 %v606
    %1003 = vmatprep.subr.mxu0 %v613
    %1004 = vmatpush1.msra.mxu0 %v612
    %1005 = vmatprep.subr.mxu0 %v619
    %1006 = vmatpush1.msra.mxu0 %v618
    %1007 = vmatprep.subr.mxu0 %v625
    %1008 = vmatpush1.msra.mxu0 %v624
    %1009 = vmatprep.subr.mxu0 %v631
    %1010 = vmatpush1.msra.mxu0 %v630
    %1011 = vmatprep.subr.mxu0 %v637
    %1012 = vmatpush1.msra.mxu0 %v636
    %1013 = vmatprep.subr.mxu0 %v643
    %1014 = vmatpush1.msra.mxu0 %v642
    %1015 = vmatprep.subr.mxu0 %v649
    %1016 = vmatpush1.msra.mxu0 %v648
    %1017 = vmatprep.subr.mxu0 %v655
    %1018 = vmatpush1.msra.mxu0 %v654
    %1019 = vmatprep.subr.mxu0 %v661
    %1020 = vmatpush1.msra.mxu0 %v660
    %1021 = vmatprep.subr.mxu0 %v667
    %1022 = vmatpush1.msra.mxu0 %v666
    %1023 = vmatprep.subr.mxu0 %v673
    %1024 = vmatpush1.msra.mxu0 %v672
    %1025 = vmatprep.subr.mxu0 %v679
    %1026 = vmatpush1.msra.mxu0 %v678
    %1027 = vmatprep.subr.mxu0 %v685
    %1028 = vmatpush1.msra.mxu0 %v684
    %1029 = vmatprep.subr.mxu0 %v691
    %1030 = vmatpush1.msra.mxu0 %v690
    %1031 = vmatprep.subr.mxu0 %v697
    %1032 = vmatpush1.msra.mxu0 %v696
    %1033 = vmatprep.subr.mxu0 %v703
    %1034 = vmatpush1.msra.mxu0 %v702
    %1035 = vmatprep.subr.mxu0 %v709
    %1036 = vmatpush1.msra.mxu0 %v708
    %1037 = vmatprep.subr.mxu0 %v715
    %1038 = vmatpush1.msra.mxu0 %v714
    %1039 = vmatprep.subr.mxu0 %v721
    %1040 = vmatpush1.msra.mxu0 %v720
    %1041 = vmatprep.subr.mxu0 %v727
    %1042 = vmatpush1.msra.mxu0 %v726
    %1043 = vmatprep.subr.mxu0 %v733
    %1044 = vmatpush1.msra.mxu0 %v732
    %1045 = vmatprep.subr.mxu0 %v739
    %1046 = vmatpush1.msra.mxu0 %v738
    %1047 = vmatprep.subr.mxu0 %v745
    %1048 = vmatpush1.msra.mxu0 %v744
    %1049 = vmatprep.subr.mxu0 %v751
    %1050 = vmatpush1.msra.mxu0 %v750
    %1051 = vmatprep.subr.mxu0 %v757
    %1052 = vmatpush1.msra.mxu0 %v756
    %1053 = vmatprep.subr.mxu0 %v763
    %1054 = vmatpush1.msra.mxu0 %v762
    %1055 = vmatprep.subr.mxu0 %v769
    %1056 = vmatpush1.msra.mxu0 %v768
    %1057 = vmatprep.subr.mxu0 %v775
    %1058 = vmatpush1.msra.mxu0 %v774
    %1059 = vmatprep.subr.mxu0 %v781
    %1060 = vmatpush1.msra.mxu0 %v780
    %1061 = vmatprep.mubr.f32.mxu0 %v399
    %1062 = vmatmul.mubr.f32.gmra.mrb[0].mxu0 %v398
    %v1063 = vpop.f32.mrb[0].mxu0
    %v1064 = vadd.f32 %v993, %v1063
    %v1065 = vpop.f32.mrb[0].mxu0
    %v1066 = vadd.f32 %v995, %v1065
    %1067 = vdwg.mxu0
    %1068 = vmatprep.subr.mxu0 %v405
    %1069 = vmatpush1.msra.mxu0 %v404
    %1070 = vmatprep.subr.mxu0 %v411
    %1071 = vmatpush1.msra.mxu0 %v410
    %1072 = vmatprep.subr.mxu0 %v417
    %1073 = vmatpush1.msra.mxu0 %v416
    %1074 = vmatprep.subr.mxu0 %v423
    %1075 = vmatpush1.msra.mxu0 %v422
    %1076 = vmatprep.subr.mxu0 %v429
    %1077 = vmatpush1.msra.mxu0 %v428
    %1078 = vmatprep.subr.mxu0 %v435
    %1079 = vmatpush1.msra.mxu0 %v434
    %1080 = vmatprep.subr.mxu0 %v441
    %1081 = vmatpush1.msra.mxu0 %v440
    %1082 = vmatprep.subr.mxu0 %v447
    %1083 = vmatpush1.msra.mxu0 %v446
    %1084 = vmatprep.subr.mxu0 %v453
    %1085 = vmatpush1.msra.mxu0 %v452
    %1086 = vmatprep.subr.mxu0 %v459
    %1087 = vmatpush1.msra.mxu0 %v458
    %1088 = vmatprep.subr.mxu0 %v465
    %1089 = vmatpush1.msra.mxu0 %v464
    %1090 = vmatprep.subr.mxu0 %v471
    %1091 = vmatpush1.msra.mxu0 %v470
    %1092 = vmatprep.subr.mxu0 %v477
    %1093 = vmatpush1.msra.mxu0 %v476
    %1094 = vmatprep.subr.mxu0 %v483
    %1095 = vmatpush1.msra.mxu0 %v482
    %1096 = vmatprep.subr.mxu0 %v489
    %1097 = vmatpush1.msra.mxu0 %v488
    %1098 = vmatprep.subr.mxu0 %v495
    %1099 = vmatpush1.msra.mxu0 %v494
    %1100 = vmatprep.subr.mxu0 %v501
    %1101 = vmatpush1.msra.mxu0 %v500
    %1102 = vmatprep.subr.mxu0 %v507
    %1103 = vmatpush1.msra.mxu0 %v506
    %1104 = vmatprep.subr.mxu0 %v513
    %1105 = vmatpush1.msra.mxu0 %v512
    %1106 = vmatprep.subr.mxu0 %v519
    %1107 = vmatpush1.msra.mxu0 %v518
    %1108 = vmatprep.subr.mxu0 %v525
    %1109 = vmatpush1.msra.mxu0 %v524
    %1110 = vmatprep.subr.mxu0 %v531
    %1111 = vmatpush1.msra.mxu0 %v530
    %1112 = vmatprep.subr.mxu0 %v537
    %1113 = vmatpush1.msra.mxu0 %v536
    %1114 = vmatprep.subr.mxu0 %v543
    %1115 = vmatpush1.msra.mxu0 %v542
    %1116 = vmatprep.subr.mxu0 %v549
    %1117 = vmatpush1.msra.mxu0 %v548
    %1118 = vmatprep.subr.mxu0 %v555
    %1119 = vmatpush1.msra.mxu0 %v554
    %1120 = vmatprep.subr.mxu0 %v561
    %1121 = vmatpush1.msra.mxu0 %v560
    %1122 = vmatprep.subr.mxu0 %v567
    %1123 = vmatpush1.msra.mxu0 %v566
    %1124 = vmatprep.subr.mxu0 %v573
    %1125 = vmatpush1.msra.mxu0 %v572
    %1126 = vmatprep.subr.mxu0 %v579
    %1127 = vmatpush1.msra.mxu0 %v578
    %1128 = vmatprep.subr.mxu0 %v585
    %1129 = vmatpush1.msra.mxu0 %v584
    %1130 = vmatprep.subr.mxu0 %v591
    %1131 = vmatpush1.msra.mxu0 %v590
    %1132 = vmatprep.mubr.f32.mxu0 %v397
    %1133 = vmatmul.mubr.f32.gmra.mrb[0].mxu0 %v396
    %v1134 = vpop.f32.mrb[0].mxu0
    %v1135 = vadd.f32 0.0, %v1134
    %v1136 = vpop.f32.mrb[0].mxu0
    %v1137 = vadd.f32 0.0, %v1136
    %1138 = vdwg.mxu0
    %1139 = vmatprep.subr.mxu0 %v597
    %1140 = vmatpush1.msra.mxu0 %v596
    %1141 = vmatprep.subr.mxu0 %v603
    %1142 = vmatpush1.msra.mxu0 %v602
    %1143 = vmatprep.subr.mxu0 %v609
    %1144 = vmatpush1.msra.mxu0 %v608
    %1145 = vmatprep.subr.mxu0 %v615
    %1146 = vmatpush1.msra.mxu0 %v614
    %1147 = vmatprep.subr.mxu0 %v621
    %1148 = vmatpush1.msra.mxu0 %v620
    %1149 = vmatprep.subr.mxu0 %v627
    %1150 = vmatpush1.msra.mxu0 %v626
    %1151 = vmatprep.subr.mxu0 %v633
    %1152 = vmatpush1.msra.mxu0 %v632
    %1153 = vmatprep.subr.mxu0 %v639
    %1154 = vmatpush1.msra.mxu0 %v638
    %1155 = vmatprep.subr.mxu0 %v645
    %1156 = vmatpush1.msra.mxu0 %v644
    %1157 = vmatprep.subr.mxu0 %v651
    %1158 = vmatpush1.msra.mxu0 %v650
    %1159 = vmatprep.subr.mxu0 %v657
    %1160 = vmatpush1.msra.mxu0 %v656
    %1161 = vmatprep.subr.mxu0 %v663
    %1162 = vmatpush1.msra.mxu0 %v662
    %1163 = vmatprep.subr.mxu0 %v669
    %1164 = vmatpush1.msra.mxu0 %v668
    %1165 = vmatprep.subr.mxu0 %v675
    %1166 = vmatpush1.msra.mxu0 %v674
    %1167 = vmatprep.subr.mxu0 %v681
    %1168 = vmatpush1.msra.mxu0 %v680
    %1169 = vmatprep.subr.mxu0 %v687
    %1170 = vmatpush1.msra.mxu0 %v686
    %1171 = vmatprep.subr.mxu0 %v693
    %1172 = vmatpush1.msra.mxu0 %v692
    %1173 = vmatprep.subr.mxu0 %v699
    %1174 = vmatpush1.msra.mxu0 %v698
    %1175 = vmatprep.subr.mxu0 %v705
    %1176 = vmatpush1.msra.mxu0 %v704
    %1177 = vmatprep.subr.mxu0 %v711
    %1178 = vmatpush1.msra.mxu0 %v710
    %1179 = vmatprep.subr.mxu0 %v717
    %1180 = vmatpush1.msra.mxu0 %v716
    %1181 = vmatprep.subr.mxu0 %v723
    %1182 = vmatpush1.msra.mxu0 %v722
    %1183 = vmatprep.subr.mxu0 %v729
    %1184 = vmatpush1.msra.mxu0 %v728
    %1185 = vmatprep.subr.mxu0 %v735
    %1186 = vmatpush1.msra.mxu0 %v734
    %1187 = vmatprep.subr.mxu0 %v741
    %1188 = vmatpush1.msra.mxu0 %v740
    %1189 = vmatprep.subr.mxu0 %v747
    %1190 = vmatpush1.msra.mxu0 %v746
    %1191 = vmatprep.subr.mxu0 %v753
    %1192 = vmatpush1.msra.mxu0 %v752
    %1193 = vmatprep.subr.mxu0 %v759
    %1194 = vmatpush1.msra.mxu0 %v758
    %1195 = vmatprep.subr.mxu0 %v765
    %1196 = vmatpush1.msra.mxu0 %v764
    %1197 = vmatprep.subr.mxu0 %v771
    %1198 = vmatpush1.msra.mxu0 %v770
    %1199 = vmatprep.subr.mxu0 %v777
    %1200 = vmatpush1.msra.mxu0 %v776
    %1201 = vmatprep.subr.mxu0 %v783
    %1202 = vmatpush1.msra.mxu0 %v782
    %1203 = vmatprep.mubr.f32.mxu0 %v399
    %1204 = vmatmul.mubr.f32.gmra.mrb[0].mxu0 %v398
    %v1205 = vpop.f32.mrb[0].mxu0
    %v1206 = vadd.f32 %v1135, %v1205
    %v1207 = vpop.f32.mrb[0].mxu0
    %v1208 = vadd.f32 %v1137, %v1207
    %1209 = vdwg.mxu0
    %v1210 = vmax.f32 %v922, 0.0
    %v1211 = vmax.f32 %v924, 0.0
    %v1212 = vmax.f32 %v1064, 0.0
    %v1213 = vmax.f32 %v1066, 0.0
    %v1214 = vmax.f32 %v1206, 0.0
    %v1215 = vmax.f32 %v1208, 0.0
    %v1216 = vld [vmem:[#allocation10] sm:$0xff]
    %v1217 = vld [vmem:[#allocation10 + $0x8] sm:$0xff]
    %v1218 = vld [vmem:[#allocation10 + $0x10] sm:$0xff]
    %v1219 = vld [vmem:[#allocation10 + $0x18] sm:$0xff]
    %v1220 = vld [vmem:[#allocation10 + $0x20] sm:$0xff]
    %v1221 = vld [vmem:[#allocation10 + $0x28] sm:$0xff]
    %v1222 = vld [vmem:[#allocation10 + $0x30] sm:$0xff]
    %v1223 = vld [vmem:[#allocation10 + $0x38] sm:$0xff]
    %v1224 = vld [vmem:[#allocation10 + $0x40] sm:$0xff]
    %v1225 = vld [vmem:[#allocation10 + $0x48] sm:$0xff]
    %v1226 = vld [vmem:[#allocation10 + $0x50] sm:$0xff]
    %v1227 = vld [vmem:[#allocation10 + $0x58] sm:$0xff]
    %v1228 = vld [vmem:[#allocation10 + $0x60] sm:$0xff]
    %v1229 = vld [vmem:[#allocation10 + $0x68] sm:$0xff]
    %v1230 = vld [vmem:[#allocation10 + $0x70] sm:$0xff]
    %v1231 = vld [vmem:[#allocation10 + $0x78] sm:$0xff]
    %v1232 = vld [vmem:[#allocation10 + $0x80] sm:$0xff]
    %v1233 = vld [vmem:[#allocation10 + $0x88] sm:$0xff]
    %v1234 = vld [vmem:[#allocation10 + $0x90] sm:$0xff]
    %v1235 = vld [vmem:[#allocation10 + $0x98] sm:$0xff]
    %v1236 = vld [vmem:[#allocation10 + $0xa0] sm:$0xff]
    %v1237 = vld [vmem:[#allocation10 + $0xa8] sm:$0xff]
    %v1238 = vld [vmem:[#allocation10 + $0xb0] sm:$0xff]
    %v1239 = vld [vmem:[#allocation10 + $0xb8] sm:$0xff]
    %v1240 = vld [vmem:[#allocation10 + $0xc0] sm:$0xff]
    %v1241 = vld [vmem:[#allocation10 + $0xc8] sm:$0xff]
    %v1242 = vld [vmem:[#allocation10 + $0xd0] sm:$0xff]
    %v1243 = vld [vmem:[#allocation10 + $0xd8] sm:$0xff]
    %v1244 = vld [vmem:[#allocation10 + $0xe0] sm:$0xff]
    %v1245 = vld [vmem:[#allocation10 + $0xe8] sm:$0xff]
    %v1246 = vld [vmem:[#allocation10 + $0xf0] sm:$0xff]
    %v1247 = vld [vmem:[#allocation10 + $0xf8] sm:$0xff]
    %v1248 = vld [vmem:[#allocation10 + $0x100] sm:$0xff]
    %v1249 = vld [vmem:[#allocation10 + $0x108] sm:$0xff]
    %v1250 = vld [vmem:[#allocation10 + $0x110] sm:$0xff]
    %v1251 = vld [vmem:[#allocation10 + $0x118] sm:$0xff]
    %v1252 = vld [vmem:[#allocation10 + $0x120] sm:$0xff]
    %v1253 = vld [vmem:[#allocation10 + $0x128] sm:$0xff]
    %v1254 = vld [vmem:[#allocation10 + $0x130] sm:$0xff]
    %v1255 = vld [vmem:[#allocation10 + $0x138] sm:$0xff]
    %v1256 = vld [vmem:[#allocation10 + $0x140] sm:$0xff]
    %v1257 = vld [vmem:[#allocation10 + $0x148] sm:$0xff]
    %v1258 = vld [vmem:[#allocation10 + $0x150] sm:$0xff]
    %v1259 = vld [vmem:[#allocation10 + $0x158] sm:$0xff]
    %v1260 = vld [vmem:[#allocation10 + $0x160] sm:$0xff]
    %v1261 = vld [vmem:[#allocation10 + $0x168] sm:$0xff]
    %v1262 = vld [vmem:[#allocation10 + $0x170] sm:$0xff]
    %v1263 = vld [vmem:[#allocation10 + $0x178] sm:$0xff]
    %v1264 = vld [vmem:[#allocation10 + $0x180] sm:$0xff]
    %v1265 = vld [vmem:[#allocation10 + $0x188] sm:$0xff]
    %v1266 = vld [vmem:[#allocation10 + $0x190] sm:$0xff]
    %v1267 = vld [vmem:[#allocation10 + $0x198] sm:$0xff]
    %v1268 = vld [vmem:[#allocation10 + $0x1a0] sm:$0xff]
    %v1269 = vld [vmem:[#allocation10 + $0x1a8] sm:$0xff]
    %v1270 = vld [vmem:[#allocation10 + $0x1b0] sm:$0xff]
    %v1271 = vld [vmem:[#allocation10 + $0x1b8] sm:$0xff]
    %v1272 = vld [vmem:[#allocation10 + $0x1c0] sm:$0xff]
    %v1273 = vld [vmem:[#allocation10 + $0x1c8] sm:$0xff]
    %v1274 = vld [vmem:[#allocation10 + $0x1d0] sm:$0xff]
    %v1275 = vld [vmem:[#allocation10 + $0x1d8] sm:$0xff]
    %v1276 = vld [vmem:[#allocation10 + $0x1e0] sm:$0xff]
    %v1277 = vld [vmem:[#allocation10 + $0x1e8] sm:$0xff]
    %v1278 = vld [vmem:[#allocation10 + $0x1f0] sm:$0xff]
    %v1279 = vld [vmem:[#allocation10 + $0x1f8] sm:$0xff]
    %v1280 = vld [vmem:[#allocation10 + $0x200] sm:$0xff]
    %v1281 = vld [vmem:[#allocation10 + $0x208] sm:$0xff]
    %v1282 = vld [vmem:[#allocation10 + $0x210] sm:$0xff]
    %v1283 = vld [vmem:[#allocation10 + $0x218] sm:$0xff]
    %v1284 = vld [vmem:[#allocation10 + $0x220] sm:$0xff]
    %v1285 = vld [vmem:[#allocation10 + $0x228] sm:$0xff]
    %v1286 = vld [vmem:[#allocation10 + $0x230] sm:$0xff]
    %v1287 = vld [vmem:[#allocation10 + $0x238] sm:$0xff]
    %v1288 = vld [vmem:[#allocation10 + $0x240] sm:$0xff]
    %v1289 = vld [vmem:[#allocation10 + $0x248] sm:$0xff]
    %v1290 = vld [vmem:[#allocation10 + $0x250] sm:$0xff]
    %v1291 = vld [vmem:[#allocation10 + $0x258] sm:$0xff]
    %v1292 = vld [vmem:[#allocation10 + $0x260] sm:$0xff]
    %v1293 = vld [vmem:[#allocation10 + $0x268] sm:$0xff]
    %v1294 = vld [vmem:[#allocation10 + $0x270] sm:$0xff]
    %v1295 = vld [vmem:[#allocation10 + $0x278] sm:$0xff]
    %v1296 = vld [vmem:[#allocation10 + $0x280] sm:$0xff]
    %v1297 = vld [vmem:[#allocation10 + $0x288] sm:$0xff]
    %v1298 = vld [vmem:[#allocation10 + $0x290] sm:$0xff]
    %v1299 = vld [vmem:[#allocation10 + $0x298] sm:$0xff]
    %v1300 = vld [vmem:[#allocation10 + $0x2a0] sm:$0xff]
    %v1301 = vld [vmem:[#allocation10 + $0x2a8] sm:$0xff]
    %v1302 = vld [vmem:[#allocation10 + $0x2b0] sm:$0xff]
    %v1303 = vld [vmem:[#allocation10 + $0x2b8] sm:$0xff]
    %v1304 = vld [vmem:[#allocation10 + $0x2c0] sm:$0xff]
    %v1305 = vld [vmem:[#allocation10 + $0x2c8] sm:$0xff]
    %v1306 = vld [vmem:[#allocation10 + $0x2d0] sm:$0xff]
    %v1307 = vld [vmem:[#allocation10 + $0x2d8] sm:$0xff]
    %v1308 = vld [vmem:[#allocation10 + $0x2e0] sm:$0xff]
    %v1309 = vld [vmem:[#allocation10 + $0x2e8] sm:$0xff]
    %v1310 = vld [vmem:[#allocation10 + $0x2f0] sm:$0xff]
    %v1311 = vld [vmem:[#allocation10 + $0x2f8] sm:$0xff]
    %v1312 = vld [vmem:[#allocation11] sm:$0x1]
    %v1314 = vlaneseq
    %v1315 = vshrl.u32 %v1314, 7
    %v1316 = vsub.s32 0, %v1315
    %v1317 = vrot.slane %v1312, %v1316
    %1319 = vmatprep.subr.mxu0 0.0
    %1320 = vmatpush1.msra.mxu0 %v1216
    %1321 = vmatprep.subr.mxu0 0.0
    %1322 = vmatpush1.msra.mxu0 %v1217
    %1323 = vmatprep.subr.mxu0 0.0
    %1324 = vmatpush1.msra.mxu0 %v1218
    %1325 = vmatprep.subr.mxu0 0.0
    %1326 = vmatpush1.msra.mxu0 %v1219
    %1327 = vmatprep.subr.mxu0 0.0
    %1328 = vmatpush1.msra.mxu0 %v1220
    %1329 = vmatprep.subr.mxu0 0.0
    %1330 = vmatpush1.msra.mxu0 %v1221
    %1331 = vmatprep.subr.mxu0 0.0
    %1332 = vmatpush1.msra.mxu0 %v1222
    %1333 = vmatprep.subr.mxu0 0.0
    %1334 = vmatpush1.msra.mxu0 %v1223
    %1335 = vmatprep.subr.mxu0 0.0
    %1336 = vmatpush1.msra.mxu0 %v1224
    %1337 = vmatprep.subr.mxu0 0.0
    %1338 = vmatpush1.msra.mxu0 %v1225
    %1339 = vmatprep.subr.mxu0 0.0
    %1340 = vmatpush1.msra.mxu0 %v1226
    %1341 = vmatprep.subr.mxu0 0.0
    %1342 = vmatpush1.msra.mxu0 %v1227
    %1343 = vmatprep.subr.mxu0 0.0
    %1344 = vmatpush1.msra.mxu0 %v1228
    %1345 = vmatprep.subr.mxu0 0.0
    %1346 = vmatpush1.msra.mxu0 %v1229
    %1347 = vmatprep.subr.mxu0 0.0
    %1348 = vmatpush1.msra.mxu0 %v1230
    %1349 = vmatprep.subr.mxu0 0.0
    %1350 = vmatpush1.msra.mxu0 %v1231
    %1351 = vmatprep.subr.mxu0 0.0
    %1352 = vmatpush1.msra.mxu0 %v1232
    %1353 = vmatprep.subr.mxu0 0.0
    %1354 = vmatpush1.msra.mxu0 %v1233
    %1355 = vmatprep.subr.mxu0 0.0
    %1356 = vmatpush1.msra.mxu0 %v1234
    %1357 = vmatprep.subr.mxu0 0.0
    %1358 = vmatpush1.msra.mxu0 %v1235
    %1359 = vmatprep.subr.mxu0 0.0
    %1360 = vmatpush1.msra.mxu0 %v1236
    %1361 = vmatprep.subr.mxu0 0.0
    %1362 = vmatpush1.msra.mxu0 %v1237
    %1363 = vmatprep.subr.mxu0 0.0
    %1364 = vmatpush1.msra.mxu0 %v1238
    %1365 = vmatprep.subr.mxu0 0.0
    %1366 = vmatpush1.msra.mxu0 %v1239
    %1367 = vmatprep.subr.mxu0 0.0
    %1368 = vmatpush1.msra.mxu0 %v1240
    %1369 = vmatprep.subr.mxu0 0.0
    %1370 = vmatpush1.msra.mxu0 %v1241
    %1371 = vmatprep.subr.mxu0 0.0
    %1372 = vmatpush1.msra.mxu0 %v1242
    %1373 = vmatprep.subr.mxu0 0.0
    %1374 = vmatpush1.msra.mxu0 %v1243
    %1375 = vmatprep.subr.mxu0 0.0
    %1376 = vmatpush1.msra.mxu0 %v1244
    %1377 = vmatprep.subr.mxu0 0.0
    %1378 = vmatpush1.msra.mxu0 %v1245
    %1379 = vmatprep.subr.mxu0 0.0
    %1380 = vmatpush1.msra.mxu0 %v1246
    %1381 = vmatprep.subr.mxu0 0.0
    %1382 = vmatpush1.msra.mxu0 %v1247
    %1383 = vmatprep.mubr.f32.mxu0 %v1211
    %1384 = vmatmul.mubr.f32.gmra.mrb[0].mxu0 %v1210
    %v1385 = vpop.f32.mrb[0].mxu0
    %v1386 = vadd.f32 %v1317, %v1385
    %v1387 = vpop.f32.mrb[0].mxu0
    %1388 = vdwg.mxu0
    %1389 = vmatprep.subr.mxu0 0.0
    %1390 = vmatpush1.msra.mxu0 %v1248
    %1391 = vmatprep.subr.mxu0 0.0
    %1392 = vmatpush1.msra.mxu0 %v1249
    %1393 = vmatprep.subr.mxu0 0.0
    %1394 = vmatpush1.msra.mxu0 %v1250
    %1395 = vmatprep.subr.mxu0 0.0
    %1396 = vmatpush1.msra.mxu0 %v1251
    %1397 = vmatprep.subr.mxu0 0.0
    %1398 = vmatpush1.msra.mxu0 %v1252
    %1399 = vmatprep.subr.mxu0 0.0
    %1400 = vmatpush1.msra.mxu0 %v1253
    %1401 = vmatprep.subr.mxu0 0.0
    %1402 = vmatpush1.msra.mxu0 %v1254
    %1403 = vmatprep.subr.mxu0 0.0
    %1404 = vmatpush1.msra.mxu0 %v1255
    %1405 = vmatprep.subr.mxu0 0.0
    %1406 = vmatpush1.msra.mxu0 %v1256
    %1407 = vmatprep.subr.mxu0 0.0
    %1408 = vmatpush1.msra.mxu0 %v1257
    %1409 = vmatprep.subr.mxu0 0.0
    %1410 = vmatpush1.msra.mxu0 %v1258
    %1411 = vmatprep.subr.mxu0 0.0
    %1412 = vmatpush1.msra.mxu0 %v1259
    %1413 = vmatprep.subr.mxu0 0.0
    %1414 = vmatpush1.msra.mxu0 %v1260
    %1415 = vmatprep.subr.mxu0 0.0
    %1416 = vmatpush1.msra.mxu0 %v1261
    %1417 = vmatprep.subr.mxu0 0.0
    %1418 = vmatpush1.msra.mxu0 %v1262
    %1419 = vmatprep.subr.mxu0 0.0
    %1420 = vmatpush1.msra.mxu0 %v1263
    %1421 = vmatprep.subr.mxu0 0.0
    %1422 = vmatpush1.msra.mxu0 %v1264
    %1423 = vmatprep.subr.mxu0 0.0
    %1424 = vmatpush1.msra.mxu0 %v1265
    %1425 = vmatprep.subr.mxu0 0.0
    %1426 = vmatpush1.msra.mxu0 %v1266
    %1427 = vmatprep.subr.mxu0 0.0
    %1428 = vmatpush1.msra.mxu0 %v1267
    %1429 = vmatprep.subr.mxu0 0.0
    %1430 = vmatpush1.msra.mxu0 %v1268
    %1431 = vmatprep.subr.mxu0 0.0
    %1432 = vmatpush1.msra.mxu0 %v1269
    %1433 = vmatprep.subr.mxu0 0.0
    %1434 = vmatpush1.msra.mxu0 %v1270
    %1435 = vmatprep.subr.mxu0 0.0
    %1436 = vmatpush1.msra.mxu0 %v1271
    %1437 = vmatprep.subr.mxu0 0.0
    %1438 = vmatpush1.msra.mxu0 %v1272
    %1439 = vmatprep.subr.mxu0 0.0
    %1440 = vmatpush1.msra.mxu0 %v1273
    %1441 = vmatprep.subr.mxu0 0.0
    %1442 = vmatpush1.msra.mxu0 %v1274
    %1443 = vmatprep.subr.mxu0 0.0
    %1444 = vmatpush1.msra.mxu0 %v1275
    %1445 = vmatprep.subr.mxu0 0.0
    %1446 = vmatpush1.msra.mxu0 %v1276
    %1447 = vmatprep.subr.mxu0 0.0
    %1448 = vmatpush1.msra.mxu0 %v1277
    %1449 = vmatprep.subr.mxu0 0.0
    %1450 = vmatpush1.msra.mxu0 %v1278
    %1451 = vmatprep.subr.mxu0 0.0
    %1452 = vmatpush1.msra.mxu0 %v1279
    %1453 = vmatprep.mubr.f32.mxu0 %v1213
    %1454 = vmatmul.mubr.f32.gmra.mrb[0].mxu0 %v1212
    %v1455 = vpop.f32.mrb[0].mxu0
    %v1456 = vadd.f32 %v1386, %v1455
    %v1457 = vpop.f32.mrb[0].mxu0
    %1458 = vdwg.mxu0
    %1459 = vmatprep.subr.mxu0 0.0
    %1460 = vmatpush1.msra.mxu0 %v1280
    %1461 = vmatprep.subr.mxu0 0.0
    %1462 = vmatpush1.msra.mxu0 %v1281
    %1463 = vmatprep.subr.mxu0 0.0
    %1464 = vmatpush1.msra.mxu0 %v1282
    %1465 = vmatprep.subr.mxu0 0.0
    %1466 = vmatpush1.msra.mxu0 %v1283
    %1467 = vmatprep.subr.mxu0 0.0
    %1468 = vmatpush1.msra.mxu0 %v1284
    %1469 = vmatprep.subr.mxu0 0.0
    %1470 = vmatpush1.msra.mxu0 %v1285
    %1471 = vmatprep.subr.mxu0 0.0
    %1472 = vmatpush1.msra.mxu0 %v1286
    %1473 = vmatprep.subr.mxu0 0.0
    %1474 = vmatpush1.msra.mxu0 %v1287
    %1475 = vmatprep.subr.mxu0 0.0
    %1476 = vmatpush1.msra.mxu0 %v1288
    %1477 = vmatprep.subr.mxu0 0.0
    %1478 = vmatpush1.msra.mxu0 %v1289
    %1479 = vmatprep.subr.mxu0 0.0
    %1480 = vmatpush1.msra.mxu0 %v1290
    %1481 = vmatprep.subr.mxu0 0.0
    %1482 = vmatpush1.msra.mxu0 %v1291
    %1483 = vmatprep.subr.mxu0 0.0
    %1484 = vmatpush1.msra.mxu0 %v1292
    %1485 = vmatprep.subr.mxu0 0.0
    %1486 = vmatpush1.msra.mxu0 %v1293
    %1487 = vmatprep.subr.mxu0 0.0
    %1488 = vmatpush1.msra.mxu0 %v1294
    %1489 = vmatprep.subr.mxu0 0.0
    %1490 = vmatpush1.msra.mxu0 %v1295
    %1491 = vmatprep.subr.mxu0 0.0
    %1492 = vmatpush1.msra.mxu0 %v1296
    %1493 = vmatprep.subr.mxu0 0.0
    %1494 = vmatpush1.msra.mxu0 %v1297
    %1495 = vmatprep.subr.mxu0 0.0
    %1496 = vmatpush1.msra.mxu0 %v1298
    %1497 = vmatprep.subr.mxu0 0.0
    %1498 = vmatpush1.msra.mxu0 %v1299
    %1499 = vmatprep.subr.mxu0 0.0
    %1500 = vmatpush1.msra.mxu0 %v1300
    %1501 = vmatprep.subr.mxu0 0.0
    %1502 = vmatpush1.msra.mxu0 %v1301
    %1503 = vmatprep.subr.mxu0 0.0
    %1504 = vmatpush1.msra.mxu0 %v1302
    %1505 = vmatprep.subr.mxu0 0.0
    %1506 = vmatpush1.msra.mxu0 %v1303
    %1507 = vmatprep.subr.mxu0 0.0
    %1508 = vmatpush1.msra.mxu0 %v1304
    %1509 = vmatprep.subr.mxu0 0.0
    %1510 = vmatpush1.msra.mxu0 %v1305
    %1511 = vmatprep.subr.mxu0 0.0
    %1512 = vmatpush1.msra.mxu0 %v1306
    %1513 = vmatprep.subr.mxu0 0.0
    %1514 = vmatpush1.msra.mxu0 %v1307
    %1515 = vmatprep.subr.mxu0 0.0
    %1516 = vmatpush1.msra.mxu0 %v1308
    %1517 = vmatprep.subr.mxu0 0.0
    %1518 = vmatpush1.msra.mxu0 %v1309
    %1519 = vmatprep.subr.mxu0 0.0
    %1520 = vmatpush1.msra.mxu0 %v1310
    %1521 = vmatprep.subr.mxu0 0.0
    %1522 = vmatpush1.msra.mxu0 %v1311
    %1523 = vmatprep.mubr.f32.mxu0 %v1215
    %1524 = vmatmul.mubr.f32.gmra.mrb[0].mxu0 %v1214
    %v1525 = vpop.f32.mrb[0].mxu0
    %v1526 = vadd.f32 %v1456, %v1525
    %v1527 = vpop.f32.mrb[0].mxu0
    %1528 = vdwg.mxu0
    %1529 = vst [vmem:[#allocation13] sm:$0xff] %v1526
    // Predicated region
    $region50: #{tpu_custom_call.1} parent=1 // pred_check
      _
    $region51: #{tpu_custom_call.1} parent=1 // pred_check_branch
      %1531 = sbr.rel (0) target = $region53
    $region52: #{tpu_custom_call.1} parent=1 // pred_region
      %s1533 = ssub.s32 128, 128
      %1534 = vsyncadd [#allocation4], %s1533
      %s1536 = sshll.u32 [#allocation13], 4
      %s1537 = int_to_ptr.vmem [resolvable:$true] %s1536
      %1539 = dma.vmem_to_hbm [thread:$0]  %s1537, 128, %s6, [#allocation4]
    $region53: #{tpu_custom_call.1} parent=1 // pred_fallthru
      _
    // Predicated region
    $region54: #{tpu_custom_call.1} parent=1 // pred_check
      _
    $region55: #{tpu_custom_call.1} parent=1 // pred_check_branch
      %1541 = sbr.rel (0) target = $region57
    $region56: #{tpu_custom_call.1} parent=1 // pred_region
      %1542 = dma.done [#allocation4], 128
    $region57: #{tpu_custom_call.1} parent=1 // pred_fallthru
      _
    %1543 = vsyncpa [#allocation3], 1
    %1544 = vsyncpa [#allocation6], 1
    %1545 = vsyncpa [#allocation9], 1
    %1546 = vsyncpa [#allocation12], 1
    %1547 = vsyncpa [#allocation4], 1

</llo_original>
